<compile_context>
chip_gen: v7x
topology: tpu7x:2x2x1
jax: 0.10.0
libtpu: 0.0.40
codegen_flags: <defaults>
</compile_context>

<pallas_src>
import functools

import jax
import jax.numpy as jnp
from jax.experimental import pallas as pl
from jax.experimental.pallas import tpu as pltpu

# ---- small, shape-consistent dims (1024 points -> 128, feature dim 128) ----
B = 2          # batch
N_PTS = 256    # raw point-cloud size
N_SUB = 128    # sub_function sample size (stands in for 1024)
K_PATCH = 128  # points per knn patch     (stands in for 1024)
N_PATCH = 8    # knn patches per view
C_IN = 3
C_PAD = 8      # channel padding for tiling
H1 = 64        # encoder hidden width (logical)
H1P = 128      # encoder hidden width zero-padded to a full lane width
D = 128        # encoder feature dim
PROJ_H = 256   # projector hidden width
ENC_TILE = 8   # encoder instances per grid step -> matmul M = ENC_TILE*128 = 1024
SCALE = 1.0 / float(D) ** 0.5


# ------------------------- Pallas kernels -----------------------------------
def encoder_kernel(x_ref, w1_ref, b1_ref, w2_ref, b2_ref, o_ref):
    """PointNet encoder for ENC_TILE stacked instances: MLP(3->128->128) + max-pool."""
    g, n, c = x_ref.shape                                    # (ENC_TILE, 128, C_PAD)
    x = x_ref[...].reshape(g * n, c)                         # (M, C_PAD), M = g*n
    xb = x.astype(jnp.bfloat16)
    h = jnp.dot(xb, w1_ref[...].astype(jnp.bfloat16),
                preferred_element_type=jnp.float32) + b1_ref[...]
    h = jnp.maximum(h, 0.0)
    f = jnp.dot(h.astype(jnp.bfloat16), w2_ref[...].astype(jnp.bfloat16),
                preferred_element_type=jnp.float32) + b2_ref[...]
    f = jnp.maximum(f, 0.0)
    o_ref[...] = jnp.max(f.reshape(g, n, -1), axis=1)        # (ENC_TILE, D)


def xattn_proj_kernel(q_ref, kv_ref, wq_ref, wkv_ref, wo_ref,
                      wp1_ref, bp1_ref, wp2_ref, bp2_ref,
                      attn_ref, proj_ref):
    """Single-head cross attention (all queries at once) + fused BYOL projector."""
    q_in = q_ref[0]                                          # (NQ, D)
    kv = kv_ref[0]                                           # (S, D)
    qb = q_in.astype(jnp.bfloat16)
    kvb = kv.astype(jnp.bfloat16)

    q = jnp.dot(qb, wq_ref[...].astype(jnp.bfloat16),
                preferred_element_type=jnp.float32)          # (NQ, D)
    kvp = jnp.dot(kvb, wkv_ref[...].astype(jnp.bfloat16),
                  preferred_element_type=jnp.float32)        # (S, 2D) fused K|V
    k = kvp[:, :D]
    v = kvp[:, D:]

    scores = jax.lax.dot_general(q.astype(jnp.bfloat16), k.astype(jnp.bfloat16),
                                 (((1,), (1,)), ((), ())),
                                 preferred_element_type=jnp.float32) * SCALE  # (NQ, S)
    m = jnp.max(scores, axis=-1, keepdims=True)
    e = jnp.exp(scores - m)
    p = e * pl.reciprocal(jnp.sum(e, axis=-1, keepdims=True), approx=True)
    a = jnp.dot(p.astype(jnp.bfloat16), v.astype(jnp.bfloat16),
                preferred_element_type=jnp.float32)          # (NQ, D)
    attn = jnp.dot(a.astype(jnp.bfloat16), wo_ref[...].astype(jnp.bfloat16),
                   preferred_element_type=jnp.float32)       # (NQ, D)
    attn_ref[0] = attn

    # fused projector MLP (used for the online branch of the BYOL loss)
    hp = jnp.dot(attn.astype(jnp.bfloat16), wp1_ref[...].astype(jnp.bfloat16),
                 preferred_element_type=jnp.float32) + bp1_ref[...]
    hp = jnp.maximum(hp, 0.0)
    proj_ref[0] = jnp.dot(hp.astype(jnp.bfloat16), wp2_ref[...].astype(jnp.bfloat16),
                          preferred_element_type=jnp.float32) + bp2_ref[...]


# ------------------------- Pallas wrappers -----------------------------------
def fused_pointnet_encoder(x, params):
    """x: (M_inst, 128, 3) float32 -> (M_inst, D) float32, all instances fused."""
    m, n, _ = x.shape
    m_pad = pl.cdiv(m, ENC_TILE) * ENC_TILE
    xp = jnp.pad(x, ((0, m_pad - m), (0, 0), (0, C_PAD - C_IN)))
    w1, b1, w2, b2 = params
    out = pl.pallas_call(
        encoder_kernel,
        out_shape=jax.ShapeDtypeStruct((m_pad, D), jnp.float32),
        grid_spec=pltpu.PrefetchScalarGridSpec(
            num_scalar_prefetch=0,
            grid=(m_pad // ENC_TILE,),
            in_specs=[
                pl.BlockSpec((ENC_TILE, n, C_PAD), lambda i: (i, 0, 0)),
                pl.BlockSpec((C_PAD, H1P), lambda i: (0, 0)),
                pl.BlockSpec((1, H1P), lambda i: (0, 0)),
                pl.BlockSpec((H1P, D), lambda i: (0, 0)),
                pl.BlockSpec((1, D), lambda i: (0, 0)),
            ],
            out_specs=pl.BlockSpec((ENC_TILE, D), lambda i: (i, 0)),
        ),
        compiler_params=pltpu.CompilerParams(dimension_semantics=("parallel",)),
    )(xp, w1, b1, w2, b2)
    return out[:m]


def cross_attention_projector(q, crop, attn_params, proj_params):
    """q: (B, NQ, D), crop: (B, S, D) -> (attn (B, NQ, D), projected (B, NQ, D))."""
    wq, wk, wv, wo = attn_params
    wkv = jnp.concatenate([wk, wv], axis=1)                  # (D, 2D) fused K/V proj
    wp1, bp1, wp2, bp2 = proj_params
    bsz, nq, _ = q.shape
    s = crop.shape[1]
    return pl.pallas_call(
        xattn_proj_kernel,
        out_shape=(jax.ShapeDtypeStruct((bsz, nq, D), jnp.float32),
                   jax.ShapeDtypeStruct((bsz, nq, D), jnp.float32)),
        grid_spec=pltpu.PrefetchScalarGridSpec(
            num_scalar_prefetch=0,
            grid=(bsz,),
            in_specs=[
                pl.BlockSpec((1, nq, D), lambda b: (b, 0, 0)),
                pl.BlockSpec((1, s, D), lambda b: (b, 0, 0)),
                pl.BlockSpec((D, D), lambda b: (0, 0)),
                pl.BlockSpec((D, 2 * D), lambda b: (0, 0)),
                pl.BlockSpec((D, D), lambda b: (0, 0)),
                pl.BlockSpec((D, PROJ_H), lambda b: (0, 0)),
                pl.BlockSpec((1, PROJ_H), lambda b: (0, 0)),
                pl.BlockSpec((PROJ_H, D), lambda b: (0, 0)),
                pl.BlockSpec((1, D), lambda b: (0, 0)),
            ],
            out_specs=[pl.BlockSpec((1, nq, D), lambda b: (b, 0, 0)),
                       pl.BlockSpec((1, nq, D), lambda b: (b, 0, 0))],
        ),
        compiler_params=pltpu.CompilerParams(dimension_semantics=("parallel",)),
    )(q, crop, wq, wkv, wo, wp1, bp1, wp2, bp2)


# ------------------------- JAX glue (sub / knn / loss) -----------------------
def sub_function(aug, n_sub):
    # Deterministic subsample (stands in for farthest-point sampling).
    idx = jnp.arange(n_sub)
    return idx, aug[:, :n_sub, :]


def knn_function(aug):
    # 8 strided anchor points, gather K_PATCH nearest neighbours per anchor.
    # TODO(synk): top_k neighbour selection + gather stay in plain JAX (no
    # clean Pallas equivalent for data-dependent top-k gather at this size).
    bx, n, _ = aug.shape
    stride = n // N_PATCH
    anchors = aug[:, ::stride, :][:, :N_PATCH, :]                         # (B, 8, 3)
    d2 = jnp.sum((anchors[:, :, None, :] - aug[:, None, :, :]) ** 2, -1)  # (B, 8, N)
    _, nbr_idx = jax.lax.top_k(-d2, K_PATCH)                              # (B, 8, K)
    patches = jnp.take_along_axis(aug[:, None, :, :],
                                  nbr_idx[..., None], axis=2)             # (B, 8, K, 3)
    return patches


def loss_fn(x, y):
    # BYOL negative cosine similarity: 2 - 2 * cos(x, y), per sample.
    x = x / (jnp.linalg.norm(x, axis=-1, keepdims=True) + 1e-12)
    y = y / (jnp.linalg.norm(y, axis=-1, keepdims=True) + 1e-12)
    return 2.0 - 2.0 * jnp.sum(x * y, axis=-1)                            # (B,)


# ------------------------- full forward --------------------------------------
@functools.partial(jax.jit, static_argnames=("targets_identical",))
def sim_attention_knn_forward(aug1, aug2, enc_params, attn_params, proj_params,
                              tgt_enc_params, tgt_attn_params,
                              targets_identical=True):
    bsz = aug1.shape[0]

    _, sub1 = sub_function(aug1, N_SUB)
    _, sub2 = sub_function(aug2, N_SUB)
    knn_patch1 = knn_function(aug1)                           # (B, 8, K, 3)
    knn_patch2 = knn_function(aug2)

    # ---- ONE fused encoder call for every online-encoder invocation --------
    p1 = knn_patch1.reshape(bsz * N_PATCH, K_PATCH, C_IN)
    p2 = knn_patch2.reshape(bsz * N_PATCH, K_PATCH, C_IN)
    enc_in = jnp.concatenate([sub1, sub2, p1, p2], axis=0)    # (B*18, 128, 3)
    feats = fused_pointnet_encoder(enc_in, enc_params)        # (B*18, D)

    sub_feature_1 = feats[:bsz]                               # online(sub1)
    sub_feature_3 = feats[bsz:2 * bsz]                        # online(sub2)
    crop_feature_1 = feats[2 * bsz:2 * bsz + bsz * N_PATCH].reshape(bsz, N_PATCH, D)
    crop_feature_2 = feats[2 * bsz + bsz * N_PATCH:].reshape(bsz, N_PATCH, D)
    crop_feature = jnp.concatenate([crop_feature_1, crop_feature_2], axis=1)  # (B,16,D)

    if targets_identical:
        # First forward: target encoder is a deepcopy of the online encoder,
        # so target(sub2)==online(sub2), target(sub1)==online(sub1) bit-exactly.
        sub_feature_2 = jax.lax.stop_gradient(sub_feature_3)
        sub_feature_4 = jax.lax.stop_gradient(sub_feature_1)
    else:
        tgt_in = jnp.concatenate([sub2, sub1], axis=0)        # (2B, 128, 3)
        tgt_feats = jax.lax.stop_gradient(
            fused_pointnet_encoder(tgt_in, tgt_enc_params))
        sub_feature_2 = tgt_feats[:bsz]
        sub_feature_4 = tgt_feats[bsz:2 * bsz]

    # ---- ONE fused cross-attention (+projector) call for the online queries -
    q_online = jnp.stack([sub_feature_1, sub_feature_3], axis=1)   # (B, 2, D)
    attn_online, proj_online = cross_attention_projector(
        q_online, crop_feature, attn_params, proj_params)
    attn_feature_1 = attn_online[:, 0]
    attn_feature_3 = attn_online[:, 1]
    proj_feature_1 = proj_online[:, 0]                        # projector(attn_1)
    proj_feature_3 = proj_online[:, 1]                        # projector(attn_3)

    if targets_identical:
        # target_x_attn is a deepcopy of online_x_attn and sub_f2==sub_f3,
        # sub_f4==sub_f1, so the target attention outputs are already computed.
        attn_feature_2 = jax.lax.stop_gradient(attn_feature_3)
        attn_feature_4 = jax.lax.stop_gradient(attn_feature_1)
    else:
        q_tgt = jnp.stack([sub_feature_2, sub_feature_4], axis=1)
        attn_tgt, _ = cross_attention_projector(
            q_tgt, crop_feature, tgt_attn_params, proj_params)
        attn_tgt = jax.lax.stop_gradient(attn_tgt)
        attn_feature_2 = attn_tgt[:, 0]
        attn_feature_4 = attn_tgt[:, 1]

    loss_1 = loss_fn(proj_feature_1, attn_feature_2)
    loss_2 = loss_fn(proj_feature_3, attn_feature_4)
    loss = loss_1 + loss_2
    return loss.mean()


# ------------------------- deterministic params & run -------------------------
def init_params(key):
    ks = jax.random.split(key, 8)
    # Encoder: zero-pad C_IN->C_PAD rows and H1->H1P cols so results are
    # identical to the unpadded MLP (ReLU(0)=0, zero rows in w2 contribute 0).
    w1_raw = 0.1 * jax.random.normal(ks[0], (C_IN, H1), jnp.float32)
    w1 = jnp.zeros((C_PAD, H1P), jnp.float32).at[:C_IN, :H1].set(w1_raw)
    w2_raw = 0.1 * jax.random.normal(ks[1], (H1, D), jnp.float32)
    w2 = jnp.zeros((H1P, D), jnp.float32).at[:H1, :].set(w2_raw)
    enc_params = (w1, jnp.zeros((1, H1P), jnp.float32), w2, jnp.zeros((1, D), jnp.float32))

    attn_params = tuple(0.1 * jax.random.normal(ks[2 + i], (D, D), jnp.float32)
                        for i in range(4))                     # wq, wk, wv, wo

    proj_params = (0.1 * jax.random.normal(ks[6], (D, PROJ_H), jnp.float32),
                   jnp.zeros((1, PROJ_H), jnp.float32),
                   0.1 * jax.random.normal(ks[7], (PROJ_H, D), jnp.float32),
                   jnp.zeros((1, D), jnp.float32))
    return enc_params, attn_params, proj_params


if __name__ == "__main__":
    key = jax.random.PRNGKey(0)
    k_aug1, k_aug2, k_params = jax.random.split(key, 3)
    aug1 = jax.random.normal(k_aug1, (B, N_PTS, C_IN), jnp.float32)
    aug2 = jax.random.normal(k_aug2, (B, N_PTS, C_IN), jnp.float32)
    enc_params, attn_params, proj_params = init_params(k_params)

    # First forward: target nets are deepcopies of the online nets.
    loss = sim_attention_knn_forward(aug1, aug2, enc_params, attn_params, proj_params,
                                     enc_params, attn_params, targets_identical=True)
    loss = jax.block_until_ready(loss)
    assert loss.shape == () and bool(jnp.isfinite(loss))
    print("KERNEL_OK")
</pallas_src>

<mosaic_0001>
module attributes {stable_mosaic.version = 11 : i64} {
  func.func @encoder_kernel(%arg0: i32, %arg1: memref<8x128x8xf32, #tpu.memory_space<vmem>>, %arg2: memref<8x128xf32, #tpu.memory_space<vmem>>, %arg3: memref<1x128xf32, #tpu.memory_space<vmem>>, %arg4: memref<128x128xf32, #tpu.memory_space<vmem>>, %arg5: memref<1x128xf32, #tpu.memory_space<vmem>>, %arg6: memref<8x128xf32, #tpu.memory_space<vmem>>) attributes {dimension_semantics = [#tpu.dimension_semantics<parallel>], iteration_bounds = array<i64: 5>, scalar_prefetch = 0 : i64, scratch_operands = 0 : i64, tpu.core_type = #tpu.core_type<tc>, window_params = [{transform_indices = @transform_0, window_bounds = array<i64: 8, 128, 8>}, {pipeline_mode = #tpu.pipeline_mode<synchronous>, transform_indices = @transform_1, window_bounds = array<i64: 8, 128>}, {pipeline_mode = #tpu.pipeline_mode<synchronous>, transform_indices = @transform_2, window_bounds = array<i64: 1, 128>}, {pipeline_mode = #tpu.pipeline_mode<synchronous>, transform_indices = @transform_3, window_bounds = array<i64: 128, 128>}, {pipeline_mode = #tpu.pipeline_mode<synchronous>, transform_indices = @transform_4, window_bounds = array<i64: 1, 128>}, {transform_indices = @transform_5, window_bounds = array<i64: 8, 128>}]} {
    %c0 = arith.constant 0 : index
    %c0_0 = arith.constant 0 : index
    %c0_1 = arith.constant 0 : index
    %0 = vector.load %arg1[%c0, %c0_0, %c0_1] : memref<8x128x8xf32, #tpu.memory_space<vmem>>, vector<8x128x8xf32>
    %1 = vector.shape_cast %0 : vector<8x128x8xf32> to vector<1024x8xf32>
    %2 = arith.truncf %1 : vector<1024x8xf32> to vector<1024x8xbf16>
    %c0_2 = arith.constant 0 : index
    %c0_3 = arith.constant 0 : index
    %3 = vector.load %arg2[%c0_2, %c0_3] : memref<8x128xf32, #tpu.memory_space<vmem>>, vector<8x128xf32>
    %4 = arith.truncf %3 : vector<8x128xf32> to vector<8x128xbf16>
    %cst = arith.constant dense<0.000000e+00> : vector<1024x128xf32>
    %5 = tpu.matmul %2, %4, %cst {dimension_numbers = #tpu.dot_dimension_numbers<[1], [0], [0], [1], [0, 0, 1, 1], [], []>} : vector<1024x8xbf16>, vector<8x128xbf16>, vector<1024x128xf32> -> vector<1024x128xf32>
    %c0_4 = arith.constant 0 : index
    %c0_5 = arith.constant 0 : index
    %6 = vector.load %arg3[%c0_4, %c0_5] : memref<1x128xf32, #tpu.memory_space<vmem>>, vector<1x128xf32>
    %7 = vector.broadcast %6 : vector<1x128xf32> to vector<1024x128xf32>
    %8 = arith.addf %5, %7 : vector<1024x128xf32>
    %cst_6 = arith.constant 0.000000e+00 : f32
    %9 = vector.broadcast %cst_6 : f32 to vector<1024x128xf32>
    %10 = arith.maximumf %8, %9 : vector<1024x128xf32>
    %11 = arith.truncf %10 : vector<1024x128xf32> to vector<1024x128xbf16>
    %c0_7 = arith.constant 0 : index
    %c0_8 = arith.constant 0 : index
    %12 = vector.load %arg4[%c0_7, %c0_8] : memref<128x128xf32, #tpu.memory_space<vmem>>, vector<128x128xf32>
    %13 = arith.truncf %12 : vector<128x128xf32> to vector<128x128xbf16>
    %cst_9 = arith.constant dense<0.000000e+00> : vector<1024x128xf32>
    %14 = tpu.matmul %11, %13, %cst_9 {dimension_numbers = #tpu.dot_dimension_numbers<[1], [0], [0], [1], [0, 0, 1, 1], [], []>} : vector<1024x128xbf16>, vector<128x128xbf16>, vector<1024x128xf32> -> vector<1024x128xf32>
    %c0_10 = arith.constant 0 : index
    %c0_11 = arith.constant 0 : index
    %15 = vector.load %arg5[%c0_10, %c0_11] : memref<1x128xf32, #tpu.memory_space<vmem>>, vector<1x128xf32>
    %16 = vector.broadcast %15 : vector<1x128xf32> to vector<1024x128xf32>
    %17 = arith.addf %14, %16 : vector<1024x128xf32>
    %cst_12 = arith.constant 0.000000e+00 : f32
    %18 = vector.broadcast %cst_12 : f32 to vector<1024x128xf32>
    %19 = arith.maximumf %17, %18 : vector<1024x128xf32>
    %20 = vector.shape_cast %19 : vector<1024x128xf32> to vector<8x128x128xf32>
    %cst_13 = arith.constant dense<0xFF800000> : vector<8x128xf32>
    %21 = vector.multi_reduction <maximumf>, %20, %cst_13 [1] : vector<8x128x128xf32> to vector<8x128xf32>
    %c0_14 = arith.constant 0 : index
    %c0_15 = arith.constant 0 : index
    %22 = vector.load %arg6[%c0_14, %c0_15] : memref<8x128xf32, #tpu.memory_space<vmem>>, vector<8x128xf32>
    tpu.vector_store %arg6[%c0_14, %c0_15], %21 {strides = array<i32>} : memref<8x128xf32, #tpu.memory_space<vmem>>, vector<8x128xf32>,
    return
  }
  func.func @transform_0(%arg0: i32) -> (i32, i32, i32) {
    %c0_i32 = arith.constant 0 : i32
    %c0_i32_0 = arith.constant 0 : i32
    %c0_i32_1 = arith.constant 0 : i32
    return %arg0, %c0_i32, %c0_i32_0 : i32, i32, i32
  }
  func.func @transform_1(%arg0: i32) -> (i32, i32) {
    %c0_i32 = arith.constant 0 : i32
    %c0_i32_0 = arith.constant 0 : i32
    %c0_i32_1 = arith.constant 0 : i32
    return %c0_i32, %c0_i32_0 : i32, i32
  }
  func.func @transform_2(%arg0: i32) -> (i32, i32) {
    %c0_i32 = arith.constant 0 : i32
    %c0_i32_0 = arith.constant 0 : i32
    %c0_i32_1 = arith.constant 0 : i32
    return %c0_i32, %c0_i32_0 : i32, i32
  }
  func.func @transform_3(%arg0: i32) -> (i32, i32) {
    %c0_i32 = arith.constant 0 : i32
    %c0_i32_0 = arith.constant 0 : i32
    %c0_i32_1 = arith.constant 0 : i32
    return %c0_i32, %c0_i32_0 : i32, i32
  }
  func.func @transform_4(%arg0: i32) -> (i32, i32) {
    %c0_i32 = arith.constant 0 : i32
    %c0_i32_0 = arith.constant 0 : i32
    %c0_i32_1 = arith.constant 0 : i32
    return %c0_i32, %c0_i32_0 : i32, i32
  }
  func.func @transform_5(%arg0: i32) -> (i32, i32) {
    %c0_i32 = arith.constant 0 : i32
    %c0_i32_0 = arith.constant 0 : i32
    return %arg0, %c0_i32 : i32, i32
  }
}

module attributes {stable_mosaic.version = 11 : i64} {
  func.func @xattn_proj_kernel(%arg0: i32, %arg1: memref<1x2x128xf32, #tpu.memory_space<vmem>>, %arg2: memref<1x16x128xf32, #tpu.memory_space<vmem>>, %arg3: memref<128x128xf32, #tpu.memory_space<vmem>>, %arg4: memref<128x256xf32, #tpu.memory_space<vmem>>, %arg5: memref<128x128xf32, #tpu.memory_space<vmem>>, %arg6: memref<128x256xf32, #tpu.memory_space<vmem>>, %arg7: memref<1x256xf32, #tpu.memory_space<vmem>>, %arg8: memref<256x128xf32, #tpu.memory_space<vmem>>, %arg9: memref<1x128xf32, #tpu.memory_space<vmem>>, %arg10: memref<1x2x128xf32, #tpu.memory_space<vmem>>, %arg11: memref<1x2x128xf32, #tpu.memory_space<vmem>>) attributes {dimension_semantics = [#tpu.dimension_semantics<parallel>], iteration_bounds = array<i64: 2>, scalar_prefetch = 0 : i64, scratch_operands = 0 : i64, tpu.core_type = #tpu.core_type<tc>, window_params = [{transform_indices = @transform_0, window_bounds = array<i64: 1, 2, 128>}, {transform_indices = @transform_1, window_bounds = array<i64: 1, 16, 128>}, {pipeline_mode = #tpu.pipeline_mode<synchronous>, transform_indices = @transform_2, window_bounds = array<i64: 128, 128>}, {pipeline_mode = #tpu.pipeline_mode<synchronous>, transform_indices = @transform_3, window_bounds = array<i64: 128, 256>}, {pipeline_mode = #tpu.pipeline_mode<synchronous>, transform_indices = @transform_4, window_bounds = array<i64: 128, 128>}, {pipeline_mode = #tpu.pipeline_mode<synchronous>, transform_indices = @transform_5, window_bounds = array<i64: 128, 256>}, {pipeline_mode = #tpu.pipeline_mode<synchronous>, transform_indices = @transform_6, window_bounds = array<i64: 1, 256>}, {pipeline_mode = #tpu.pipeline_mode<synchronous>, transform_indices = @transform_7, window_bounds = array<i64: 256, 128>}, {pipeline_mode = #tpu.pipeline_mode<synchronous>, transform_indices = @transform_8, window_bounds = array<i64: 1, 128>}, {transform_indices = @transform_9, window_bounds = array<i64: 1, 2, 128>}, {transform_indices = @transform_10, window_bounds = array<i64: 1, 2, 128>}]} {
    %c0 = arith.constant 0 : index
    %c0_0 = arith.constant 0 : index
    %c0_1 = arith.constant 0 : index
    %0 = vector.load %arg1[%c0, %c0_0, %c0_1] : memref<1x2x128xf32, #tpu.memory_space<vmem>>, vector<1x2x128xf32>
    %1 = vector.shape_cast %0 : vector<1x2x128xf32> to vector<2x128xf32>
    %c0_2 = arith.constant 0 : index
    %c0_3 = arith.constant 0 : index
    %c0_4 = arith.constant 0 : index
    %2 = vector.load %arg2[%c0_2, %c0_3, %c0_4] : memref<1x16x128xf32, #tpu.memory_space<vmem>>, vector<1x16x128xf32>
    %3 = vector.shape_cast %2 : vector<1x16x128xf32> to vector<16x128xf32>
    %4 = arith.truncf %1 : vector<2x128xf32> to vector<2x128xbf16>
    %5 = arith.truncf %3 : vector<16x128xf32> to vector<16x128xbf16>
    %c0_5 = arith.constant 0 : index
    %c0_6 = arith.constant 0 : index
    %6 = vector.load %arg3[%c0_5, %c0_6] : memref<128x128xf32, #tpu.memory_space<vmem>>, vector<128x128xf32>
    %7 = arith.truncf %6 : vector<128x128xf32> to vector<128x128xbf16>
    %cst = arith.constant dense<0.000000e+00> : vector<2x128xf32>
    %8 = tpu.matmul %4, %7, %cst {dimension_numbers = #tpu.dot_dimension_numbers<[1], [0], [0], [1], [0, 0, 1, 1], [], []>} : vector<2x128xbf16>, vector<128x128xbf16>, vector<2x128xf32> -> vector<2x128xf32>
    %c0_7 = arith.constant 0 : index
    %c0_8 = arith.constant 0 : index
    %9 = vector.load %arg4[%c0_7, %c0_8] : memref<128x256xf32, #tpu.memory_space<vmem>>, vector<128x256xf32>
    %10 = arith.truncf %9 : vector<128x256xf32> to vector<128x256xbf16>
    %cst_9 = arith.constant dense<0.000000e+00> : vector<16x256xf32>
    %11 = tpu.matmul %5, %10, %cst_9 {dimension_numbers = #tpu.dot_dimension_numbers<[1], [0], [0], [1], [0, 0, 1, 1], [], []>} : vector<16x128xbf16>, vector<128x256xbf16>, vector<16x256xf32> -> vector<16x256xf32>
    %12 = vector.extract_strided_slice %11 {offsets = [0, 0], sizes = [16, 128], strides = [1, 1]} : vector<16x256xf32> to vector<16x128xf32>
    %13 = vector.extract_strided_slice %11 {offsets = [0, 128], sizes = [16, 128], strides = [1, 1]} : vector<16x256xf32> to vector<16x128xf32>
    %14 = arith.truncf %8 : vector<2x128xf32> to vector<2x128xbf16>
    %15 = arith.truncf %12 : vector<16x128xf32> to vector<16x128xbf16>
    %cst_10 = arith.constant dense<0.000000e+00> : vector<2x16xf32>
    %16 = tpu.matmul %14, %15, %cst_10 {dimension_numbers = #tpu.dot_dimension_numbers<[1], [1], [0], [0], [0, 0, 1, 0], [], []>} : vector<2x128xbf16>, vector<16x128xbf16>, vector<2x16xf32> -> vector<2x16xf32>
    %cst_11 = arith.constant 0.0883883461 : f32
    %17 = vector.broadcast %cst_11 : f32 to vector<2x16xf32>
    %18 = arith.mulf %16, %17 : vector<2x16xf32>
    %cst_12 = arith.constant dense<0xFF800000> : vector<2xf32>
    %19 = vector.multi_reduction <maximumf>, %18, %cst_12 [1] : vector<2x16xf32> to vector<2xf32>
    %20 = vector.shape_cast %19 : vector<2xf32> to vector<2x1xf32>
    %21 = vector.broadcast %20 : vector<2x1xf32> to vector<2x16xf32>
    %22 = arith.subf %18, %21 : vector<2x16xf32>
    %23 = math.exp %22 : vector<2x16xf32>
    %cst_13 = arith.constant dense<0.000000e+00> : vector<2xf32>
    %24 = vector.multi_reduction <add>, %23, %cst_13 [1] : vector<2x16xf32> to vector<2xf32>
    %25 = vector.shape_cast %24 : vector<2xf32> to vector<2x1xf32>
    %26 = tpu.reciprocal %25 {approx = true} : vector<2x1xf32> -> vector<2x1xf32>
    %27 = vector.broadcast %26 : vector<2x1xf32> to vector<2x16xf32>
    %28 = arith.mulf %23, %27 : vector<2x16xf32>
    %29 = arith.truncf %28 : vector<2x16xf32> to vector<2x16xbf16>
    %30 = arith.truncf %13 : vector<16x128xf32> to vector<16x128xbf16>
    %cst_14 = arith.constant dense<0.000000e+00> : vector<2x128xf32>
    %31 = tpu.matmul %29, %30, %cst_14 {dimension_numbers = #tpu.dot_dimension_numbers<[1], [0], [0], [1], [0, 0, 1, 1], [], []>} : vector<2x16xbf16>, vector<16x128xbf16>, vector<2x128xf32> -> vector<2x128xf32>
    %32 = arith.truncf %31 : vector<2x128xf32> to vector<2x128xbf16>
    %c0_15 = arith.constant 0 : index
    %c0_16 = arith.constant 0 : index
    %33 = vector.load %arg5[%c0_15, %c0_16] : memref<128x128xf32, #tpu.memory_space<vmem>>, vector<128x128xf32>
    %34 = arith.truncf %33 : vector<128x128xf32> to vector<128x128xbf16>
    %cst_17 = arith.constant dense<0.000000e+00> : vector<2x128xf32>
    %35 = tpu.matmul %32, %34, %cst_17 {dimension_numbers = #tpu.dot_dimension_numbers<[1], [0], [0], [1], [0, 0, 1, 1], [], []>} : vector<2x128xbf16>, vector<128x128xbf16>, vector<2x128xf32> -> vector<2x128xf32>
    %c0_18 = arith.constant 0 : index
    %c0_19 = arith.constant 0 : index
    %c0_20 = arith.constant 0 : index
    %36 = vector.load %arg10[%c0_18, %c0_19, %c0_20] : memref<1x2x128xf32, #tpu.memory_space<vmem>>, vector<1x2x128xf32>
    %37 = vector.shape_cast %36 : vector<1x2x128xf32> to vector<2x128xf32>
    %38 = vector.shape_cast %35 : vector<2x128xf32> to vector<1x2x128xf32>
    tpu.vector_store %arg10[%c0_18, %c0_19, %c0_20], %38 {strides = array<i32>} : memref<1x2x128xf32, #tpu.memory_space<vmem>>, vector<1x2x128xf32>,
    %39 = arith.truncf %35 : vector<2x128xf32> to vector<2x128xbf16>
    %c0_21 = arith.constant 0 : index
    %c0_22 = arith.constant 0 : index
    %40 = vector.load %arg6[%c0_21, %c0_22] : memref<128x256xf32, #tpu.memory_space<vmem>>, vector<128x256xf32>
    %41 = arith.truncf %40 : vector<128x256xf32> to vector<128x256xbf16>
    %cst_23 = arith.constant dense<0.000000e+00> : vector<2x256xf32>
    %42 = tpu.matmul %39, %41, %cst_23 {dimension_numbers = #tpu.dot_dimension_numbers<[1], [0], [0], [1], [0, 0, 1, 1], [], []>} : vector<2x128xbf16>, vector<128x256xbf16>, vector<2x256xf32> -> vector<2x256xf32>
    %c0_24 = arith.constant 0 : index
    %c0_25 = arith.constant 0 : index
    %43 = vector.load %arg7[%c0_24, %c0_25] : memref<1x256xf32, #tpu.memory_space<vmem>>, vector<1x256xf32>
    %44 = vector.broadcast %43 : vector<1x256xf32> to vector<2x256xf32>
    %45 = arith.addf %42, %44 : vector<2x256xf32>
    %cst_26 = arith.constant 0.000000e+00 : f32
    %46 = vector.broadcast %cst_26 : f32 to vector<2x256xf32>
    %47 = arith.maximumf %45, %46 : vector<2x256xf32>
    %48 = arith.truncf %47 : vector<2x256xf32> to vector<2x256xbf16>
    %c0_27 = arith.constant 0 : index
    %c0_28 = arith.constant 0 : index
    %49 = vector.load %arg8[%c0_27, %c0_28] : memref<256x128xf32, #tpu.memory_space<vmem>>, vector<256x128xf32>
    %50 = arith.truncf %49 : vector<256x128xf32> to vector<256x128xbf16>
    %cst_29 = arith.constant dense<0.000000e+00> : vector<2x128xf32>
    %51 = tpu.matmul %48, %50, %cst_29 {dimension_numbers = #tpu.dot_dimension_numbers<[1], [0], [0], [1], [0, 0, 1, 1], [], []>} : vector<2x256xbf16>, vector<256x128xbf16>, vector<2x128xf32> -> vector<2x128xf32>
    %c0_30 = arith.constant 0 : index
    %c0_31 = arith.constant 0 : index
    %52 = vector.load %arg9[%c0_30, %c0_31] : memref<1x128xf32, #tpu.memory_space<vmem>>, vector<1x128xf32>
    %53 = vector.broadcast %52 : vector<1x128xf32> to vector<2x128xf32>
    %54 = arith.addf %51, %53 : vector<2x128xf32>
    %c0_32 = arith.constant 0 : index
    %c0_33 = arith.constant 0 : index
    %c0_34 = arith.constant 0 : index
    %55 = vector.load %arg11[%c0_32, %c0_33, %c0_34] : memref<1x2x128xf32, #tpu.memory_space<vmem>>, vector<1x2x128xf32>
    %56 = vector.shape_cast %55 : vector<1x2x128xf32> to vector<2x128xf32>
    %57 = vector.shape_cast %54 : vector<2x128xf32> to vector<1x2x128xf32>
    tpu.vector_store %arg11[%c0_32, %c0_33, %c0_34], %57 {strides = array<i32>} : memref<1x2x128xf32, #tpu.memory_space<vmem>>, vector<1x2x128xf32>,
    return
  }
  func.func @transform_0(%arg0: i32) -> (i32, i32, i32) {
    %c0_i32 = arith.constant 0 : i32
    %c0_i32_0 = arith.constant 0 : i32
    %c0_i32_1 = arith.constant 0 : i32
    return %arg0, %c0_i32, %c0_i32_0 : i32, i32, i32
  }
  func.func @transform_1(%arg0: i32) -> (i32, i32, i32) {
    %c0_i32 = arith.constant 0 : i32
    %c0_i32_0 = arith.constant 0 : i32
    %c0_i32_1 = arith.constant 0 : i32
    return %arg0, %c0_i32, %c0_i32_0 : i32, i32, i32
  }
  func.func @transform_2(%arg0: i32) -> (i32, i32) {
    %c0_i32 = arith.constant 0 : i32
    %c0_i32_0 = arith.constant 0 : i32
    %c0_i32_1 = arith.constant 0 : i32
    return %c0_i32, %c0_i32_0 : i32, i32
  }
  func.func @transform_3(%arg0: i32) -> (i32, i32) {
    %c0_i32 = arith.constant 0 : i32
    %c0_i32_0 = arith.constant 0 : i32
    %c0_i32_1 = arith.constant 0 : i32
    return %c0_i32, %c0_i32_0 : i32, i32
  }
  func.func @transform_4(%arg0: i32) -> (i32, i32) {
    %c0_i32 = arith.constant 0 : i32
    %c0_i32_0 = arith.constant 0 : i32
    %c0_i32_1 = arith.constant 0 : i32
    return %c0_i32, %c0_i32_0 : i32, i32
  }
  func.func @transform_5(%arg0: i32) -> (i32, i32) {
    %c0_i32 = arith.constant 0 : i32
    %c0_i32_0 = arith.constant 0 : i32
    %c0_i32_1 = arith.constant 0 : i32
    return %c0_i32, %c0_i32_0 : i32, i32
  }
  func.func @transform_6(%arg0: i32) -> (i32, i32) {
    %c0_i32 = arith.constant 0 : i32
    %c0_i32_0 = arith.constant 0 : i32
    %c0_i32_1 = arith.constant 0 : i32
    return %c0_i32, %c0_i32_0 : i32, i32
  }
  func.func @transform_7(%arg0: i32) -> (i32, i32) {
    %c0_i32 = arith.constant 0 : i32
    %c0_i32_0 = arith.constant 0 : i32
    %c0_i32_1 = arith.constant 0 : i32
    return %c0_i32, %c0_i32_0 : i32, i32
  }
  func.func @transform_8(%arg0: i32) -> (i32, i32) {
    %c0_i32 = arith.constant 0 : i32
    %c0_i32_0 = arith.constant 0 : i32
    %c0_i32_1 = arith.constant 0 : i32
    return %c0_i32, %c0_i32_0 : i32, i32
  }
  func.func @transform_9(%arg0: i32) -> (i32, i32, i32) {
    %c0_i32 = arith.constant 0 : i32
    %c0_i32_0 = arith.constant 0 : i32
    %c0_i32_1 = arith.constant 0 : i32
    return %arg0, %c0_i32, %c0_i32_0 : i32, i32, i32
  }
  func.func @transform_10(%arg0: i32) -> (i32, i32, i32) {
    %c0_i32 = arith.constant 0 : i32
    %c0_i32_0 = arith.constant 0 : i32
    %c0_i32_1 = arith.constant 0 : i32
    return %arg0, %c0_i32, %c0_i32_0 : i32, i32, i32
  }
}

</mosaic_0001>

<llo_original>
// kernel: neg.2
$region0: #{neg.2}
  #allocation0 [shape = 's32[1]{0}', space=sflag, size = 0x4, scoped, tag = 'scoped memory for neg.2']
  %s0 = inlined_call_operand.vmem [shape: f32[2,8,256], index: 0, kind: input, shape index: {}]
  %s1 = inlined_call_operand.vmem [shape: f32[2,8,256], index: 1, kind: output, shape index: {}]
  %v2 = vld [vmem:[%s0] sm:$0xff]
  %3 = xla_tuple %v2
  %4 = xla_tuple %3
  %v5 = vxor.u32 %v2, 2147483648
  %6 = xla_tuple %v5
  %7 = vst [vmem:[%s1] sm:$0xff] %v5
  %s8 = scalar_lea.vmem %s0, 16
  %v9 = vld [vmem:[%s8] sm:$0xff]
  %10 = xla_tuple %v9
  %11 = xla_tuple %10
  %v12 = vxor.u32 %v9, 2147483648
  %13 = xla_tuple %v12
  %s14 = scalar_lea.vmem %s1, 16
  %15 = vst [vmem:[%s14] sm:$0xff] %v12
  %s16 = scalar_lea.vmem %s0, 8
  %v17 = vld [vmem:[%s16] sm:$0xff]
  %18 = xla_tuple %v17
  %19 = xla_tuple %18
  %v20 = vxor.u32 %v17, 2147483648
  %21 = xla_tuple %v20
  %s22 = scalar_lea.vmem %s1, 8
  %23 = vst [vmem:[%s22] sm:$0xff] %v20
  %s24 = scalar_lea.vmem %s0, 24
  %v25 = vld [vmem:[%s24] sm:$0xff]
  %26 = xla_tuple %v25
  %27 = xla_tuple %26
  %v28 = vxor.u32 %v25, 2147483648
  %29 = xla_tuple %v28
  %s30 = scalar_lea.vmem %s1, 24
  %31 = vst [vmem:[%s30] sm:$0xff] %v28

// kernel: sim_attention_knn_forward.3
$region0: #{sim_attention_knn_forward.3}
  #allocation0 [shape = 'u32[]', space=smem, size = 0x4, offset = 0x4, fixed_abs, tag = 'smem constant byte address 0x4 - core index']
  #allocation1 [shape = 'u32[144,128]{1,0:T(1,128)}', space=vmem, size = 0x12000, scoped, tag = 'internal scratch']
  %s0 = inlined_call_operand.vmem [shape: f32[2,2,128], index: 0, kind: input, shape index: {}]
  %s1 = inlined_call_operand.vmem [shape: f32[2,16,128], index: 1, kind: input, shape index: {}]
  %s2 = inlined_call_operand.vmem [shape: f32[128,128], index: 2, kind: input, shape index: {}]
  %s3 = inlined_call_operand.vmem [shape: f32[128,256], index: 3, kind: input, shape index: {}]
  %s4 = inlined_call_operand.vmem [shape: f32[128,128], index: 4, kind: input, shape index: {}]
  %s5 = inlined_call_operand.vmem [shape: f32[128,256], index: 5, kind: input, shape index: {}]
  %s6 = inlined_call_operand.vmem [shape: f32[1,256], index: 6, kind: input, shape index: {}]
  %s7 = inlined_call_operand.vmem [shape: f32[256,128], index: 7, kind: input, shape index: {}]
  %s8 = inlined_call_operand.vmem [shape: f32[1,128], index: 8, kind: input, shape index: {}]
  %s9 = inlined_call_operand.vmem [shape: f32[2,2,128], index: 9, kind: output, shape index: {0}]
  %s10 = inlined_call_operand.vmem [shape: f32[2,2,128], index: 10, kind: output, shape index: {1}]
  %11 = xla_tuple %s9, %s10
  %s12 = sld [smem:[#allocation0]]
  $region77: #{sim_attention_knn_forward.3} parent=0
    _
  %s14 = ssub.s32 1, %s12
  %s15 = scalar_select 0, %s14, %s12
  loop: start=0, step=1, limit=4
  $region2: #{sim_attention_knn_forward.3} parent=0 // loop_pre_header
    _
  $region3: #{sim_attention_knn_forward.3} parent=0 // loop_header
    %s17 = sphi 0, %s21
    %p18 = scmp.ge.s32.totalorder %s17, 4
    %s27 = sphi 0, %s29
    %s30 = sphi 0, %s27
    %s31 = sphi 0, %s30
    %s47 = sphi 0, %s31
    %s53 = sphi 0, %s55
    %s56 = sphi 0, %s53
    %s57 = sphi 0, %s56
    %s73 = sphi 0, %s57
    %s77 = sphi 0, %s77
    %s79 = sphi 0, %s77
    %s80 = sphi 0, %s79
    %s94 = sphi 0, %s80
    %s98 = sphi 0, %s98
    %s100 = sphi 0, %s98
    %s101 = sphi 0, %s100
    %s115 = sphi 0, %s101
    %s119 = sphi 0, %s119
    %s121 = sphi 0, %s119
    %s122 = sphi 0, %s121
    %s136 = sphi 0, %s122
    %s140 = sphi 0, %s140
    %s142 = sphi 0, %s140
    %s143 = sphi 0, %s142
    %s157 = sphi 0, %s143
    %s161 = sphi 0, %s161
    %s163 = sphi 0, %s161
    %s164 = sphi 0, %s163
    %s178 = sphi 0, %s164
    %s182 = sphi 0, %s182
    %s184 = sphi 0, %s182
    %s185 = sphi 0, %s184
    %s199 = sphi 0, %s185
    %s203 = sphi 0, %s203
    %s205 = sphi 0, %s203
    %s206 = sphi 0, %s205
    %s220 = sphi 0, %s206
    %s226 = sphi 0, %s228
    %s229 = sphi 0, %s226
    %s230 = sphi 0, %s229
    %s246 = sphi 0, %s230
    %s252 = sphi 0, %s254
    %s255 = sphi 0, %s252
    %s256 = sphi 0, %s255
    %s272 = sphi 0, %s256
  $region4: #{sim_attention_knn_forward.3} parent=0 // loop_header_branch
    %20 = sbr.rel (%p18) target = $region8
  $region5: #{sim_attention_knn_forward.3} parent=0 // loop_body
    %s22 = ssub.s32 %s17, 1
    %s23 = ssub.s32 %s17, 2
    %s24 = sadd.s32 %s17, 1
    %s25 = ssub.s32 %s17, %s24
    %p26 = scmp.eq.s32.totalorder %s25, 0
    %s28 = sadd.s32 %s27, 1
    %s29 = scalar_select %p26, %s27, %s28
    %p32 = pneg %p26
    %p33 = scmp.eq.s32.totalorder %s17, 1
    %p34 = por %p32, %p33
    %p35 = scmp.ne.s32.totalorder %s27, %s30
    %p36 = scmp.eq.s32.totalorder %s17, 0
    %p37 = por %p35, %p36
    %p38 = scmp.ne.s32.totalorder %s27, %s30
    %p39 = scmp.eq.s32.totalorder %s22, 1
    %p40 = por %p38, %p39
    %p41 = scmp.ne.s32.totalorder %s30, %s31
    %p42 = scmp.eq.s32.totalorder %s22, 0
    %p43 = por %p41, %p42
    %p44 = scmp.ne.s32.totalorder %s30, %s31
    %p45 = scmp.eq.s32.totalorder %s23, 1
    %p46 = por %p44, %p45
    %p48 = scmp.ne.s32.totalorder %s31, %s47
    %p49 = scmp.eq.s32.totalorder %s23, 0
    %p50 = por %p48, %p49
    %s51 = ssub.s32 %s17, %s24
    %p52 = scmp.eq.s32.totalorder %s51, 0
    %s54 = sadd.s32 %s53, 1
    %s55 = scalar_select %p52, %s53, %s54
    %p58 = pneg %p52
    %p59 = scmp.eq.s32.totalorder %s17, 1
    %p60 = por %p58, %p59
    %p61 = scmp.ne.s32.totalorder %s53, %s56
    %p62 = scmp.eq.s32.totalorder %s17, 0
    %p63 = por %p61, %p62
    %p64 = scmp.ne.s32.totalorder %s53, %s56
    %p65 = scmp.eq.s32.totalorder %s22, 1
    %p66 = por %p64, %p65
    %p67 = scmp.ne.s32.totalorder %s56, %s57
    %p68 = scmp.eq.s32.totalorder %s22, 0
    %p69 = por %p67, %p68
    %p70 = scmp.ne.s32.totalorder %s56, %s57
    %p71 = scmp.eq.s32.totalorder %s23, 1
    %p72 = por %p70, %p71
    %p74 = scmp.ne.s32.totalorder %s57, %s73
    %p75 = scmp.eq.s32.totalorder %s23, 0
    %p76 = por %p74, %p75
    %s78 = sadd.s32 %s77, 1
    %p81 = scmp.eq.s32.totalorder %s17, 1
    %p82 = scmp.ne.s32.totalorder %s77, %s79
    %p83 = scmp.eq.s32.totalorder %s17, 0
    %p84 = por %p82, %p83
    %p85 = scmp.ne.s32.totalorder %s77, %s79
    %p86 = scmp.eq.s32.totalorder %s22, 1
    %p87 = por %p85, %p86
    %p88 = scmp.ne.s32.totalorder %s79, %s80
    %p89 = scmp.eq.s32.totalorder %s22, 0
    %p90 = por %p88, %p89
    %p91 = scmp.ne.s32.totalorder %s79, %s80
    %p92 = scmp.eq.s32.totalorder %s23, 1
    %p93 = por %p91, %p92
    %p95 = scmp.ne.s32.totalorder %s80, %s94
    %p96 = scmp.eq.s32.totalorder %s23, 0
    %p97 = por %p95, %p96
    %s99 = sadd.s32 %s98, 1
    %p102 = scmp.eq.s32.totalorder %s17, 1
    %p103 = scmp.ne.s32.totalorder %s98, %s100
    %p104 = scmp.eq.s32.totalorder %s17, 0
    %p105 = por %p103, %p104
    %p106 = scmp.ne.s32.totalorder %s98, %s100
    %p107 = scmp.eq.s32.totalorder %s22, 1
    %p108 = por %p106, %p107
    %p109 = scmp.ne.s32.totalorder %s100, %s101
    %p110 = scmp.eq.s32.totalorder %s22, 0
    %p111 = por %p109, %p110
    %p112 = scmp.ne.s32.totalorder %s100, %s101
    %p113 = scmp.eq.s32.totalorder %s23, 1
    %p114 = por %p112, %p113
    %p116 = scmp.ne.s32.totalorder %s101, %s115
    %p117 = scmp.eq.s32.totalorder %s23, 0
    %p118 = por %p116, %p117
    %s120 = sadd.s32 %s119, 1
    %p123 = scmp.eq.s32.totalorder %s17, 1
    %p124 = scmp.ne.s32.totalorder %s119, %s121
    %p125 = scmp.eq.s32.totalorder %s17, 0
    %p126 = por %p124, %p125
    %p127 = scmp.ne.s32.totalorder %s119, %s121
    %p128 = scmp.eq.s32.totalorder %s22, 1
    %p129 = por %p127, %p128
    %p130 = scmp.ne.s32.totalorder %s121, %s122
    %p131 = scmp.eq.s32.totalorder %s22, 0
    %p132 = por %p130, %p131
    %p133 = scmp.ne.s32.totalorder %s121, %s122
    %p134 = scmp.eq.s32.totalorder %s23, 1
    %p135 = por %p133, %p134
    %p137 = scmp.ne.s32.totalorder %s122, %s136
    %p138 = scmp.eq.s32.totalorder %s23, 0
    %p139 = por %p137, %p138
    %s141 = sadd.s32 %s140, 1
    %p144 = scmp.eq.s32.totalorder %s17, 1
    %p145 = scmp.ne.s32.totalorder %s140, %s142
    %p146 = scmp.eq.s32.totalorder %s17, 0
    %p147 = por %p145, %p146
    %p148 = scmp.ne.s32.totalorder %s140, %s142
    %p149 = scmp.eq.s32.totalorder %s22, 1
    %p150 = por %p148, %p149
    %p151 = scmp.ne.s32.totalorder %s142, %s143
    %p152 = scmp.eq.s32.totalorder %s22, 0
    %p153 = por %p151, %p152
    %p154 = scmp.ne.s32.totalorder %s142, %s143
    %p155 = scmp.eq.s32.totalorder %s23, 1
    %p156 = por %p154, %p155
    %p158 = scmp.ne.s32.totalorder %s143, %s157
    %p159 = scmp.eq.s32.totalorder %s23, 0
    %p160 = por %p158, %p159
    %s162 = sadd.s32 %s161, 1
    %p165 = scmp.eq.s32.totalorder %s17, 1
    %p166 = scmp.ne.s32.totalorder %s161, %s163
    %p167 = scmp.eq.s32.totalorder %s17, 0
    %p168 = por %p166, %p167
    %p169 = scmp.ne.s32.totalorder %s161, %s163
    %p170 = scmp.eq.s32.totalorder %s22, 1
    %p171 = por %p169, %p170
    %p172 = scmp.ne.s32.totalorder %s163, %s164
    %p173 = scmp.eq.s32.totalorder %s22, 0
    %p174 = por %p172, %p173
    %p175 = scmp.ne.s32.totalorder %s163, %s164
    %p176 = scmp.eq.s32.totalorder %s23, 1
    %p177 = por %p175, %p176
    %p179 = scmp.ne.s32.totalorder %s164, %s178
    %p180 = scmp.eq.s32.totalorder %s23, 0
    %p181 = por %p179, %p180
    %s183 = sadd.s32 %s182, 1
    %p186 = scmp.eq.s32.totalorder %s17, 1
    %p187 = scmp.ne.s32.totalorder %s182, %s184
    %p188 = scmp.eq.s32.totalorder %s17, 0
    %p189 = por %p187, %p188
    %p190 = scmp.ne.s32.totalorder %s182, %s184
    %p191 = scmp.eq.s32.totalorder %s22, 1
    %p192 = por %p190, %p191
    %p193 = scmp.ne.s32.totalorder %s184, %s185
    %p194 = scmp.eq.s32.totalorder %s22, 0
    %p195 = por %p193, %p194
    %p196 = scmp.ne.s32.totalorder %s184, %s185
    %p197 = scmp.eq.s32.totalorder %s23, 1
    %p198 = por %p196, %p197
    %p200 = scmp.ne.s32.totalorder %s185, %s199
    %p201 = scmp.eq.s32.totalorder %s23, 0
    %p202 = por %p200, %p201
    %s204 = sadd.s32 %s203, 1
    %p207 = scmp.eq.s32.totalorder %s17, 1
    %p208 = scmp.ne.s32.totalorder %s203, %s205
    %p209 = scmp.eq.s32.totalorder %s17, 0
    %p210 = por %p208, %p209
    %p211 = scmp.ne.s32.totalorder %s203, %s205
    %p212 = scmp.eq.s32.totalorder %s22, 1
    %p213 = por %p211, %p212
    %p214 = scmp.ne.s32.totalorder %s205, %s206
    %p215 = scmp.eq.s32.totalorder %s22, 0
    %p216 = por %p214, %p215
    %p217 = scmp.ne.s32.totalorder %s205, %s206
    %p218 = scmp.eq.s32.totalorder %s23, 1
    %p219 = por %p217, %p218
    %p221 = scmp.ne.s32.totalorder %s206, %s220
    %p222 = scmp.eq.s32.totalorder %s23, 0
    %p223 = por %p221, %p222
    %s224 = ssub.s32 %s17, %s24
    %p225 = scmp.eq.s32.totalorder %s224, 0
    %s227 = sadd.s32 %s226, 1
    %s228 = scalar_select %p225, %s226, %s227
    %p231 = pneg %p225
    %p232 = scmp.eq.s32.totalorder %s17, 1
    %p233 = por %p231, %p232
    %p234 = scmp.ne.s32.totalorder %s226, %s229
    %p235 = scmp.eq.s32.totalorder %s17, 0
    %p236 = por %p234, %p235
    %p237 = scmp.ne.s32.totalorder %s226, %s229
    %p238 = scmp.eq.s32.totalorder %s22, 1
    %p239 = por %p237, %p238
    %p240 = scmp.ne.s32.totalorder %s229, %s230
    %p241 = scmp.eq.s32.totalorder %s22, 0
    %p242 = por %p240, %p241
    %p243 = scmp.ne.s32.totalorder %s229, %s230
    %p244 = scmp.eq.s32.totalorder %s23, 1
    %p245 = por %p243, %p244
    %p247 = scmp.ne.s32.totalorder %s230, %s246
    %p248 = scmp.eq.s32.totalorder %s23, 0
    %p249 = por %p247, %p248
    %s250 = ssub.s32 %s17, %s24
    %p251 = scmp.eq.s32.totalorder %s250, 0
    %s253 = sadd.s32 %s252, 1
    %s254 = scalar_select %p251, %s252, %s253
    %p257 = pneg %p251
    %p258 = scmp.eq.s32.totalorder %s17, 1
    %p259 = por %p257, %p258
    %p260 = scmp.ne.s32.totalorder %s252, %s255
    %p261 = scmp.eq.s32.totalorder %s17, 0
    %p262 = por %p260, %p261
    %p263 = scmp.ne.s32.totalorder %s252, %s255
    %p264 = scmp.eq.s32.totalorder %s22, 1
    %p265 = por %p263, %p264
    %p266 = scmp.ne.s32.totalorder %s255, %s256
    %p267 = scmp.eq.s32.totalorder %s22, 0
    %p268 = por %p266, %p267
    %p269 = scmp.ne.s32.totalorder %s255, %s256
    %p270 = scmp.eq.s32.totalorder %s23, 1
    %p271 = por %p269, %p270
    %p273 = scmp.ne.s32.totalorder %s256, %s272
    %p274 = scmp.eq.s32.totalorder %s23, 0
    %p275 = por %p273, %p274
    %p276 = scmp.le.s32.totalorder 1, %s17
    %p277 = scmp.lt.s32.totalorder %s17, 3
    %p278 = pnand %p276, %p277
    %p279 = pneg %p278
    // Predicated region
    $region9: #{sim_attention_knn_forward.3} parent=5 // pred_check
      _
    $region10: #{sim_attention_knn_forward.3} parent=5 // pred_check_branch
      %281 = sbr.rel (%p278) target = $region12
    $region11: #{sim_attention_knn_forward.3} parent=5 // pred_region
      %s282 = ssub.s32 %s17, 1
      // Predicated region
      $region13: #{sim_attention_knn_forward.3} parent=11 // pred_check
        %p283 = pneg %p90
      $region14: #{sim_attention_knn_forward.3} parent=11 // pred_check_branch
        %285 = sbr.rel (%p283) target = $region16
      $region15: #{sim_attention_knn_forward.3} parent=11 // pred_region
        _
      $region16: #{sim_attention_knn_forward.3} parent=11 // pred_fallthru
        _
      // Predicated region
      $region17: #{sim_attention_knn_forward.3} parent=11 // pred_check
        %p286 = pneg %p111
      $region18: #{sim_attention_knn_forward.3} parent=11 // pred_check_branch
        %288 = sbr.rel (%p286) target = $region20
      $region19: #{sim_attention_knn_forward.3} parent=11 // pred_region
        _
      $region20: #{sim_attention_knn_forward.3} parent=11 // pred_fallthru
        _
      // Predicated region
      $region21: #{sim_attention_knn_forward.3} parent=11 // pred_check
        %p289 = pneg %p132
      $region22: #{sim_attention_knn_forward.3} parent=11 // pred_check_branch
        %291 = sbr.rel (%p289) target = $region24
      $region23: #{sim_attention_knn_forward.3} parent=11 // pred_region
        _
      $region24: #{sim_attention_knn_forward.3} parent=11 // pred_fallthru
        _
      // Predicated region
      $region25: #{sim_attention_knn_forward.3} parent=11 // pred_check
        %p292 = pneg %p153
      $region26: #{sim_attention_knn_forward.3} parent=11 // pred_check_branch
        %294 = sbr.rel (%p292) target = $region28
      $region27: #{sim_attention_knn_forward.3} parent=11 // pred_region
        _
      $region28: #{sim_attention_knn_forward.3} parent=11 // pred_fallthru
        _
      // Predicated region
      $region29: #{sim_attention_knn_forward.3} parent=11 // pred_check
        %p295 = pneg %p174
      $region30: #{sim_attention_knn_forward.3} parent=11 // pred_check_branch
        %297 = sbr.rel (%p295) target = $region32
      $region31: #{sim_attention_knn_forward.3} parent=11 // pred_region
        _
      $region32: #{sim_attention_knn_forward.3} parent=11 // pred_fallthru
        _
      // Predicated region
      $region33: #{sim_attention_knn_forward.3} parent=11 // pred_check
        %p298 = pneg %p195
      $region34: #{sim_attention_knn_forward.3} parent=11 // pred_check_branch
        %300 = sbr.rel (%p298) target = $region36
      $region35: #{sim_attention_knn_forward.3} parent=11 // pred_region
        _
      $region36: #{sim_attention_knn_forward.3} parent=11 // pred_fallthru
        _
      // Predicated region
      $region37: #{sim_attention_knn_forward.3} parent=11 // pred_check
        %p301 = pneg %p216
      $region38: #{sim_attention_knn_forward.3} parent=11 // pred_check_branch
        %303 = sbr.rel (%p301) target = $region40
      $region39: #{sim_attention_knn_forward.3} parent=11 // pred_region
        _
      $region40: #{sim_attention_knn_forward.3} parent=11 // pred_fallthru
        _
    $region12: #{sim_attention_knn_forward.3} parent=5 // pred_fallthru
      _
    %p304 = scmp.lt.s32.totalorder %s17, 2
    // Predicated region
    $region41: #{sim_attention_knn_forward.3} parent=5 // pred_check
      %p305 = pneg %p304
    $region42: #{sim_attention_knn_forward.3} parent=5 // pred_check_branch
      %307 = sbr.rel (%p305) target = $region44
    $region43: #{sim_attention_knn_forward.3} parent=5 // pred_region
      // Predicated region
      $region45: #{sim_attention_knn_forward.3} parent=43 // pred_check
        %p308 = pneg %p37
      $region46: #{sim_attention_knn_forward.3} parent=43 // pred_check_branch
        %310 = sbr.rel (%p308) target = $region48
      $region47: #{sim_attention_knn_forward.3} parent=43 // pred_region
        %p311 = scmp.lt.s32.totalorder %s17, 1
        %s312 = scalar_select %p311, %s17, 1
        %s313 = smul.addr %s312, 2
        %s314 = scalar_lea.vmem %s0, %s313
      $region48: #{sim_attention_knn_forward.3} parent=43 // pred_fallthru
        _
      // Predicated region
      $region49: #{sim_attention_knn_forward.3} parent=43 // pred_check
        %p315 = pneg %p63
      $region50: #{sim_attention_knn_forward.3} parent=43 // pred_check_branch
        %317 = sbr.rel (%p315) target = $region52
      $region51: #{sim_attention_knn_forward.3} parent=43 // pred_region
        %p318 = scmp.lt.s32.totalorder %s17, 1
        %s319 = scalar_select %p318, %s17, 1
        %s320 = smul.addr %s319, 2
        %s321 = smul.addr %s320, 8
        %s322 = scalar_lea.vmem %s1, %s321
      $region52: #{sim_attention_knn_forward.3} parent=43 // pred_fallthru
        _
    $region44: #{sim_attention_knn_forward.3} parent=5 // pred_fallthru
      _
    %p323 = scmp.le.s32.totalorder 1, %s17
    %p324 = scmp.lt.s32.totalorder %s17, 3
    %p325 = pnand %p323, %p324
    %p326 = pneg %p325
    // Predicated region
    $region53: #{sim_attention_knn_forward.3} parent=5 // pred_check
      _
    $region54: #{sim_attention_knn_forward.3} parent=5 // pred_check_branch
      %328 = sbr.rel (%p325) target = $region56
    $region55: #{sim_attention_knn_forward.3} parent=5 // pred_region
      %s329 = ssub.s32 %s17, 1
      %p330 = scmp.lt.s32.totalorder %s22, 1
      %s331 = scalar_select %p330, %s22, 1
      %s332 = smul.addr %s331, 2
      %s333 = scalar_lea.vmem %s0, %s332
      %p334 = pneg %p43
      %p335 = pneg %p40
      %p336 = scmp.lt.s32.totalorder %s22, 1
      %s337 = scalar_select %p336, %s22, 1
      %s338 = smul.addr %s337, 2
      %s339 = smul.addr %s338, 8
      %s340 = scalar_lea.vmem %s1, %s339
      %p341 = pneg %p69
      %p342 = pneg %p66
      %p343 = pneg %p90
      %p344 = pneg %p87
      %p345 = pneg %p111
      %p346 = pneg %p108
      %p347 = pneg %p132
      %p348 = pneg %p129
      %p349 = pneg %p153
      %p350 = pneg %p150
      %p351 = pneg %p174
      %p352 = pneg %p171
      %p353 = pneg %p195
      %p354 = pneg %p192
      %p355 = pneg %p216
      %p356 = pneg %p213
      %p357 = pneg %p242
      %p358 = pneg %p239
      %p359 = scmp.lt.s32.totalorder %s22, 1
      %s360 = scalar_select %p359, %s22, 1
      %s361 = smul.addr %s360, 2
      %s362 = scalar_lea.vmem %s9, %s361
      %p363 = pneg %p268
      %p364 = pneg %p265
      %p365 = scmp.lt.s32.totalorder %s22, 1
      %s366 = scalar_select %p365, %s22, 1
      %s367 = smul.addr %s366, 2
      %s368 = scalar_lea.vmem %s10, %s367
      %p369 = scmp.lt.s32.totalorder %s22, 1
      %s370 = scalar_select %p369, %s22, 1
      %s371 = smul.addr %s370, 2
      %s372 = scalar_lea.vmem %s0, %s371
      %p373 = scmp.lt.s32.totalorder %s22, 1
      %s374 = scalar_select %p373, %s22, 1
      %s375 = smul.addr %s374, 2
      %s376 = smul.addr %s375, 8
      %s377 = scalar_lea.vmem %s1, %s376
      %p378 = scmp.lt.s32.totalorder %s22, 1
      %s379 = scalar_select %p378, %s22, 1
      %s380 = smul.addr %s379, 2
      %s381 = scalar_lea.vmem %s9, %s380
      %p382 = scmp.lt.s32.totalorder %s22, 1
      %s383 = scalar_select %p382, %s22, 1
      %s384 = smul.addr %s383, 2
      %s385 = scalar_lea.vmem %s10, %s384
      %v387 = vld [vmem:[%s372] sm:$0x3]
      %v388 = vld [vmem:[%s377] sm:$0xff]
      %v389 = vld [vmem:[%s377 + $0x8] sm:$0xff]
      %v390 = vpack.c.bf16 %v387, %v387
      %v391 = vpack.c.bf16 %v389, %v388
      %v392 = vld [vmem:[%s2] sm:$0xff]
      %v393 = vld [vmem:[%s2 + $0x8] sm:$0xff]
      %v394 = vld [vmem:[%s2 + $0x10] sm:$0xff]
      %v395 = vld [vmem:[%s2 + $0x18] sm:$0xff]
      %v396 = vld [vmem:[%s2 + $0x20] sm:$0xff]
      %v397 = vld [vmem:[%s2 + $0x28] sm:$0xff]
      %v398 = vld [vmem:[%s2 + $0x30] sm:$0xff]
      %v399 = vld [vmem:[%s2 + $0x38] sm:$0xff]
      %v400 = vld [vmem:[%s2 + $0x40] sm:$0xff]
      %v401 = vld [vmem:[%s2 + $0x48] sm:$0xff]
      %v402 = vld [vmem:[%s2 + $0x50] sm:$0xff]
      %v403 = vld [vmem:[%s2 + $0x58] sm:$0xff]
      %v404 = vld [vmem:[%s2 + $0x60] sm:$0xff]
      %v405 = vld [vmem:[%s2 + $0x68] sm:$0xff]
      %v406 = vld [vmem:[%s2 + $0x70] sm:$0xff]
      %v407 = vld [vmem:[%s2 + $0x78] sm:$0xff]
      %v408 = vpack.c.bf16 %v393, %v392
      %v409 = vpack.c.bf16 %v395, %v394
      %v410 = vpack.c.bf16 %v397, %v396
      %v411 = vpack.c.bf16 %v399, %v398
      %v412 = vpack.c.bf16 %v401, %v400
      %v413 = vpack.c.bf16 %v403, %v402
      %v414 = vpack.c.bf16 %v405, %v404
      %v415 = vpack.c.bf16 %v407, %v406
      %416 = vmatprep.subr.bf16.mxu0 0
      %417 = vmatpush1.bf16.msra.mxu0 %v408
      %418 = vmatprep.subr.bf16.mxu0 0
      %419 = vmatpush1.bf16.msra.mxu0 %v409
      %420 = vmatprep.subr.bf16.mxu0 0
      %421 = vmatpush1.bf16.msra.mxu0 %v410
      %422 = vmatprep.subr.bf16.mxu0 0
      %423 = vmatpush1.bf16.msra.mxu0 %v411
      %424 = vmatprep.subr.bf16.mxu0 0
      %425 = vmatpush1.bf16.msra.mxu0 %v412
      %426 = vmatprep.subr.bf16.mxu0 0
      %427 = vmatpush1.bf16.msra.mxu0 %v413
      %428 = vmatprep.subr.bf16.mxu0 0
      %429 = vmatpush1.bf16.msra.mxu0 %v414
      %430 = vmatprep.subr.bf16.mxu0 0
      %431 = vmatpush1.bf16.msra.mxu0 %v415
      %432 = vmatprep.subr.bf16.mxu0 0
      %433 = vmatpush1.bf16.msra.mxu0 0
      %434 = vmatprep.subr.bf16.mxu0 0
      %435 = vmatpush1.bf16.msra.mxu0 0
      %436 = vmatprep.subr.bf16.mxu0 0
      %437 = vmatpush1.bf16.msra.mxu0 0
      %438 = vmatprep.subr.bf16.mxu0 0
      %439 = vmatpush1.bf16.msra.mxu0 0
      %440 = vmatprep.subr.bf16.mxu0 0
      %441 = vmatpush1.bf16.msra.mxu0 0
      %442 = vmatprep.subr.bf16.mxu0 0
      %443 = vmatpush1.bf16.msra.mxu0 0
      %444 = vmatprep.subr.bf16.mxu0 0
      %445 = vmatpush1.bf16.msra.mxu0 0
      %446 = vmatprep.subr.bf16.mxu0 0
      %447 = vmatpush1.bf16.msra.mxu0 0
      %448 = vmatprep.mubr.bf16.mxu0 0
      %449 = vmatmul.mubr.bf16.gmra.mrb[0].mxu0 %v390
      %v450 = vpop.f32.mrb[0].mxu0
      %v451 = vadd.f32 0.0, %v450
      %v452 = vpop.f32.mrb[0].mxu0
      %v453 = vpop.f32.mrb[0].mxu0
      %v454 = vpop.f32.mrb[0].mxu0
      %455 = vdwg.mxu0
      %v456 = vld [vmem:[%s3] sm:$0xff]
      %v457 = vld [vmem:[%s3 + $0x8] sm:$0xff]
      %v458 = vld [vmem:[%s3 + $0x10] sm:$0xff]
      %v459 = vld [vmem:[%s3 + $0x18] sm:$0xff]
      %v460 = vld [vmem:[%s3 + $0x20] sm:$0xff]
      %v461 = vld [vmem:[%s3 + $0x28] sm:$0xff]
      %v462 = vld [vmem:[%s3 + $0x30] sm:$0xff]
      %v463 = vld [vmem:[%s3 + $0x38] sm:$0xff]
      %v464 = vld [vmem:[%s3 + $0x40] sm:$0xff]
      %v465 = vld [vmem:[%s3 + $0x48] sm:$0xff]
      %v466 = vld [vmem:[%s3 + $0x50] sm:$0xff]
      %v467 = vld [vmem:[%s3 + $0x58] sm:$0xff]
      %v468 = vld [vmem:[%s3 + $0x60] sm:$0xff]
      %v469 = vld [vmem:[%s3 + $0x68] sm:$0xff]
      %v470 = vld [vmem:[%s3 + $0x70] sm:$0xff]
      %v471 = vld [vmem:[%s3 + $0x78] sm:$0xff]
      %v472 = vld [vmem:[%s3 + $0x80] sm:$0xff]
      %v473 = vld [vmem:[%s3 + $0x88] sm:$0xff]
      %v474 = vld [vmem:[%s3 + $0x90] sm:$0xff]
      %v475 = vld [vmem:[%s3 + $0x98] sm:$0xff]
      %v476 = vld [vmem:[%s3 + $0xa0] sm:$0xff]
      %v477 = vld [vmem:[%s3 + $0xa8] sm:$0xff]
      %v478 = vld [vmem:[%s3 + $0xb0] sm:$0xff]
      %v479 = vld [vmem:[%s3 + $0xb8] sm:$0xff]
      %v480 = vld [vmem:[%s3 + $0xc0] sm:$0xff]
      %v481 = vld [vmem:[%s3 + $0xc8] sm:$0xff]
      %v482 = vld [vmem:[%s3 + $0xd0] sm:$0xff]
      %v483 = vld [vmem:[%s3 + $0xd8] sm:$0xff]
      %v484 = vld [vmem:[%s3 + $0xe0] sm:$0xff]
      %v485 = vld [vmem:[%s3 + $0xe8] sm:$0xff]
      %v486 = vld [vmem:[%s3 + $0xf0] sm:$0xff]
      %v487 = vld [vmem:[%s3 + $0xf8] sm:$0xff]
      %v488 = vpack.c.bf16 %v458, %v456
      %v489 = vpack.c.bf16 %v459, %v457
      %v490 = vpack.c.bf16 %v462, %v460
      %v491 = vpack.c.bf16 %v463, %v461
      %v492 = vpack.c.bf16 %v466, %v464
      %v493 = vpack.c.bf16 %v467, %v465
      %v494 = vpack.c.bf16 %v470, %v468
      %v495 = vpack.c.bf16 %v471, %v469
      %v496 = vpack.c.bf16 %v474, %v472
      %v497 = vpack.c.bf16 %v475, %v473
      %v498 = vpack.c.bf16 %v478, %v476
      %v499 = vpack.c.bf16 %v479, %v477
      %v500 = vpack.c.bf16 %v482, %v480
      %v501 = vpack.c.bf16 %v483, %v481
      %v502 = vpack.c.bf16 %v486, %v484
      %v503 = vpack.c.bf16 %v487, %v485
      %504 = vmatprep.subr.bf16.mxu0 %v489
      %505 = vmatpush1.bf16.msra.mxu0 %v488
      %506 = vmatprep.subr.bf16.mxu0 %v491
      %507 = vmatpush1.bf16.msra.mxu0 %v490
      %508 = vmatprep.subr.bf16.mxu0 %v493
      %509 = vmatpush1.bf16.msra.mxu0 %v492
      %510 = vmatprep.subr.bf16.mxu0 %v495
      %511 = vmatpush1.bf16.msra.mxu0 %v494
      %512 = vmatprep.subr.bf16.mxu0 %v497
      %513 = vmatpush1.bf16.msra.mxu0 %v496
      %514 = vmatprep.subr.bf16.mxu0 %v499
      %515 = vmatpush1.bf16.msra.mxu0 %v498
      %516 = vmatprep.subr.bf16.mxu0 %v501
      %517 = vmatpush1.bf16.msra.mxu0 %v500
      %518 = vmatprep.subr.bf16.mxu0 %v503
      %519 = vmatpush1.bf16.msra.mxu0 %v502
      %520 = vmatprep.subr.bf16.mxu0 0
      %521 = vmatpush1.bf16.msra.mxu0 0
      %522 = vmatprep.subr.bf16.mxu0 0
      %523 = vmatpush1.bf16.msra.mxu0 0
      %524 = vmatprep.subr.bf16.mxu0 0
      %525 = vmatpush1.bf16.msra.mxu0 0
      %526 = vmatprep.subr.bf16.mxu0 0
      %527 = vmatpush1.bf16.msra.mxu0 0
      %528 = vmatprep.subr.bf16.mxu0 0
      %529 = vmatpush1.bf16.msra.mxu0 0
      %530 = vmatprep.subr.bf16.mxu0 0
      %531 = vmatpush1.bf16.msra.mxu0 0
      %532 = vmatprep.subr.bf16.mxu0 0
      %533 = vmatpush1.bf16.msra.mxu0 0
      %534 = vmatprep.subr.bf16.mxu0 0
      %535 = vmatpush1.bf16.msra.mxu0 0
      %536 = vmatprep.mubr.bf16.mxu0 0
      %537 = vmatmul.mubr.bf16.gmra.mrb[0].mxu0 %v391
      %v538 = vpop.f32.mrb[0].mxu0
      %v539 = vadd.f32 0.0, %v538
      %v540 = vpop.f32.mrb[0].mxu0
      %v541 = vadd.f32 0.0, %v540
      %v542 = vpop.f32.mrb[0].mxu0
      %v543 = vadd.f32 0.0, %v542
      %v544 = vpop.f32.mrb[0].mxu0
      %v545 = vadd.f32 0.0, %v544
      %546 = vdwg.mxu0
      %v547 = vpack.c.bf16 %v451, %v451
      %v548 = vpack.c.bf16 %v543, %v539
      %549 = vmatprep.subr.bf16.mxu0 0
      %550 = vmatpush1.bf16.xpose.msra.mxu0 %v548
      %551 = vmatprep.subr.bf16.mxu0 0
      %552 = vmatpush1.bf16.xpose.msra.mxu0 0
      %553 = vmatprep.subr.bf16.mxu0 0
      %554 = vmatpush1.bf16.xpose.msra.mxu0 0
      %555 = vmatprep.subr.bf16.mxu0 0
      %556 = vmatpush1.bf16.xpose.msra.mxu0 0
      %557 = vmatprep.subr.bf16.mxu0 0
      %558 = vmatpush1.bf16.xpose.msra.mxu0 0
      %559 = vmatprep.subr.bf16.mxu0 0
      %560 = vmatpush1.bf16.xpose.msra.mxu0 0
      %561 = vmatprep.subr.bf16.mxu0 0
      %562 = vmatpush1.bf16.xpose.msra.mxu0 0
      %563 = vmatprep.subr.bf16.mxu0 0
      %564 = vmatpush1.bf16.xpose.msra.mxu0 0
      %565 = vmatprep.subr.bf16.mxu0 0
      %566 = vmatpush1.bf16.xpose.msra.mxu0 0
      %567 = vmatprep.subr.bf16.mxu0 0
      %568 = vmatpush1.bf16.xpose.msra.mxu0 0
      %569 = vmatprep.subr.bf16.mxu0 0
      %570 = vmatpush1.bf16.xpose.msra.mxu0 0
      %571 = vmatprep.subr.bf16.mxu0 0
      %572 = vmatpush1.bf16.xpose.msra.mxu0 0
      %573 = vmatprep.subr.bf16.mxu0 0
      %574 = vmatpush1.bf16.xpose.msra.mxu0 0
      %575 = vmatprep.subr.bf16.mxu0 0
      %576 = vmatpush1.bf16.xpose.msra.mxu0 0
      %577 = vmatprep.subr.bf16.mxu0 0
      %578 = vmatpush1.bf16.xpose.msra.mxu0 0
      %579 = vmatprep.subr.bf16.mxu0 0
      %580 = vmatpush1.bf16.xpose.msra.mxu0 0
      %581 = vmatprep.mubr.bf16.mxu0 0
      %582 = vmatmul.mubr.bf16.gmra.mrb[0].mxu0 %v547
      %v583 = vpop.f32.mrb[0].mxu0
      %v584 = vadd.f32 0.0, %v583
      %v585 = vpop.f32.mrb[0].mxu0
      %v586 = vpop.f32.mrb[0].mxu0
      %v587 = vpop.f32.mrb[0].mxu0
      %588 = vdwg.mxu0
      %v589 = vmul.f32 %v584, 0.088388346
      %vm590 = vcmask 123904
      %v591 = vsel %vm590, %v589, -inf
      %592 = vmax.xlane.f32.xlu0 %v591
      %v593 = vpop.xlane.xlu0 %592
      %v594 = vsub.f32 %v589, %v593
      %v595 = vmul.f32 %v594, 1.442695
      %v596 = vpow.pop %v595
      %v597 = vsel %vm590, %v596, 0.0
      %598 = vadd.xlane.f32.xlu0 %v597
      %v599 = vpop.xlane.xlu0 %598
      %v600 = vrcp.pop %v599
      %v601 = vmul.f32 %v596, %v600
      %v602 = vpack.c.bf16 %v601, %v601
      %v603 = vpack.c.bf16 %v545, %v541
      %vm604 = vcmask 130048
      %v606 = vsel %vm604, %v602, 0
      %608 = vmatprep.subr.bf16.mxu0 0
      %609 = vmatpush1.bf16.msra.mxu0 %v603
      %610 = vmatprep.subr.bf16.mxu0 0
      %611 = vmatpush1.bf16.msra.mxu0 0
      %612 = vmatprep.subr.bf16.mxu0 0
      %613 = vmatpush1.bf16.msra.mxu0 0
      %614 = vmatprep.subr.bf16.mxu0 0
      %615 = vmatpush1.bf16.msra.mxu0 0
      %616 = vmatprep.subr.bf16.mxu0 0
      %617 = vmatpush1.bf16.msra.mxu0 0
      %618 = vmatprep.subr.bf16.mxu0 0
      %619 = vmatpush1.bf16.msra.mxu0 0
      %620 = vmatprep.subr.bf16.mxu0 0
      %621 = vmatpush1.bf16.msra.mxu0 0
      %622 = vmatprep.subr.bf16.mxu0 0
      %623 = vmatpush1.bf16.msra.mxu0 0
      %624 = vmatprep.subr.bf16.mxu0 0
      %625 = vmatpush1.bf16.msra.mxu0 0
      %626 = vmatprep.subr.bf16.mxu0 0
      %627 = vmatpush1.bf16.msra.mxu0 0
      %628 = vmatprep.subr.bf16.mxu0 0
      %629 = vmatpush1.bf16.msra.mxu0 0
      %630 = vmatprep.subr.bf16.mxu0 0
      %631 = vmatpush1.bf16.msra.mxu0 0
      %632 = vmatprep.subr.bf16.mxu0 0
      %633 = vmatpush1.bf16.msra.mxu0 0
      %634 = vmatprep.subr.bf16.mxu0 0
      %635 = vmatpush1.bf16.msra.mxu0 0
      %636 = vmatprep.subr.bf16.mxu0 0
      %637 = vmatpush1.bf16.msra.mxu0 0
      %638 = vmatprep.subr.bf16.mxu0 0
      %639 = vmatpush1.bf16.msra.mxu0 0
      %640 = vmatprep.mubr.bf16.mxu0 0
      %641 = vmatmul.mubr.bf16.gmra.mrb[0].mxu0 %v606
      %v642 = vpop.f32.mrb[0].mxu0
      %v643 = vadd.f32 0.0, %v642
      %v644 = vpop.f32.mrb[0].mxu0
      %v645 = vpop.f32.mrb[0].mxu0
      %v646 = vpop.f32.mrb[0].mxu0
      %647 = vdwg.mxu0
      %v648 = vpack.c.bf16 %v643, %v643
      %v649 = vld [vmem:[%s4] sm:$0xff]
      %v650 = vld [vmem:[%s4 + $0x8] sm:$0xff]
      %v651 = vld [vmem:[%s4 + $0x10] sm:$0xff]
      %v652 = vld [vmem:[%s4 + $0x18] sm:$0xff]
      %v653 = vld [vmem:[%s4 + $0x20] sm:$0xff]
      %v654 = vld [vmem:[%s4 + $0x28] sm:$0xff]
      %v655 = vld [vmem:[%s4 + $0x30] sm:$0xff]
      %v656 = vld [vmem:[%s4 + $0x38] sm:$0xff]
      %v657 = vld [vmem:[%s4 + $0x40] sm:$0xff]
      %v658 = vld [vmem:[%s4 + $0x48] sm:$0xff]
      %v659 = vld [vmem:[%s4 + $0x50] sm:$0xff]
      %v660 = vld [vmem:[%s4 + $0x58] sm:$0xff]
      %v661 = vld [vmem:[%s4 + $0x60] sm:$0xff]
      %v662 = vld [vmem:[%s4 + $0x68] sm:$0xff]
      %v663 = vld [vmem:[%s4 + $0x70] sm:$0xff]
      %v664 = vld [vmem:[%s4 + $0x78] sm:$0xff]
      %v665 = vpack.c.bf16 %v650, %v649
      %v666 = vpack.c.bf16 %v652, %v651
      %v667 = vpack.c.bf16 %v654, %v653
      %v668 = vpack.c.bf16 %v656, %v655
      %v669 = vpack.c.bf16 %v658, %v657
      %v670 = vpack.c.bf16 %v660, %v659
      %v671 = vpack.c.bf16 %v662, %v661
      %v672 = vpack.c.bf16 %v664, %v663
      %673 = vmatprep.subr.bf16.mxu0 0
      %674 = vmatpush1.bf16.msra.mxu0 %v665
      %675 = vmatprep.subr.bf16.mxu0 0
      %676 = vmatpush1.bf16.msra.mxu0 %v666
      %677 = vmatprep.subr.bf16.mxu0 0
      %678 = vmatpush1.bf16.msra.mxu0 %v667
      %679 = vmatprep.subr.bf16.mxu0 0
      %680 = vmatpush1.bf16.msra.mxu0 %v668
      %681 = vmatprep.subr.bf16.mxu0 0
      %682 = vmatpush1.bf16.msra.mxu0 %v669
      %683 = vmatprep.subr.bf16.mxu0 0
      %684 = vmatpush1.bf16.msra.mxu0 %v670
      %685 = vmatprep.subr.bf16.mxu0 0
      %686 = vmatpush1.bf16.msra.mxu0 %v671
      %687 = vmatprep.subr.bf16.mxu0 0
      %688 = vmatpush1.bf16.msra.mxu0 %v672
      %689 = vmatprep.subr.bf16.mxu0 0
      %690 = vmatpush1.bf16.msra.mxu0 0
      %691 = vmatprep.subr.bf16.mxu0 0
      %692 = vmatpush1.bf16.msra.mxu0 0
      %693 = vmatprep.subr.bf16.mxu0 0
      %694 = vmatpush1.bf16.msra.mxu0 0
      %695 = vmatprep.subr.bf16.mxu0 0
      %696 = vmatpush1.bf16.msra.mxu0 0
      %697 = vmatprep.subr.bf16.mxu0 0
      %698 = vmatpush1.bf16.msra.mxu0 0
      %699 = vmatprep.subr.bf16.mxu0 0
      %700 = vmatpush1.bf16.msra.mxu0 0
      %701 = vmatprep.subr.bf16.mxu0 0
      %702 = vmatpush1.bf16.msra.mxu0 0
      %703 = vmatprep.subr.bf16.mxu0 0
      %704 = vmatpush1.bf16.msra.mxu0 0
      %705 = vmatprep.mubr.bf16.mxu0 0
      %706 = vmatmul.mubr.bf16.gmra.mrb[0].mxu0 %v648
      %v707 = vpop.f32.mrb[0].mxu0
      %v708 = vadd.f32 0.0, %v707
      %v709 = vpop.f32.mrb[0].mxu0
      %v710 = vpop.f32.mrb[0].mxu0
      %v711 = vpop.f32.mrb[0].mxu0
      %712 = vdwg.mxu0
      %713 = vst [vmem:[%s381] sm:$0x3] %v708
      %v714 = vpack.c.bf16 %v708, %v708
      %v715 = vld [vmem:[%s5] sm:$0xff]
      %v716 = vld [vmem:[%s5 + $0x8] sm:$0xff]
      %v717 = vld [vmem:[%s5 + $0x10] sm:$0xff]
      %v718 = vld [vmem:[%s5 + $0x18] sm:$0xff]
      %v719 = vld [vmem:[%s5 + $0x20] sm:$0xff]
      %v720 = vld [vmem:[%s5 + $0x28] sm:$0xff]
      %v721 = vld [vmem:[%s5 + $0x30] sm:$0xff]
      %v722 = vld [vmem:[%s5 + $0x38] sm:$0xff]
      %v723 = vld [vmem:[%s5 + $0x40] sm:$0xff]
      %v724 = vld [vmem:[%s5 + $0x48] sm:$0xff]
      %v725 = vld [vmem:[%s5 + $0x50] sm:$0xff]
      %v726 = vld [vmem:[%s5 + $0x58] sm:$0xff]
      %v727 = vld [vmem:[%s5 + $0x60] sm:$0xff]
      %v728 = vld [vmem:[%s5 + $0x68] sm:$0xff]
      %v729 = vld [vmem:[%s5 + $0x70] sm:$0xff]
      %v730 = vld [vmem:[%s5 + $0x78] sm:$0xff]
      %v731 = vld [vmem:[%s5 + $0x80] sm:$0xff]
      %v732 = vld [vmem:[%s5 + $0x88] sm:$0xff]
      %v733 = vld [vmem:[%s5 + $0x90] sm:$0xff]
      %v734 = vld [vmem:[%s5 + $0x98] sm:$0xff]
      %v735 = vld [vmem:[%s5 + $0xa0] sm:$0xff]
      %v736 = vld [vmem:[%s5 + $0xa8] sm:$0xff]
      %v737 = vld [vmem:[%s5 + $0xb0] sm:$0xff]
      %v738 = vld [vmem:[%s5 + $0xb8] sm:$0xff]
      %v739 = vld [vmem:[%s5 + $0xc0] sm:$0xff]
      %v740 = vld [vmem:[%s5 + $0xc8] sm:$0xff]
      %v741 = vld [vmem:[%s5 + $0xd0] sm:$0xff]
      %v742 = vld [vmem:[%s5 + $0xd8] sm:$0xff]
      %v743 = vld [vmem:[%s5 + $0xe0] sm:$0xff]
      %v744 = vld [vmem:[%s5 + $0xe8] sm:$0xff]
      %v745 = vld [vmem:[%s5 + $0xf0] sm:$0xff]
      %v746 = vld [vmem:[%s5 + $0xf8] sm:$0xff]
      %v747 = vpack.c.bf16 %v717, %v715
      %v748 = vpack.c.bf16 %v718, %v716
      %v749 = vpack.c.bf16 %v721, %v719
      %v750 = vpack.c.bf16 %v722, %v720
      %v751 = vpack.c.bf16 %v725, %v723
      %v752 = vpack.c.bf16 %v726, %v724
      %v753 = vpack.c.bf16 %v729, %v727
      %v754 = vpack.c.bf16 %v730, %v728
      %v755 = vpack.c.bf16 %v733, %v731
      %v756 = vpack.c.bf16 %v734, %v732
      %v757 = vpack.c.bf16 %v737, %v735
      %v758 = vpack.c.bf16 %v738, %v736
      %v759 = vpack.c.bf16 %v741, %v739
      %v760 = vpack.c.bf16 %v742, %v740
      %v761 = vpack.c.bf16 %v745, %v743
      %v762 = vpack.c.bf16 %v746, %v744
      %v763 = vld [vmem:[%s6] sm:$0x3]
      %v765 = vlaneseq
      %v766 = vshrl.u32 %v765, 7
      %v767 = vsub.s32 0, %v766
      %v768 = vrot.slane %v763, %v767
      %v769 = vlaneseq
      %v770 = vshrl.u32 %v769, 7
      %v771 = vsub.s32 1, %v770
      %v772 = vrot.slane %v763, %v771
      %775 = vmatprep.subr.bf16.mxu0 %v748
      %776 = vmatpush1.bf16.msra.mxu0 %v747
      %777 = vmatprep.subr.bf16.mxu0 %v750
      %778 = vmatpush1.bf16.msra.mxu0 %v749
      %779 = vmatprep.subr.bf16.mxu0 %v752
      %780 = vmatpush1.bf16.msra.mxu0 %v751
      %781 = vmatprep.subr.bf16.mxu0 %v754
      %782 = vmatpush1.bf16.msra.mxu0 %v753
      %783 = vmatprep.subr.bf16.mxu0 %v756
      %784 = vmatpush1.bf16.msra.mxu0 %v755
      %785 = vmatprep.subr.bf16.mxu0 %v758
      %786 = vmatpush1.bf16.msra.mxu0 %v757
      %787 = vmatprep.subr.bf16.mxu0 %v760
      %788 = vmatpush1.bf16.msra.mxu0 %v759
      %789 = vmatprep.subr.bf16.mxu0 %v762
      %790 = vmatpush1.bf16.msra.mxu0 %v761
      %791 = vmatprep.subr.bf16.mxu0 0
      %792 = vmatpush1.bf16.msra.mxu0 0
      %793 = vmatprep.subr.bf16.mxu0 0
      %794 = vmatpush1.bf16.msra.mxu0 0
      %795 = vmatprep.subr.bf16.mxu0 0
      %796 = vmatpush1.bf16.msra.mxu0 0
      %797 = vmatprep.subr.bf16.mxu0 0
      %798 = vmatpush1.bf16.msra.mxu0 0
      %799 = vmatprep.subr.bf16.mxu0 0
      %800 = vmatpush1.bf16.msra.mxu0 0
      %801 = vmatprep.subr.bf16.mxu0 0
      %802 = vmatpush1.bf16.msra.mxu0 0
      %803 = vmatprep.subr.bf16.mxu0 0
      %804 = vmatpush1.bf16.msra.mxu0 0
      %805 = vmatprep.subr.bf16.mxu0 0
      %806 = vmatpush1.bf16.msra.mxu0 0
      %807 = vmatprep.mubr.bf16.mxu0 0
      %808 = vmatmul.mubr.bf16.gmra.mrb[0].mxu0 %v714
      %v809 = vpop.f32.mrb[0].mxu0
      %v810 = vadd.f32 %v768, %v809
      %v811 = vpop.f32.mrb[0].mxu0
      %v812 = vadd.f32 %v772, %v811
      %v813 = vpop.f32.mrb[0].mxu0
      %v814 = vpop.f32.mrb[0].mxu0
      %815 = vdwg.mxu0
      %v816 = vmax.f32 %v810, 0.0
      %v817 = vmax.f32 %v812, 0.0
      %v818 = vpack.c.bf16 %v816, %v816
      %v819 = vpack.c.bf16 %v817, %v817
      %v820 = vld [vmem:[%s7] sm:$0xff]
      %v821 = vld [vmem:[%s7 + $0x8] sm:$0xff]
      %v822 = vld [vmem:[%s7 + $0x10] sm:$0xff]
      %v823 = vld [vmem:[%s7 + $0x18] sm:$0xff]
      %v824 = vld [vmem:[%s7 + $0x20] sm:$0xff]
      %v825 = vld [vmem:[%s7 + $0x28] sm:$0xff]
      %v826 = vld [vmem:[%s7 + $0x30] sm:$0xff]
      %v827 = vld [vmem:[%s7 + $0x38] sm:$0xff]
      %v828 = vld [vmem:[%s7 + $0x40] sm:$0xff]
      %v829 = vld [vmem:[%s7 + $0x48] sm:$0xff]
      %v830 = vld [vmem:[%s7 + $0x50] sm:$0xff]
      %v831 = vld [vmem:[%s7 + $0x58] sm:$0xff]
      %v832 = vld [vmem:[%s7 + $0x60] sm:$0xff]
      %v833 = vld [vmem:[%s7 + $0x68] sm:$0xff]
      %v834 = vld [vmem:[%s7 + $0x70] sm:$0xff]
      %v835 = vld [vmem:[%s7 + $0x78] sm:$0xff]
      %v836 = vld [vmem:[%s7 + $0x80] sm:$0xff]
      %v837 = vld [vmem:[%s7 + $0x88] sm:$0xff]
      %v838 = vld [vmem:[%s7 + $0x90] sm:$0xff]
      %v839 = vld [vmem:[%s7 + $0x98] sm:$0xff]
      %v840 = vld [vmem:[%s7 + $0xa0] sm:$0xff]
      %v841 = vld [vmem:[%s7 + $0xa8] sm:$0xff]
      %v842 = vld [vmem:[%s7 + $0xb0] sm:$0xff]
      %v843 = vld [vmem:[%s7 + $0xb8] sm:$0xff]
      %v844 = vld [vmem:[%s7 + $0xc0] sm:$0xff]
      %v845 = vld [vmem:[%s7 + $0xc8] sm:$0xff]
      %v846 = vld [vmem:[%s7 + $0xd0] sm:$0xff]
      %v847 = vld [vmem:[%s7 + $0xd8] sm:$0xff]
      %v848 = vld [vmem:[%s7 + $0xe0] sm:$0xff]
      %v849 = vld [vmem:[%s7 + $0xe8] sm:$0xff]
      %v850 = vld [vmem:[%s7 + $0xf0] sm:$0xff]
      %v851 = vld [vmem:[%s7 + $0xf8] sm:$0xff]
      %v852 = vpack.c.bf16 %v821, %v820
      %v853 = vpack.c.bf16 %v823, %v822
      %v854 = vpack.c.bf16 %v825, %v824
      %v855 = vpack.c.bf16 %v827, %v826
      %v856 = vpack.c.bf16 %v829, %v828
      %v857 = vpack.c.bf16 %v831, %v830
      %v858 = vpack.c.bf16 %v833, %v832
      %v859 = vpack.c.bf16 %v835, %v834
      %v860 = vpack.c.bf16 %v837, %v836
      %v861 = vpack.c.bf16 %v839, %v838
      %v862 = vpack.c.bf16 %v841, %v840
      %v863 = vpack.c.bf16 %v843, %v842
      %v864 = vpack.c.bf16 %v845, %v844
      %v865 = vpack.c.bf16 %v847, %v846
      %v866 = vpack.c.bf16 %v849, %v848
      %v867 = vpack.c.bf16 %v851, %v850
      %v868 = vld [vmem:[%s8] sm:$0x1]
      %v870 = vlaneseq
      %v871 = vshrl.u32 %v870, 7
      %v872 = vsub.s32 0, %v871
      %v873 = vrot.slane %v868, %v872
      %875 = vmatprep.subr.bf16.mxu0 0
      %876 = vmatpush1.bf16.msra.mxu0 %v852
      %877 = vmatprep.subr.bf16.mxu0 0
      %878 = vmatpush1.bf16.msra.mxu0 %v853
      %879 = vmatprep.subr.bf16.mxu0 0
      %880 = vmatpush1.bf16.msra.mxu0 %v854
      %881 = vmatprep.subr.bf16.mxu0 0
      %882 = vmatpush1.bf16.msra.mxu0 %v855
      %883 = vmatprep.subr.bf16.mxu0 0
      %884 = vmatpush1.bf16.msra.mxu0 %v856
      %885 = vmatprep.subr.bf16.mxu0 0
      %886 = vmatpush1.bf16.msra.mxu0 %v857
      %887 = vmatprep.subr.bf16.mxu0 0
      %888 = vmatpush1.bf16.msra.mxu0 %v858
      %889 = vmatprep.subr.bf16.mxu0 0
      %890 = vmatpush1.bf16.msra.mxu0 %v859
      %891 = vmatprep.subr.bf16.mxu0 0
      %892 = vmatpush1.bf16.msra.mxu0 %v860
      %893 = vmatprep.subr.bf16.mxu0 0
      %894 = vmatpush1.bf16.msra.mxu0 %v861
      %895 = vmatprep.subr.bf16.mxu0 0
      %896 = vmatpush1.bf16.msra.mxu0 %v862
      %897 = vmatprep.subr.bf16.mxu0 0
      %898 = vmatpush1.bf16.msra.mxu0 %v863
      %899 = vmatprep.subr.bf16.mxu0 0
      %900 = vmatpush1.bf16.msra.mxu0 %v864
      %901 = vmatprep.subr.bf16.mxu0 0
      %902 = vmatpush1.bf16.msra.mxu0 %v865
      %903 = vmatprep.subr.bf16.mxu0 0
      %904 = vmatpush1.bf16.msra.mxu0 %v866
      %905 = vmatprep.subr.bf16.mxu0 0
      %906 = vmatpush1.bf16.msra.mxu0 %v867
      %907 = vmatprep.mubr.bf16.mxu0 %v819
      %908 = vmatmul.mubr.bf16.gmra.mrb[0].mxu0 %v818
      %v909 = vpop.f32.mrb[0].mxu0
      %v910 = vadd.f32 %v873, %v909
      %v911 = vpop.f32.mrb[0].mxu0
      %v912 = vpop.f32.mrb[0].mxu0
      %v913 = vpop.f32.mrb[0].mxu0
      %914 = vdwg.mxu0
      %915 = vst [vmem:[%s385] sm:$0x3] %v910
      %p916 = scmp.lt.s32.totalorder %s22, 1
      %s917 = scalar_select %p916, %s22, 1
      %s918 = smul.addr %s917, 2
      %s919 = scalar_lea.vmem %s9, %s918
      %p920 = scmp.lt.s32.totalorder %s22, 1
      %s921 = scalar_select %p920, %s22, 1
      %s922 = smul.addr %s921, 2
      %s923 = scalar_lea.vmem %s10, %s922
      // Predicated region
      $region57: #{sim_attention_knn_forward.3} parent=55 // pred_check
        %p924 = pneg %p239
      $region58: #{sim_attention_knn_forward.3} parent=55 // pred_check_branch
        %926 = sbr.rel (%p924) target = $region60
      $region59: #{sim_attention_knn_forward.3} parent=55 // pred_region
        _
      $region60: #{sim_attention_knn_forward.3} parent=55 // pred_fallthru
        _
      // Predicated region
      $region61: #{sim_attention_knn_forward.3} parent=55 // pred_check
        %p927 = pneg %p265
      $region62: #{sim_attention_knn_forward.3} parent=55 // pred_check_branch
        %929 = sbr.rel (%p927) target = $region64
      $region63: #{sim_attention_knn_forward.3} parent=55 // pred_region
        _
      $region64: #{sim_attention_knn_forward.3} parent=55 // pred_fallthru
        _
    $region56: #{sim_attention_knn_forward.3} parent=5 // pred_fallthru
      _
    %p930 = scmp.le.s32.totalorder 2, %s17
    // Predicated region
    $region65: #{sim_attention_knn_forward.3} parent=5 // pred_check
      %p931 = pneg %p930
    $region66: #{sim_attention_knn_forward.3} parent=5 // pred_check_branch
      %933 = sbr.rel (%p931) target = $region68
    $region67: #{sim_attention_knn_forward.3} parent=5 // pred_region
      %s934 = ssub.s32 %s17, 2
      // Predicated region
      $region69: #{sim_attention_knn_forward.3} parent=67 // pred_check
        %p935 = pneg %p245
      $region70: #{sim_attention_knn_forward.3} parent=67 // pred_check_branch
        %937 = sbr.rel (%p935) target = $region72
      $region71: #{sim_attention_knn_forward.3} parent=67 // pred_region
        %p938 = scmp.lt.s32.totalorder %s23, 1
        %s939 = scalar_select %p938, %s23, 1
        %s940 = smul.addr %s939, 2
        %s941 = scalar_lea.vmem %s9, %s940
      $region72: #{sim_attention_knn_forward.3} parent=67 // pred_fallthru
        _
      // Predicated region
      $region73: #{sim_attention_knn_forward.3} parent=67 // pred_check
        %p942 = pneg %p271
      $region74: #{sim_attention_knn_forward.3} parent=67 // pred_check_branch
        %944 = sbr.rel (%p942) target = $region76
      $region75: #{sim_attention_knn_forward.3} parent=67 // pred_region
        %p945 = scmp.lt.s32.totalorder %s23, 1
        %s946 = scalar_select %p945, %s23, 1
        %s947 = smul.addr %s946, 2
        %s948 = scalar_lea.vmem %s10, %s947
      $region76: #{sim_attention_knn_forward.3} parent=67 // pred_fallthru
        _
    $region68: #{sim_attention_knn_forward.3} parent=5 // pred_fallthru
      _
  $region6: #{sim_attention_knn_forward.3} parent=0 // loop_footer
    %s21 = sadd.s32 1, %s17
  $region7: #{sim_attention_knn_forward.3} parent=0 // loop_footer_branch
    %16 = sbr.rel target = $region3
  $region8: #{sim_attention_knn_forward.3} parent=0 // loop_exit
    _

// kernel: sim_attention_knn_forward.2
$region0: #{sim_attention_knn_forward.2}
  #allocation0 [shape = 'u32[]', space=smem, size = 0x4, offset = 0x4, fixed_abs, tag = 'smem constant byte address 0x4 - core index']
  #allocation1 [shape = 'u32[144,128]{1,0:T(1,128)}', space=vmem, size = 0x12000, scoped, tag = 'internal scratch']
  %s0 = inlined_call_operand.vmem [shape: f32[40,128,8], index: 0, kind: input, shape index: {}]
  %s1 = inlined_call_operand.vmem [shape: f32[8,128], index: 1, kind: input, shape index: {}]
  %s2 = inlined_call_operand.vmem [shape: f32[1,128], index: 2, kind: input, shape index: {}]
  %s3 = inlined_call_operand.vmem [shape: f32[128,128], index: 3, kind: input, shape index: {}]
  %s4 = inlined_call_operand.vmem [shape: f32[1,128], index: 4, kind: input, shape index: {}]
  %s5 = inlined_call_operand.vmem [shape: f32[40,128], index: 5, kind: output, shape index: {}]
  %s6 = sld [smem:[#allocation0]]
  $region53: #{sim_attention_knn_forward.2} parent=0
    _
  %s8 = ssub.s32 1, %s6
  %s9 = scalar_select 0, %s8, %s6
  loop: start=0, step=1, limit=7
  $region2: #{sim_attention_knn_forward.2} parent=0 // loop_pre_header
    _
  $region3: #{sim_attention_knn_forward.2} parent=0 // loop_header
    %s11 = sphi 0, %s15
    %p12 = scmp.ge.s32.totalorder %s11, 7
    %s21 = sphi 0, %s23
    %s24 = sphi 0, %s21
    %s25 = sphi 0, %s24
    %s41 = sphi 0, %s25
    %s45 = sphi 0, %s45
    %s47 = sphi 0, %s45
    %s48 = sphi 0, %s47
    %s62 = sphi 0, %s48
    %s66 = sphi 0, %s66
    %s68 = sphi 0, %s66
    %s69 = sphi 0, %s68
    %s83 = sphi 0, %s69
    %s87 = sphi 0, %s87
    %s89 = sphi 0, %s87
    %s90 = sphi 0, %s89
    %s104 = sphi 0, %s90
    %s108 = sphi 0, %s108
    %s110 = sphi 0, %s108
    %s111 = sphi 0, %s110
    %s125 = sphi 0, %s111
    %s131 = sphi 0, %s133
    %s134 = sphi 0, %s131
    %s135 = sphi 0, %s134
    %s151 = sphi 0, %s135
  $region4: #{sim_attention_knn_forward.2} parent=0 // loop_header_branch
    %14 = sbr.rel (%p12) target = $region8
  $region5: #{sim_attention_knn_forward.2} parent=0 // loop_body
    %s16 = ssub.s32 %s11, 1
    %s17 = ssub.s32 %s11, 2
    %s18 = sadd.s32 %s11, 1
    %s19 = ssub.s32 %s11, %s18
    %p20 = scmp.eq.s32.totalorder %s19, 0
    %s22 = sadd.s32 %s21, 1
    %s23 = scalar_select %p20, %s21, %s22
    %p26 = pneg %p20
    %p27 = scmp.eq.s32.totalorder %s11, 4
    %p28 = por %p26, %p27
    %p29 = scmp.ne.s32.totalorder %s21, %s24
    %p30 = scmp.eq.s32.totalorder %s11, 0
    %p31 = por %p29, %p30
    %p32 = scmp.ne.s32.totalorder %s21, %s24
    %p33 = scmp.eq.s32.totalorder %s16, 4
    %p34 = por %p32, %p33
    %p35 = scmp.ne.s32.totalorder %s24, %s25
    %p36 = scmp.eq.s32.totalorder %s16, 0
    %p37 = por %p35, %p36
    %p38 = scmp.ne.s32.totalorder %s24, %s25
    %p39 = scmp.eq.s32.totalorder %s17, 4
    %p40 = por %p38, %p39
    %p42 = scmp.ne.s32.totalorder %s25, %s41
    %p43 = scmp.eq.s32.totalorder %s17, 0
    %p44 = por %p42, %p43
    %s46 = sadd.s32 %s45, 1
    %p49 = scmp.eq.s32.totalorder %s11, 4
    %p50 = scmp.ne.s32.totalorder %s45, %s47
    %p51 = scmp.eq.s32.totalorder %s11, 0
    %p52 = por %p50, %p51
    %p53 = scmp.ne.s32.totalorder %s45, %s47
    %p54 = scmp.eq.s32.totalorder %s16, 4
    %p55 = por %p53, %p54
    %p56 = scmp.ne.s32.totalorder %s47, %s48
    %p57 = scmp.eq.s32.totalorder %s16, 0
    %p58 = por %p56, %p57
    %p59 = scmp.ne.s32.totalorder %s47, %s48
    %p60 = scmp.eq.s32.totalorder %s17, 4
    %p61 = por %p59, %p60
    %p63 = scmp.ne.s32.totalorder %s48, %s62
    %p64 = scmp.eq.s32.totalorder %s17, 0
    %p65 = por %p63, %p64
    %s67 = sadd.s32 %s66, 1
    %p70 = scmp.eq.s32.totalorder %s11, 4
    %p71 = scmp.ne.s32.totalorder %s66, %s68
    %p72 = scmp.eq.s32.totalorder %s11, 0
    %p73 = por %p71, %p72
    %p74 = scmp.ne.s32.totalorder %s66, %s68
    %p75 = scmp.eq.s32.totalorder %s16, 4
    %p76 = por %p74, %p75
    %p77 = scmp.ne.s32.totalorder %s68, %s69
    %p78 = scmp.eq.s32.totalorder %s16, 0
    %p79 = por %p77, %p78
    %p80 = scmp.ne.s32.totalorder %s68, %s69
    %p81 = scmp.eq.s32.totalorder %s17, 4
    %p82 = por %p80, %p81
    %p84 = scmp.ne.s32.totalorder %s69, %s83
    %p85 = scmp.eq.s32.totalorder %s17, 0
    %p86 = por %p84, %p85
    %s88 = sadd.s32 %s87, 1
    %p91 = scmp.eq.s32.totalorder %s11, 4
    %p92 = scmp.ne.s32.totalorder %s87, %s89
    %p93 = scmp.eq.s32.totalorder %s11, 0
    %p94 = por %p92, %p93
    %p95 = scmp.ne.s32.totalorder %s87, %s89
    %p96 = scmp.eq.s32.totalorder %s16, 4
    %p97 = por %p95, %p96
    %p98 = scmp.ne.s32.totalorder %s89, %s90
    %p99 = scmp.eq.s32.totalorder %s16, 0
    %p100 = por %p98, %p99
    %p101 = scmp.ne.s32.totalorder %s89, %s90
    %p102 = scmp.eq.s32.totalorder %s17, 4
    %p103 = por %p101, %p102
    %p105 = scmp.ne.s32.totalorder %s90, %s104
    %p106 = scmp.eq.s32.totalorder %s17, 0
    %p107 = por %p105, %p106
    %s109 = sadd.s32 %s108, 1
    %p112 = scmp.eq.s32.totalorder %s11, 4
    %p113 = scmp.ne.s32.totalorder %s108, %s110
    %p114 = scmp.eq.s32.totalorder %s11, 0
    %p115 = por %p113, %p114
    %p116 = scmp.ne.s32.totalorder %s108, %s110
    %p117 = scmp.eq.s32.totalorder %s16, 4
    %p118 = por %p116, %p117
    %p119 = scmp.ne.s32.totalorder %s110, %s111
    %p120 = scmp.eq.s32.totalorder %s16, 0
    %p121 = por %p119, %p120
    %p122 = scmp.ne.s32.totalorder %s110, %s111
    %p123 = scmp.eq.s32.totalorder %s17, 4
    %p124 = por %p122, %p123
    %p126 = scmp.ne.s32.totalorder %s111, %s125
    %p127 = scmp.eq.s32.totalorder %s17, 0
    %p128 = por %p126, %p127
    %s129 = ssub.s32 %s11, %s18
    %p130 = scmp.eq.s32.totalorder %s129, 0
    %s132 = sadd.s32 %s131, 1
    %s133 = scalar_select %p130, %s131, %s132
    %p136 = pneg %p130
    %p137 = scmp.eq.s32.totalorder %s11, 4
    %p138 = por %p136, %p137
    %p139 = scmp.ne.s32.totalorder %s131, %s134
    %p140 = scmp.eq.s32.totalorder %s11, 0
    %p141 = por %p139, %p140
    %p142 = scmp.ne.s32.totalorder %s131, %s134
    %p143 = scmp.eq.s32.totalorder %s16, 4
    %p144 = por %p142, %p143
    %p145 = scmp.ne.s32.totalorder %s134, %s135
    %p146 = scmp.eq.s32.totalorder %s16, 0
    %p147 = por %p145, %p146
    %p148 = scmp.ne.s32.totalorder %s134, %s135
    %p149 = scmp.eq.s32.totalorder %s17, 4
    %p150 = por %p148, %p149
    %p152 = scmp.ne.s32.totalorder %s135, %s151
    %p153 = scmp.eq.s32.totalorder %s17, 0
    %p154 = por %p152, %p153
    %p155 = scmp.le.s32.totalorder 1, %s11
    %p156 = scmp.lt.s32.totalorder %s11, 6
    %p157 = pnand %p155, %p156
    %p158 = pneg %p157
    // Predicated region
    $region9: #{sim_attention_knn_forward.2} parent=5 // pred_check
      _
    $region10: #{sim_attention_knn_forward.2} parent=5 // pred_check_branch
      %160 = sbr.rel (%p157) target = $region12
    $region11: #{sim_attention_knn_forward.2} parent=5 // pred_region
      %s161 = ssub.s32 %s11, 1
      // Predicated region
      $region13: #{sim_attention_knn_forward.2} parent=11 // pred_check
        %p162 = pneg %p58
      $region14: #{sim_attention_knn_forward.2} parent=11 // pred_check_branch
        %164 = sbr.rel (%p162) target = $region16
      $region15: #{sim_attention_knn_forward.2} parent=11 // pred_region
        _
      $region16: #{sim_attention_knn_forward.2} parent=11 // pred_fallthru
        _
      // Predicated region
      $region17: #{sim_attention_knn_forward.2} parent=11 // pred_check
        %p165 = pneg %p79
      $region18: #{sim_attention_knn_forward.2} parent=11 // pred_check_branch
        %167 = sbr.rel (%p165) target = $region20
      $region19: #{sim_attention_knn_forward.2} parent=11 // pred_region
        _
      $region20: #{sim_attention_knn_forward.2} parent=11 // pred_fallthru
        _
      // Predicated region
      $region21: #{sim_attention_knn_forward.2} parent=11 // pred_check
        %p168 = pneg %p100
      $region22: #{sim_attention_knn_forward.2} parent=11 // pred_check_branch
        %170 = sbr.rel (%p168) target = $region24
      $region23: #{sim_attention_knn_forward.2} parent=11 // pred_region
        _
      $region24: #{sim_attention_knn_forward.2} parent=11 // pred_fallthru
        _
      // Predicated region
      $region25: #{sim_attention_knn_forward.2} parent=11 // pred_check
        %p171 = pneg %p121
      $region26: #{sim_attention_knn_forward.2} parent=11 // pred_check_branch
        %173 = sbr.rel (%p171) target = $region28
      $region27: #{sim_attention_knn_forward.2} parent=11 // pred_region
        _
      $region28: #{sim_attention_knn_forward.2} parent=11 // pred_fallthru
        _
    $region12: #{sim_attention_knn_forward.2} parent=5 // pred_fallthru
      _
    %p174 = scmp.lt.s32.totalorder %s11, 5
    // Predicated region
    $region29: #{sim_attention_knn_forward.2} parent=5 // pred_check
      %p175 = pneg %p174
    $region30: #{sim_attention_knn_forward.2} parent=5 // pred_check_branch
      %177 = sbr.rel (%p175) target = $region32
    $region31: #{sim_attention_knn_forward.2} parent=5 // pred_region
      // Predicated region
      $region33: #{sim_attention_knn_forward.2} parent=31 // pred_check
        %p178 = pneg %p31
      $region34: #{sim_attention_knn_forward.2} parent=31 // pred_check_branch
        %180 = sbr.rel (%p178) target = $region36
      $region35: #{sim_attention_knn_forward.2} parent=31 // pred_region
        %s181 = smul.u32 8, %s11
        %p182 = scmp.lt.s32.totalorder %s181, 39
        %s183 = scalar_select %p182, %s181, 39
        %s184 = smul.addr %s183, 16
        %s185 = smul.addr %s184, 8
        %s186 = scalar_lea.vmem %s0, %s185
        %s187 = smul.u32 8, %s11
      $region36: #{sim_attention_knn_forward.2} parent=31 // pred_fallthru
        _
    $region32: #{sim_attention_knn_forward.2} parent=5 // pred_fallthru
      _
    %p188 = scmp.le.s32.totalorder 1, %s11
    %p189 = scmp.lt.s32.totalorder %s11, 6
    %p190 = pnand %p188, %p189
    %p191 = pneg %p190
    // Predicated region
    $region37: #{sim_attention_knn_forward.2} parent=5 // pred_check
      _
    $region38: #{sim_attention_knn_forward.2} parent=5 // pred_check_branch
      %193 = sbr.rel (%p190) target = $region40
    $region39: #{sim_attention_knn_forward.2} parent=5 // pred_region
      %s194 = ssub.s32 %s11, 1
      %s195 = smul.u32 8, %s16
      %p196 = scmp.lt.s32.totalorder %s195, 39
      %s197 = scalar_select %p196, %s195, 39
      %s198 = smul.addr %s197, 16
      %s199 = smul.addr %s198, 8
      %s200 = scalar_lea.vmem %s0, %s199
      %p201 = pneg %p37
      %p202 = pneg %p34
      %p203 = pneg %p58
      %p204 = pneg %p55
      %p205 = pneg %p79
      %p206 = pneg %p76
      %p207 = pneg %p100
      %p208 = pneg %p97
      %p209 = pneg %p121
      %p210 = pneg %p118
      %p211 = pneg %p147
      %p212 = pneg %p144
      %p213 = scmp.lt.s32.totalorder %s16, 4
      %s214 = scalar_select %p213, %s16, 4
      %s215 = smul.addr %s214, 8
      %s216 = scalar_lea.vmem %s5, %s215
      %s217 = smul.u32 8, %s16
      %p218 = scmp.lt.s32.totalorder %s217, 39
      %s219 = scalar_select %p218, %s217, 39
      %s220 = smul.addr %s219, 16
      %s221 = smul.addr %s220, 8
      %s222 = scalar_lea.vmem %s0, %s221
      %s223 = smul.u32 8, %s16
      %p224 = scmp.lt.s32.totalorder %s16, 4
      %s225 = scalar_select %p224, %s16, 4
      %s226 = smul.addr %s225, 8
      %s227 = scalar_lea.vmem %s5, %s226
      %v229 = vld [vmem:[%s222] sm:$0xff]
      %v230 = vld [vmem:[%s222 + $0x8] sm:$0xff]
      %v231 = vld [vmem:[%s222 + $0x10] sm:$0xff]
      %v232 = vld [vmem:[%s222 + $0x18] sm:$0xff]
      %v233 = vld [vmem:[%s222 + $0x20] sm:$0xff]
      %v234 = vld [vmem:[%s222 + $0x28] sm:$0xff]
      %v235 = vld [vmem:[%s222 + $0x30] sm:$0xff]
      %v236 = vld [vmem:[%s222 + $0x38] sm:$0xff]
      %v237 = vld [vmem:[%s222 + $0x40] sm:$0xff]
      %v238 = vld [vmem:[%s222 + $0x48] sm:$0xff]
      %v239 = vld [vmem:[%s222 + $0x50] sm:$0xff]
      %v240 = vld [vmem:[%s222 + $0x58] sm:$0xff]
      %v241 = vld [vmem:[%s222 + $0x60] sm:$0xff]
      %v242 = vld [vmem:[%s222 + $0x68] sm:$0xff]
      %v243 = vld [vmem:[%s222 + $0x70] sm:$0xff]
      %v244 = vld [vmem:[%s222 + $0x78] sm:$0xff]
      %v245 = vld [vmem:[%s222 + $0x80] sm:$0xff]
      %v246 = vld [vmem:[%s222 + $0x88] sm:$0xff]
      %v247 = vld [vmem:[%s222 + $0x90] sm:$0xff]
      %v248 = vld [vmem:[%s222 + $0x98] sm:$0xff]
      %v249 = vld [vmem:[%s222 + $0xa0] sm:$0xff]
      %v250 = vld [vmem:[%s222 + $0xa8] sm:$0xff]
      %v251 = vld [vmem:[%s222 + $0xb0] sm:$0xff]
      %v252 = vld [vmem:[%s222 + $0xb8] sm:$0xff]
      %v253 = vld [vmem:[%s222 + $0xc0] sm:$0xff]
      %v254 = vld [vmem:[%s222 + $0xc8] sm:$0xff]
      %v255 = vld [vmem:[%s222 + $0xd0] sm:$0xff]
      %v256 = vld [vmem:[%s222 + $0xd8] sm:$0xff]
      %v257 = vld [vmem:[%s222 + $0xe0] sm:$0xff]
      %v258 = vld [vmem:[%s222 + $0xe8] sm:$0xff]
      %v259 = vld [vmem:[%s222 + $0xf0] sm:$0xff]
      %v260 = vld [vmem:[%s222 + $0xf8] sm:$0xff]
      %v261 = vld [vmem:[%s222 + $0x100] sm:$0xff]
      %v262 = vld [vmem:[%s222 + $0x108] sm:$0xff]
      %v263 = vld [vmem:[%s222 + $0x110] sm:$0xff]
      %v264 = vld [vmem:[%s222 + $0x118] sm:$0xff]
      %v265 = vld [vmem:[%s222 + $0x120] sm:$0xff]
      %v266 = vld [vmem:[%s222 + $0x128] sm:$0xff]
      %v267 = vld [vmem:[%s222 + $0x130] sm:$0xff]
      %v268 = vld [vmem:[%s222 + $0x138] sm:$0xff]
      %v269 = vld [vmem:[%s222 + $0x140] sm:$0xff]
      %v270 = vld [vmem:[%s222 + $0x148] sm:$0xff]
      %v271 = vld [vmem:[%s222 + $0x150] sm:$0xff]
      %v272 = vld [vmem:[%s222 + $0x158] sm:$0xff]
      %v273 = vld [vmem:[%s222 + $0x160] sm:$0xff]
      %v274 = vld [vmem:[%s222 + $0x168] sm:$0xff]
      %v275 = vld [vmem:[%s222 + $0x170] sm:$0xff]
      %v276 = vld [vmem:[%s222 + $0x178] sm:$0xff]
      %v277 = vld [vmem:[%s222 + $0x180] sm:$0xff]
      %v278 = vld [vmem:[%s222 + $0x188] sm:$0xff]
      %v279 = vld [vmem:[%s222 + $0x190] sm:$0xff]
      %v280 = vld [vmem:[%s222 + $0x198] sm:$0xff]
      %v281 = vld [vmem:[%s222 + $0x1a0] sm:$0xff]
      %v282 = vld [vmem:[%s222 + $0x1a8] sm:$0xff]
      %v283 = vld [vmem:[%s222 + $0x1b0] sm:$0xff]
      %v284 = vld [vmem:[%s222 + $0x1b8] sm:$0xff]
      %v285 = vld [vmem:[%s222 + $0x1c0] sm:$0xff]
      %v286 = vld [vmem:[%s222 + $0x1c8] sm:$0xff]
      %v287 = vld [vmem:[%s222 + $0x1d0] sm:$0xff]
      %v288 = vld [vmem:[%s222 + $0x1d8] sm:$0xff]
      %v289 = vld [vmem:[%s222 + $0x1e0] sm:$0xff]
      %v290 = vld [vmem:[%s222 + $0x1e8] sm:$0xff]
      %v291 = vld [vmem:[%s222 + $0x1f0] sm:$0xff]
      %v292 = vld [vmem:[%s222 + $0x1f8] sm:$0xff]
      %v293 = vld [vmem:[%s222 + $0x200] sm:$0xff]
      %v294 = vld [vmem:[%s222 + $0x208] sm:$0xff]
      %v295 = vld [vmem:[%s222 + $0x210] sm:$0xff]
      %v296 = vld [vmem:[%s222 + $0x218] sm:$0xff]
      %v297 = vld [vmem:[%s222 + $0x220] sm:$0xff]
      %v298 = vld [vmem:[%s222 + $0x228] sm:$0xff]
      %v299 = vld [vmem:[%s222 + $0x230] sm:$0xff]
      %v300 = vld [vmem:[%s222 + $0x238] sm:$0xff]
      %v301 = vld [vmem:[%s222 + $0x240] sm:$0xff]
      %v302 = vld [vmem:[%s222 + $0x248] sm:$0xff]
      %v303 = vld [vmem:[%s222 + $0x250] sm:$0xff]
      %v304 = vld [vmem:[%s222 + $0x258] sm:$0xff]
      %v305 = vld [vmem:[%s222 + $0x260] sm:$0xff]
      %v306 = vld [vmem:[%s222 + $0x268] sm:$0xff]
      %v307 = vld [vmem:[%s222 + $0x270] sm:$0xff]
      %v308 = vld [vmem:[%s222 + $0x278] sm:$0xff]
      %v309 = vld [vmem:[%s222 + $0x280] sm:$0xff]
      %v310 = vld [vmem:[%s222 + $0x288] sm:$0xff]
      %v311 = vld [vmem:[%s222 + $0x290] sm:$0xff]
      %v312 = vld [vmem:[%s222 + $0x298] sm:$0xff]
      %v313 = vld [vmem:[%s222 + $0x2a0] sm:$0xff]
      %v314 = vld [vmem:[%s222 + $0x2a8] sm:$0xff]
      %v315 = vld [vmem:[%s222 + $0x2b0] sm:$0xff]
      %v316 = vld [vmem:[%s222 + $0x2b8] sm:$0xff]
      %v317 = vld [vmem:[%s222 + $0x2c0] sm:$0xff]
      %v318 = vld [vmem:[%s222 + $0x2c8] sm:$0xff]
      %v319 = vld [vmem:[%s222 + $0x2d0] sm:$0xff]
      %v320 = vld [vmem:[%s222 + $0x2d8] sm:$0xff]
      %v321 = vld [vmem:[%s222 + $0x2e0] sm:$0xff]
      %v322 = vld [vmem:[%s222 + $0x2e8] sm:$0xff]
      %v323 = vld [vmem:[%s222 + $0x2f0] sm:$0xff]
      %v324 = vld [vmem:[%s222 + $0x2f8] sm:$0xff]
      %v325 = vld [vmem:[%s222 + $0x300] sm:$0xff]
      %v326 = vld [vmem:[%s222 + $0x308] sm:$0xff]
      %v327 = vld [vmem:[%s222 + $0x310] sm:$0xff]
      %v328 = vld [vmem:[%s222 + $0x318] sm:$0xff]
      %v329 = vld [vmem:[%s222 + $0x320] sm:$0xff]
      %v330 = vld [vmem:[%s222 + $0x328] sm:$0xff]
      %v331 = vld [vmem:[%s222 + $0x330] sm:$0xff]
      %v332 = vld [vmem:[%s222 + $0x338] sm:$0xff]
      %v333 = vld [vmem:[%s222 + $0x340] sm:$0xff]
      %v334 = vld [vmem:[%s222 + $0x348] sm:$0xff]
      %v335 = vld [vmem:[%s222 + $0x350] sm:$0xff]
      %v336 = vld [vmem:[%s222 + $0x358] sm:$0xff]
      %v337 = vld [vmem:[%s222 + $0x360] sm:$0xff]
      %v338 = vld [vmem:[%s222 + $0x368] sm:$0xff]
      %v339 = vld [vmem:[%s222 + $0x370] sm:$0xff]
      %v340 = vld [vmem:[%s222 + $0x378] sm:$0xff]
      %v341 = vld [vmem:[%s222 + $0x380] sm:$0xff]
      %v342 = vld [vmem:[%s222 + $0x388] sm:$0xff]
      %v343 = vld [vmem:[%s222 + $0x390] sm:$0xff]
      %v344 = vld [vmem:[%s222 + $0x398] sm:$0xff]
      %v345 = vld [vmem:[%s222 + $0x3a0] sm:$0xff]
      %v346 = vld [vmem:[%s222 + $0x3a8] sm:$0xff]
      %v347 = vld [vmem:[%s222 + $0x3b0] sm:$0xff]
      %v348 = vld [vmem:[%s222 + $0x3b8] sm:$0xff]
      %v349 = vld [vmem:[%s222 + $0x3c0] sm:$0xff]
      %v350 = vld [vmem:[%s222 + $0x3c8] sm:$0xff]
      %v351 = vld [vmem:[%s222 + $0x3d0] sm:$0xff]
      %v352 = vld [vmem:[%s222 + $0x3d8] sm:$0xff]
      %v353 = vld [vmem:[%s222 + $0x3e0] sm:$0xff]
      %v354 = vld [vmem:[%s222 + $0x3e8] sm:$0xff]
      %v355 = vld [vmem:[%s222 + $0x3f0] sm:$0xff]
      %v356 = vld [vmem:[%s222 + $0x3f8] sm:$0xff]
      %v357 = vpack.c.bf16 %v230, %v229
      %v358 = vpack.c.bf16 %v232, %v231
      %v359 = vpack.c.bf16 %v234, %v233
      %v360 = vpack.c.bf16 %v236, %v235
      %v361 = vpack.c.bf16 %v238, %v237
      %v362 = vpack.c.bf16 %v240, %v239
      %v363 = vpack.c.bf16 %v242, %v241
      %v364 = vpack.c.bf16 %v244, %v243
      %v365 = vpack.c.bf16 %v246, %v245
      %v366 = vpack.c.bf16 %v248, %v247
      %v367 = vpack.c.bf16 %v250, %v249
      %v368 = vpack.c.bf16 %v252, %v251
      %v369 = vpack.c.bf16 %v254, %v253
      %v370 = vpack.c.bf16 %v256, %v255
      %v371 = vpack.c.bf16 %v258, %v257
      %v372 = vpack.c.bf16 %v260, %v259
      %v373 = vpack.c.bf16 %v262, %v261
      %v374 = vpack.c.bf16 %v264, %v263
      %v375 = vpack.c.bf16 %v266, %v265
      %v376 = vpack.c.bf16 %v268, %v267
      %v377 = vpack.c.bf16 %v270, %v269
      %v378 = vpack.c.bf16 %v272, %v271
      %v379 = vpack.c.bf16 %v274, %v273
      %v380 = vpack.c.bf16 %v276, %v275
      %v381 = vpack.c.bf16 %v278, %v277
      %v382 = vpack.c.bf16 %v280, %v279
      %v383 = vpack.c.bf16 %v282, %v281
      %v384 = vpack.c.bf16 %v284, %v283
      %v385 = vpack.c.bf16 %v286, %v285
      %v386 = vpack.c.bf16 %v288, %v287
      %v387 = vpack.c.bf16 %v290, %v289
      %v388 = vpack.c.bf16 %v292, %v291
      %v389 = vpack.c.bf16 %v294, %v293
      %v390 = vpack.c.bf16 %v296, %v295
      %v391 = vpack.c.bf16 %v298, %v297
      %v392 = vpack.c.bf16 %v300, %v299
      %v393 = vpack.c.bf16 %v302, %v301
      %v394 = vpack.c.bf16 %v304, %v303
      %v395 = vpack.c.bf16 %v306, %v305
      %v396 = vpack.c.bf16 %v308, %v307
      %v397 = vpack.c.bf16 %v310, %v309
      %v398 = vpack.c.bf16 %v312, %v311
      %v399 = vpack.c.bf16 %v314, %v313
      %v400 = vpack.c.bf16 %v316, %v315
      %v401 = vpack.c.bf16 %v318, %v317
      %v402 = vpack.c.bf16 %v320, %v319
      %v403 = vpack.c.bf16 %v322, %v321
      %v404 = vpack.c.bf16 %v324, %v323
      %v405 = vpack.c.bf16 %v326, %v325
      %v406 = vpack.c.bf16 %v328, %v327
      %v407 = vpack.c.bf16 %v330, %v329
      %v408 = vpack.c.bf16 %v332, %v331
      %v409 = vpack.c.bf16 %v334, %v333
      %v410 = vpack.c.bf16 %v336, %v335
      %v411 = vpack.c.bf16 %v338, %v337
      %v412 = vpack.c.bf16 %v340, %v339
      %v413 = vpack.c.bf16 %v342, %v341
      %v414 = vpack.c.bf16 %v344, %v343
      %v415 = vpack.c.bf16 %v346, %v345
      %v416 = vpack.c.bf16 %v348, %v347
      %v417 = vpack.c.bf16 %v350, %v349
      %v418 = vpack.c.bf16 %v352, %v351
      %v419 = vpack.c.bf16 %v354, %v353
      %v420 = vpack.c.bf16 %v356, %v355
      %v421 = vld [vmem:[%s1] sm:$0xff]
      %v422 = vpack.c.bf16 %v421, %v421
      %v423 = vld [vmem:[%s2] sm:$0x1]
      %v425 = vlaneseq
      %v426 = vshrl.u32 %v425, 7
      %v427 = vsub.s32 0, %v426
      %v428 = vrot.slane %v423, %v427
      %vm430 = vcmask 64512
      %v432 = vsel %vm430, %v357, 0
      %v435 = vsel %vm430, %v358, 0
      %v438 = vsel %vm430, %v359, 0
      %v441 = vsel %vm430, %v360, 0
      %v444 = vsel %vm430, %v361, 0
      %v447 = vsel %vm430, %v362, 0
      %v450 = vsel %vm430, %v363, 0
      %v453 = vsel %vm430, %v364, 0
      %v456 = vsel %vm430, %v365, 0
      %v459 = vsel %vm430, %v366, 0
      %v462 = vsel %vm430, %v367, 0
      %v465 = vsel %vm430, %v368, 0
      %v468 = vsel %vm430, %v369, 0
      %v471 = vsel %vm430, %v370, 0
      %v474 = vsel %vm430, %v371, 0
      %v477 = vsel %vm430, %v372, 0
      %v480 = vsel %vm430, %v373, 0
      %v483 = vsel %vm430, %v374, 0
      %v486 = vsel %vm430, %v375, 0
      %v489 = vsel %vm430, %v376, 0
      %v492 = vsel %vm430, %v377, 0
      %v495 = vsel %vm430, %v378, 0
      %v498 = vsel %vm430, %v379, 0
      %v501 = vsel %vm430, %v380, 0
      %v504 = vsel %vm430, %v381, 0
      %v507 = vsel %vm430, %v382, 0
      %v510 = vsel %vm430, %v383, 0
      %v513 = vsel %vm430, %v384, 0
      %v516 = vsel %vm430, %v385, 0
      %v519 = vsel %vm430, %v386, 0
      %v522 = vsel %vm430, %v387, 0
      %v525 = vsel %vm430, %v388, 0
      %v528 = vsel %vm430, %v389, 0
      %v531 = vsel %vm430, %v390, 0
      %v534 = vsel %vm430, %v391, 0
      %v537 = vsel %vm430, %v392, 0
      %v540 = vsel %vm430, %v393, 0
      %v543 = vsel %vm430, %v394, 0
      %v546 = vsel %vm430, %v395, 0
      %v549 = vsel %vm430, %v396, 0
      %v552 = vsel %vm430, %v397, 0
      %v555 = vsel %vm430, %v398, 0
      %v558 = vsel %vm430, %v399, 0
      %v561 = vsel %vm430, %v400, 0
      %v564 = vsel %vm430, %v401, 0
      %v567 = vsel %vm430, %v402, 0
      %v570 = vsel %vm430, %v403, 0
      %v573 = vsel %vm430, %v404, 0
      %v576 = vsel %vm430, %v405, 0
      %v579 = vsel %vm430, %v406, 0
      %v582 = vsel %vm430, %v407, 0
      %v585 = vsel %vm430, %v408, 0
      %v588 = vsel %vm430, %v409, 0
      %v591 = vsel %vm430, %v410, 0
      %v594 = vsel %vm430, %v411, 0
      %v597 = vsel %vm430, %v412, 0
      %v600 = vsel %vm430, %v413, 0
      %v603 = vsel %vm430, %v414, 0
      %v606 = vsel %vm430, %v415, 0
      %v609 = vsel %vm430, %v416, 0
      %v612 = vsel %vm430, %v417, 0
      %v615 = vsel %vm430, %v418, 0
      %v618 = vsel %vm430, %v419, 0
      %v621 = vsel %vm430, %v420, 0
      %vm623 = vcmask 1043456
      %v625 = vsel %vm623, %v422, 0
      %627 = vmatprep.subr.bf16.mxu0 0
      %628 = vmatpush1.bf16.msra.mxu0 %v625
      %629 = vmatprep.subr.bf16.mxu0 0
      %630 = vmatpush1.bf16.msra.mxu0 0
      %631 = vmatprep.subr.bf16.mxu0 0
      %632 = vmatpush1.bf16.msra.mxu0 0
      %633 = vmatprep.subr.bf16.mxu0 0
      %634 = vmatpush1.bf16.msra.mxu0 0
      %635 = vmatprep.subr.bf16.mxu0 0
      %636 = vmatpush1.bf16.msra.mxu0 0
      %637 = vmatprep.subr.bf16.mxu0 0
      %638 = vmatpush1.bf16.msra.mxu0 0
      %639 = vmatprep.subr.bf16.mxu0 0
      %640 = vmatpush1.bf16.msra.mxu0 0
      %641 = vmatprep.subr.bf16.mxu0 0
      %642 = vmatpush1.bf16.msra.mxu0 0
      %643 = vmatprep.subr.bf16.mxu0 0
      %644 = vmatpush1.bf16.msra.mxu0 0
      %645 = vmatprep.subr.bf16.mxu0 0
      %646 = vmatpush1.bf16.msra.mxu0 0
      %647 = vmatprep.subr.bf16.mxu0 0
      %648 = vmatpush1.bf16.msra.mxu0 0
      %649 = vmatprep.subr.bf16.mxu0 0
      %650 = vmatpush1.bf16.msra.mxu0 0
      %651 = vmatprep.subr.bf16.mxu0 0
      %652 = vmatpush1.bf16.msra.mxu0 0
      %653 = vmatprep.subr.bf16.mxu0 0
      %654 = vmatpush1.bf16.msra.mxu0 0
      %655 = vmatprep.subr.bf16.mxu0 0
      %656 = vmatpush1.bf16.msra.mxu0 0
      %657 = vmatprep.subr.bf16.mxu0 0
      %658 = vmatpush1.bf16.msra.mxu0 0
      %659 = vmatprep.mubr.bf16.mxu0 0
      %660 = vmatmul.mubr.bf16.gmra.mrb[0].mxu0 %v432
      %v661 = vpop.f32.mrb[0].mxu0
      %v662 = vadd.f32 %v428, %v661
      %v663 = vpop.f32.mrb[0].mxu0
      %v664 = vpop.f32.mrb[0].mxu0
      %v665 = vadd.f32 %v428, %v664
      %v666 = vpop.f32.mrb[0].mxu0
      %667 = vmatprep.mubr.bf16.mxu0 0
      %668 = vmatmul.mubr.bf16.gmra.mrb[0].mxu0 %v435
      %v669 = vpop.f32.mrb[0].mxu0
      %v670 = vadd.f32 %v428, %v669
      %v671 = vpop.f32.mrb[0].mxu0
      %v672 = vpop.f32.mrb[0].mxu0
      %v673 = vadd.f32 %v428, %v672
      %v674 = vpop.f32.mrb[0].mxu0
      %675 = vmatprep.mubr.bf16.mxu0 0
      %676 = vmatmul.mubr.bf16.gmra.mrb[0].mxu0 %v438
      %v677 = vpop.f32.mrb[0].mxu0
      %v678 = vadd.f32 %v428, %v677
      %v679 = vpop.f32.mrb[0].mxu0
      %v680 = vpop.f32.mrb[0].mxu0
      %v681 = vadd.f32 %v428, %v680
      %v682 = vpop.f32.mrb[0].mxu0
      %683 = vmatprep.mubr.bf16.mxu0 0
      %684 = vmatmul.mubr.bf16.gmra.mrb[0].mxu0 %v441
      %v685 = vpop.f32.mrb[0].mxu0
      %v686 = vadd.f32 %v428, %v685
      %v687 = vpop.f32.mrb[0].mxu0
      %v688 = vpop.f32.mrb[0].mxu0
      %v689 = vadd.f32 %v428, %v688
      %v690 = vpop.f32.mrb[0].mxu0
      %691 = vmatprep.mubr.bf16.mxu0 0
      %692 = vmatmul.mubr.bf16.gmra.mrb[0].mxu0 %v444
      %v693 = vpop.f32.mrb[0].mxu0
      %v694 = vadd.f32 %v428, %v693
      %v695 = vpop.f32.mrb[0].mxu0
      %v696 = vpop.f32.mrb[0].mxu0
      %v697 = vadd.f32 %v428, %v696
      %v698 = vpop.f32.mrb[0].mxu0
      %699 = vmatprep.mubr.bf16.mxu0 0
      %700 = vmatmul.mubr.bf16.gmra.mrb[0].mxu0 %v447
      %v701 = vpop.f32.mrb[0].mxu0
      %v702 = vadd.f32 %v428, %v701
      %v703 = vpop.f32.mrb[0].mxu0
      %v704 = vpop.f32.mrb[0].mxu0
      %v705 = vadd.f32 %v428, %v704
      %v706 = vpop.f32.mrb[0].mxu0
      %707 = vmatprep.mubr.bf16.mxu0 0
      %708 = vmatmul.mubr.bf16.gmra.mrb[0].mxu0 %v450
      %v709 = vpop.f32.mrb[0].mxu0
      %v710 = vadd.f32 %v428, %v709
      %v711 = vpop.f32.mrb[0].mxu0
      %v712 = vpop.f32.mrb[0].mxu0
      %v713 = vadd.f32 %v428, %v712
      %v714 = vpop.f32.mrb[0].mxu0
      %715 = vmatprep.mubr.bf16.mxu0 0
      %716 = vmatmul.mubr.bf16.gmra.mrb[0].mxu0 %v453
      %v717 = vpop.f32.mrb[0].mxu0
      %v718 = vadd.f32 %v428, %v717
      %v719 = vpop.f32.mrb[0].mxu0
      %v720 = vpop.f32.mrb[0].mxu0
      %v721 = vadd.f32 %v428, %v720
      %v722 = vpop.f32.mrb[0].mxu0
      %723 = vmatprep.mubr.bf16.mxu0 0
      %724 = vmatmul.mubr.bf16.gmra.mrb[0].mxu0 %v456
      %v725 = vpop.f32.mrb[0].mxu0
      %v726 = vadd.f32 %v428, %v725
      %v727 = vpop.f32.mrb[0].mxu0
      %v728 = vpop.f32.mrb[0].mxu0
      %v729 = vadd.f32 %v428, %v728
      %v730 = vpop.f32.mrb[0].mxu0
      %731 = vmatprep.mubr.bf16.mxu0 0
      %732 = vmatmul.mubr.bf16.gmra.mrb[0].mxu0 %v459
      %v733 = vpop.f32.mrb[0].mxu0
      %v734 = vadd.f32 %v428, %v733
      %v735 = vpop.f32.mrb[0].mxu0
      %v736 = vpop.f32.mrb[0].mxu0
      %v737 = vadd.f32 %v428, %v736
      %v738 = vpop.f32.mrb[0].mxu0
      %739 = vmatprep.mubr.bf16.mxu0 0
      %740 = vmatmul.mubr.bf16.gmra.mrb[0].mxu0 %v462
      %v741 = vpop.f32.mrb[0].mxu0
      %v742 = vadd.f32 %v428, %v741
      %v743 = vpop.f32.mrb[0].mxu0
      %v744 = vpop.f32.mrb[0].mxu0
      %v745 = vadd.f32 %v428, %v744
      %v746 = vpop.f32.mrb[0].mxu0
      %747 = vmatprep.mubr.bf16.mxu0 0
      %748 = vmatmul.mubr.bf16.gmra.mrb[0].mxu0 %v465
      %v749 = vpop.f32.mrb[0].mxu0
      %v750 = vadd.f32 %v428, %v749
      %v751 = vpop.f32.mrb[0].mxu0
      %v752 = vpop.f32.mrb[0].mxu0
      %v753 = vadd.f32 %v428, %v752
      %v754 = vpop.f32.mrb[0].mxu0
      %755 = vmatprep.mubr.bf16.mxu0 0
      %756 = vmatmul.mubr.bf16.gmra.mrb[0].mxu0 %v468
      %v757 = vpop.f32.mrb[0].mxu0
      %v758 = vadd.f32 %v428, %v757
      %v759 = vpop.f32.mrb[0].mxu0
      %v760 = vpop.f32.mrb[0].mxu0
      %v761 = vadd.f32 %v428, %v760
      %v762 = vpop.f32.mrb[0].mxu0
      %763 = vmatprep.mubr.bf16.mxu0 0
      %764 = vmatmul.mubr.bf16.gmra.mrb[0].mxu0 %v471
      %v765 = vpop.f32.mrb[0].mxu0
      %v766 = vadd.f32 %v428, %v765
      %v767 = vpop.f32.mrb[0].mxu0
      %v768 = vpop.f32.mrb[0].mxu0
      %v769 = vadd.f32 %v428, %v768
      %v770 = vpop.f32.mrb[0].mxu0
      %771 = vmatprep.mubr.bf16.mxu0 0
      %772 = vmatmul.mubr.bf16.gmra.mrb[0].mxu0 %v474
      %v773 = vpop.f32.mrb[0].mxu0
      %v774 = vadd.f32 %v428, %v773
      %v775 = vpop.f32.mrb[0].mxu0
      %v776 = vpop.f32.mrb[0].mxu0
      %v777 = vadd.f32 %v428, %v776
      %v778 = vpop.f32.mrb[0].mxu0
      %779 = vmatprep.mubr.bf16.mxu0 0
      %780 = vmatmul.mubr.bf16.gmra.mrb[0].mxu0 %v477
      %v781 = vpop.f32.mrb[0].mxu0
      %v782 = vadd.f32 %v428, %v781
      %v783 = vpop.f32.mrb[0].mxu0
      %v784 = vpop.f32.mrb[0].mxu0
      %v785 = vadd.f32 %v428, %v784
      %v786 = vpop.f32.mrb[0].mxu0
      %787 = vmatprep.mubr.bf16.mxu0 0
      %788 = vmatmul.mubr.bf16.gmra.mrb[0].mxu0 %v480
      %v789 = vpop.f32.mrb[0].mxu0
      %v790 = vadd.f32 %v428, %v789
      %v791 = vpop.f32.mrb[0].mxu0
      %v792 = vpop.f32.mrb[0].mxu0
      %v793 = vadd.f32 %v428, %v792
      %v794 = vpop.f32.mrb[0].mxu0
      %795 = vmatprep.mubr.bf16.mxu0 0
      %796 = vmatmul.mubr.bf16.gmra.mrb[0].mxu0 %v483
      %v797 = vpop.f32.mrb[0].mxu0
      %v798 = vadd.f32 %v428, %v797
      %v799 = vpop.f32.mrb[0].mxu0
      %v800 = vpop.f32.mrb[0].mxu0
      %v801 = vadd.f32 %v428, %v800
      %v802 = vpop.f32.mrb[0].mxu0
      %803 = vmatprep.mubr.bf16.mxu0 0
      %804 = vmatmul.mubr.bf16.gmra.mrb[0].mxu0 %v486
      %v805 = vpop.f32.mrb[0].mxu0
      %v806 = vadd.f32 %v428, %v805
      %v807 = vpop.f32.mrb[0].mxu0
      %v808 = vpop.f32.mrb[0].mxu0
      %v809 = vadd.f32 %v428, %v808
      %v810 = vpop.f32.mrb[0].mxu0
      %811 = vmatprep.mubr.bf16.mxu0 0
      %812 = vmatmul.mubr.bf16.gmra.mrb[0].mxu0 %v489
      %v813 = vpop.f32.mrb[0].mxu0
      %v814 = vadd.f32 %v428, %v813
      %v815 = vpop.f32.mrb[0].mxu0
      %v816 = vpop.f32.mrb[0].mxu0
      %v817 = vadd.f32 %v428, %v816
      %v818 = vpop.f32.mrb[0].mxu0
      %819 = vmatprep.mubr.bf16.mxu0 0
      %820 = vmatmul.mubr.bf16.gmra.mrb[0].mxu0 %v492
      %v821 = vpop.f32.mrb[0].mxu0
      %v822 = vadd.f32 %v428, %v821
      %v823 = vpop.f32.mrb[0].mxu0
      %v824 = vpop.f32.mrb[0].mxu0
      %v825 = vadd.f32 %v428, %v824
      %v826 = vpop.f32.mrb[0].mxu0
      %827 = vmatprep.mubr.bf16.mxu0 0
      %828 = vmatmul.mubr.bf16.gmra.mrb[0].mxu0 %v495
      %v829 = vpop.f32.mrb[0].mxu0
      %v830 = vadd.f32 %v428, %v829
      %v831 = vpop.f32.mrb[0].mxu0
      %v832 = vpop.f32.mrb[0].mxu0
      %v833 = vadd.f32 %v428, %v832
      %v834 = vpop.f32.mrb[0].mxu0
      %835 = vmatprep.mubr.bf16.mxu0 0
      %836 = vmatmul.mubr.bf16.gmra.mrb[0].mxu0 %v498
      %v837 = vpop.f32.mrb[0].mxu0
      %v838 = vadd.f32 %v428, %v837
      %v839 = vpop.f32.mrb[0].mxu0
      %v840 = vpop.f32.mrb[0].mxu0
      %v841 = vadd.f32 %v428, %v840
      %v842 = vpop.f32.mrb[0].mxu0
      %843 = vmatprep.mubr.bf16.mxu0 0
      %844 = vmatmul.mubr.bf16.gmra.mrb[0].mxu0 %v501
      %v845 = vpop.f32.mrb[0].mxu0
      %v846 = vadd.f32 %v428, %v845
      %v847 = vpop.f32.mrb[0].mxu0
      %v848 = vpop.f32.mrb[0].mxu0
      %v849 = vadd.f32 %v428, %v848
      %v850 = vpop.f32.mrb[0].mxu0
      %851 = vmatprep.mubr.bf16.mxu0 0
      %852 = vmatmul.mubr.bf16.gmra.mrb[0].mxu0 %v504
      %v853 = vpop.f32.mrb[0].mxu0
      %v854 = vadd.f32 %v428, %v853
      %v855 = vpop.f32.mrb[0].mxu0
      %v856 = vpop.f32.mrb[0].mxu0
      %v857 = vadd.f32 %v428, %v856
      %v858 = vpop.f32.mrb[0].mxu0
      %859 = vmatprep.mubr.bf16.mxu0 0
      %860 = vmatmul.mubr.bf16.gmra.mrb[0].mxu0 %v507
      %v861 = vpop.f32.mrb[0].mxu0
      %v862 = vadd.f32 %v428, %v861
      %v863 = vpop.f32.mrb[0].mxu0
      %v864 = vpop.f32.mrb[0].mxu0
      %v865 = vadd.f32 %v428, %v864
      %v866 = vpop.f32.mrb[0].mxu0
      %867 = vmatprep.mubr.bf16.mxu0 0
      %868 = vmatmul.mubr.bf16.gmra.mrb[0].mxu0 %v510
      %v869 = vpop.f32.mrb[0].mxu0
      %v870 = vadd.f32 %v428, %v869
      %v871 = vpop.f32.mrb[0].mxu0
      %v872 = vpop.f32.mrb[0].mxu0
      %v873 = vadd.f32 %v428, %v872
      %v874 = vpop.f32.mrb[0].mxu0
      %875 = vmatprep.mubr.bf16.mxu0 0
      %876 = vmatmul.mubr.bf16.gmra.mrb[0].mxu0 %v513
      %v877 = vpop.f32.mrb[0].mxu0
      %v878 = vadd.f32 %v428, %v877
      %v879 = vpop.f32.mrb[0].mxu0
      %v880 = vpop.f32.mrb[0].mxu0
      %v881 = vadd.f32 %v428, %v880
      %v882 = vpop.f32.mrb[0].mxu0
      %883 = vmatprep.mubr.bf16.mxu0 0
      %884 = vmatmul.mubr.bf16.gmra.mrb[0].mxu0 %v516
      %v885 = vpop.f32.mrb[0].mxu0
      %v886 = vadd.f32 %v428, %v885
      %v887 = vpop.f32.mrb[0].mxu0
      %v888 = vpop.f32.mrb[0].mxu0
      %v889 = vadd.f32 %v428, %v888
      %v890 = vpop.f32.mrb[0].mxu0
      %891 = vmatprep.mubr.bf16.mxu0 0
      %892 = vmatmul.mubr.bf16.gmra.mrb[0].mxu0 %v519
      %v893 = vpop.f32.mrb[0].mxu0
      %v894 = vadd.f32 %v428, %v893
      %v895 = vpop.f32.mrb[0].mxu0
      %v896 = vpop.f32.mrb[0].mxu0
      %v897 = vadd.f32 %v428, %v896
      %v898 = vpop.f32.mrb[0].mxu0
      %899 = vmatprep.mubr.bf16.mxu0 0
      %900 = vmatmul.mubr.bf16.gmra.mrb[0].mxu0 %v522
      %v901 = vpop.f32.mrb[0].mxu0
      %v902 = vadd.f32 %v428, %v901
      %v903 = vpop.f32.mrb[0].mxu0
      %v904 = vpop.f32.mrb[0].mxu0
      %v905 = vadd.f32 %v428, %v904
      %v906 = vpop.f32.mrb[0].mxu0
      %907 = vmatprep.mubr.bf16.mxu0 0
      %908 = vmatmul.mubr.bf16.gmra.mrb[0].mxu0 %v525
      %v909 = vpop.f32.mrb[0].mxu0
      %v910 = vadd.f32 %v428, %v909
      %v911 = vpop.f32.mrb[0].mxu0
      %v912 = vpop.f32.mrb[0].mxu0
      %v913 = vadd.f32 %v428, %v912
      %v914 = vpop.f32.mrb[0].mxu0
      %915 = vmatprep.mubr.bf16.mxu0 0
      %916 = vmatmul.mubr.bf16.gmra.mrb[0].mxu0 %v528
      %v917 = vpop.f32.mrb[0].mxu0
      %v918 = vadd.f32 %v428, %v917
      %v919 = vpop.f32.mrb[0].mxu0
      %v920 = vpop.f32.mrb[0].mxu0
      %v921 = vadd.f32 %v428, %v920
      %v922 = vpop.f32.mrb[0].mxu0
      %923 = vmatprep.mubr.bf16.mxu0 0
      %924 = vmatmul.mubr.bf16.gmra.mrb[0].mxu0 %v531
      %v925 = vpop.f32.mrb[0].mxu0
      %v926 = vadd.f32 %v428, %v925
      %v927 = vpop.f32.mrb[0].mxu0
      %v928 = vpop.f32.mrb[0].mxu0
      %v929 = vadd.f32 %v428, %v928
      %v930 = vpop.f32.mrb[0].mxu0
      %931 = vmatprep.mubr.bf16.mxu0 0
      %932 = vmatmul.mubr.bf16.gmra.mrb[0].mxu0 %v534
      %v933 = vpop.f32.mrb[0].mxu0
      %v934 = vadd.f32 %v428, %v933
      %v935 = vpop.f32.mrb[0].mxu0
      %v936 = vpop.f32.mrb[0].mxu0
      %v937 = vadd.f32 %v428, %v936
      %v938 = vpop.f32.mrb[0].mxu0
      %939 = vmatprep.mubr.bf16.mxu0 0
      %940 = vmatmul.mubr.bf16.gmra.mrb[0].mxu0 %v537
      %v941 = vpop.f32.mrb[0].mxu0
      %v942 = vadd.f32 %v428, %v941
      %v943 = vpop.f32.mrb[0].mxu0
      %v944 = vpop.f32.mrb[0].mxu0
      %v945 = vadd.f32 %v428, %v944
      %v946 = vpop.f32.mrb[0].mxu0
      %947 = vmatprep.mubr.bf16.mxu0 0
      %948 = vmatmul.mubr.bf16.gmra.mrb[0].mxu0 %v540
      %v949 = vpop.f32.mrb[0].mxu0
      %v950 = vadd.f32 %v428, %v949
      %v951 = vpop.f32.mrb[0].mxu0
      %v952 = vpop.f32.mrb[0].mxu0
      %v953 = vadd.f32 %v428, %v952
      %v954 = vpop.f32.mrb[0].mxu0
      %955 = vmatprep.mubr.bf16.mxu0 0
      %956 = vmatmul.mubr.bf16.gmra.mrb[0].mxu0 %v543
      %v957 = vpop.f32.mrb[0].mxu0
      %v958 = vadd.f32 %v428, %v957
      %v959 = vpop.f32.mrb[0].mxu0
      %v960 = vpop.f32.mrb[0].mxu0
      %v961 = vadd.f32 %v428, %v960
      %v962 = vpop.f32.mrb[0].mxu0
      %963 = vmatprep.mubr.bf16.mxu0 0
      %964 = vmatmul.mubr.bf16.gmra.mrb[0].mxu0 %v546
      %v965 = vpop.f32.mrb[0].mxu0
      %v966 = vadd.f32 %v428, %v965
      %v967 = vpop.f32.mrb[0].mxu0
      %v968 = vpop.f32.mrb[0].mxu0
      %v969 = vadd.f32 %v428, %v968
      %v970 = vpop.f32.mrb[0].mxu0
      %971 = vmatprep.mubr.bf16.mxu0 0
      %972 = vmatmul.mubr.bf16.gmra.mrb[0].mxu0 %v549
      %v973 = vpop.f32.mrb[0].mxu0
      %v974 = vadd.f32 %v428, %v973
      %v975 = vpop.f32.mrb[0].mxu0
      %v976 = vpop.f32.mrb[0].mxu0
      %v977 = vadd.f32 %v428, %v976
      %v978 = vpop.f32.mrb[0].mxu0
      %979 = vmatprep.mubr.bf16.mxu0 0
      %980 = vmatmul.mubr.bf16.gmra.mrb[0].mxu0 %v552
      %v981 = vpop.f32.mrb[0].mxu0
      %v982 = vadd.f32 %v428, %v981
      %v983 = vpop.f32.mrb[0].mxu0
      %v984 = vpop.f32.mrb[0].mxu0
      %v985 = vadd.f32 %v428, %v984
      %v986 = vpop.f32.mrb[0].mxu0
      %987 = vmatprep.mubr.bf16.mxu0 0
      %988 = vmatmul.mubr.bf16.gmra.mrb[0].mxu0 %v555
      %v989 = vpop.f32.mrb[0].mxu0
      %v990 = vadd.f32 %v428, %v989
      %v991 = vpop.f32.mrb[0].mxu0
      %v992 = vpop.f32.mrb[0].mxu0
      %v993 = vadd.f32 %v428, %v992
      %v994 = vpop.f32.mrb[0].mxu0
      %995 = vmatprep.mubr.bf16.mxu0 0
      %996 = vmatmul.mubr.bf16.gmra.mrb[0].mxu0 %v558
      %v997 = vpop.f32.mrb[0].mxu0
      %v998 = vadd.f32 %v428, %v997
      %v999 = vpop.f32.mrb[0].mxu0
      %v1000 = vpop.f32.mrb[0].mxu0
      %v1001 = vadd.f32 %v428, %v1000
      %v1002 = vpop.f32.mrb[0].mxu0
      %1003 = vmatprep.mubr.bf16.mxu0 0
      %1004 = vmatmul.mubr.bf16.gmra.mrb[0].mxu0 %v561
      %v1005 = vpop.f32.mrb[0].mxu0
      %v1006 = vadd.f32 %v428, %v1005
      %v1007 = vpop.f32.mrb[0].mxu0
      %v1008 = vpop.f32.mrb[0].mxu0
      %v1009 = vadd.f32 %v428, %v1008
      %v1010 = vpop.f32.mrb[0].mxu0
      %1011 = vmatprep.mubr.bf16.mxu0 0
      %1012 = vmatmul.mubr.bf16.gmra.mrb[0].mxu0 %v564
      %v1013 = vpop.f32.mrb[0].mxu0
      %v1014 = vadd.f32 %v428, %v1013
      %v1015 = vpop.f32.mrb[0].mxu0
      %v1016 = vpop.f32.mrb[0].mxu0
      %v1017 = vadd.f32 %v428, %v1016
      %v1018 = vpop.f32.mrb[0].mxu0
      %1019 = vmatprep.mubr.bf16.mxu0 0
      %1020 = vmatmul.mubr.bf16.gmra.mrb[0].mxu0 %v567
      %v1021 = vpop.f32.mrb[0].mxu0
      %v1022 = vadd.f32 %v428, %v1021
      %v1023 = vpop.f32.mrb[0].mxu0
      %v1024 = vpop.f32.mrb[0].mxu0
      %v1025 = vadd.f32 %v428, %v1024
      %v1026 = vpop.f32.mrb[0].mxu0
      %1027 = vmatprep.mubr.bf16.mxu0 0
      %1028 = vmatmul.mubr.bf16.gmra.mrb[0].mxu0 %v570
      %v1029 = vpop.f32.mrb[0].mxu0
      %v1030 = vadd.f32 %v428, %v1029
      %v1031 = vpop.f32.mrb[0].mxu0
      %v1032 = vpop.f32.mrb[0].mxu0
      %v1033 = vadd.f32 %v428, %v1032
      %v1034 = vpop.f32.mrb[0].mxu0
      %1035 = vmatprep.mubr.bf16.mxu0 0
      %1036 = vmatmul.mubr.bf16.gmra.mrb[0].mxu0 %v573
      %v1037 = vpop.f32.mrb[0].mxu0
      %v1038 = vadd.f32 %v428, %v1037
      %v1039 = vpop.f32.mrb[0].mxu0
      %v1040 = vpop.f32.mrb[0].mxu0
      %v1041 = vadd.f32 %v428, %v1040
      %v1042 = vpop.f32.mrb[0].mxu0
      %1043 = vmatprep.mubr.bf16.mxu0 0
      %1044 = vmatmul.mubr.bf16.gmra.mrb[0].mxu0 %v576
      %v1045 = vpop.f32.mrb[0].mxu0
      %v1046 = vadd.f32 %v428, %v1045
      %v1047 = vpop.f32.mrb[0].mxu0
      %v1048 = vpop.f32.mrb[0].mxu0
      %v1049 = vadd.f32 %v428, %v1048
      %v1050 = vpop.f32.mrb[0].mxu0
      %1051 = vmatprep.mubr.bf16.mxu0 0
      %1052 = vmatmul.mubr.bf16.gmra.mrb[0].mxu0 %v579
      %v1053 = vpop.f32.mrb[0].mxu0
      %v1054 = vadd.f32 %v428, %v1053
      %v1055 = vpop.f32.mrb[0].mxu0
      %v1056 = vpop.f32.mrb[0].mxu0
      %v1057 = vadd.f32 %v428, %v1056
      %v1058 = vpop.f32.mrb[0].mxu0
      %1059 = vmatprep.mubr.bf16.mxu0 0
      %1060 = vmatmul.mubr.bf16.gmra.mrb[0].mxu0 %v582
      %v1061 = vpop.f32.mrb[0].mxu0
      %v1062 = vadd.f32 %v428, %v1061
      %v1063 = vpop.f32.mrb[0].mxu0
      %v1064 = vpop.f32.mrb[0].mxu0
      %v1065 = vadd.f32 %v428, %v1064
      %v1066 = vpop.f32.mrb[0].mxu0
      %1067 = vmatprep.mubr.bf16.mxu0 0
      %1068 = vmatmul.mubr.bf16.gmra.mrb[0].mxu0 %v585
      %v1069 = vpop.f32.mrb[0].mxu0
      %v1070 = vadd.f32 %v428, %v1069
      %v1071 = vpop.f32.mrb[0].mxu0
      %v1072 = vpop.f32.mrb[0].mxu0
      %v1073 = vadd.f32 %v428, %v1072
      %v1074 = vpop.f32.mrb[0].mxu0
      %1075 = vmatprep.mubr.bf16.mxu0 0
      %1076 = vmatmul.mubr.bf16.gmra.mrb[0].mxu0 %v588
      %v1077 = vpop.f32.mrb[0].mxu0
      %v1078 = vadd.f32 %v428, %v1077
      %v1079 = vpop.f32.mrb[0].mxu0
      %v1080 = vpop.f32.mrb[0].mxu0
      %v1081 = vadd.f32 %v428, %v1080
      %v1082 = vpop.f32.mrb[0].mxu0
      %1083 = vmatprep.mubr.bf16.mxu0 0
      %1084 = vmatmul.mubr.bf16.gmra.mrb[0].mxu0 %v591
      %v1085 = vpop.f32.mrb[0].mxu0
      %v1086 = vadd.f32 %v428, %v1085
      %v1087 = vpop.f32.mrb[0].mxu0
      %v1088 = vpop.f32.mrb[0].mxu0
      %v1089 = vadd.f32 %v428, %v1088
      %v1090 = vpop.f32.mrb[0].mxu0
      %1091 = vmatprep.mubr.bf16.mxu0 0
      %1092 = vmatmul.mubr.bf16.gmra.mrb[0].mxu0 %v594
      %v1093 = vpop.f32.mrb[0].mxu0
      %v1094 = vadd.f32 %v428, %v1093
      %v1095 = vpop.f32.mrb[0].mxu0
      %v1096 = vpop.f32.mrb[0].mxu0
      %v1097 = vadd.f32 %v428, %v1096
      %v1098 = vpop.f32.mrb[0].mxu0
      %1099 = vmatprep.mubr.bf16.mxu0 0
      %1100 = vmatmul.mubr.bf16.gmra.mrb[0].mxu0 %v597
      %v1101 = vpop.f32.mrb[0].mxu0
      %v1102 = vadd.f32 %v428, %v1101
      %v1103 = vpop.f32.mrb[0].mxu0
      %v1104 = vpop.f32.mrb[0].mxu0
      %v1105 = vadd.f32 %v428, %v1104
      %v1106 = vpop.f32.mrb[0].mxu0
      %1107 = vmatprep.mubr.bf16.mxu0 0
      %1108 = vmatmul.mubr.bf16.gmra.mrb[0].mxu0 %v600
      %v1109 = vpop.f32.mrb[0].mxu0
      %v1110 = vadd.f32 %v428, %v1109
      %v1111 = vpop.f32.mrb[0].mxu0
      %v1112 = vpop.f32.mrb[0].mxu0
      %v1113 = vadd.f32 %v428, %v1112
      %v1114 = vpop.f32.mrb[0].mxu0
      %1115 = vmatprep.mubr.bf16.mxu0 0
      %1116 = vmatmul.mubr.bf16.gmra.mrb[0].mxu0 %v603
      %v1117 = vpop.f32.mrb[0].mxu0
      %v1118 = vadd.f32 %v428, %v1117
      %v1119 = vpop.f32.mrb[0].mxu0
      %v1120 = vpop.f32.mrb[0].mxu0
      %v1121 = vadd.f32 %v428, %v1120
      %v1122 = vpop.f32.mrb[0].mxu0
      %1123 = vmatprep.mubr.bf16.mxu0 0
      %1124 = vmatmul.mubr.bf16.gmra.mrb[0].mxu0 %v606
      %v1125 = vpop.f32.mrb[0].mxu0
      %v1126 = vadd.f32 %v428, %v1125
      %v1127 = vpop.f32.mrb[0].mxu0
      %v1128 = vpop.f32.mrb[0].mxu0
      %v1129 = vadd.f32 %v428, %v1128
      %v1130 = vpop.f32.mrb[0].mxu0
      %1131 = vmatprep.mubr.bf16.mxu0 0
      %1132 = vmatmul.mubr.bf16.gmra.mrb[0].mxu0 %v609
      %v1133 = vpop.f32.mrb[0].mxu0
      %v1134 = vadd.f32 %v428, %v1133
      %v1135 = vpop.f32.mrb[0].mxu0
      %v1136 = vpop.f32.mrb[0].mxu0
      %v1137 = vadd.f32 %v428, %v1136
      %v1138 = vpop.f32.mrb[0].mxu0
      %1139 = vmatprep.mubr.bf16.mxu0 0
      %1140 = vmatmul.mubr.bf16.gmra.mrb[0].mxu0 %v612
      %v1141 = vpop.f32.mrb[0].mxu0
      %v1142 = vadd.f32 %v428, %v1141
      %v1143 = vpop.f32.mrb[0].mxu0
      %v1144 = vpop.f32.mrb[0].mxu0
      %v1145 = vadd.f32 %v428, %v1144
      %v1146 = vpop.f32.mrb[0].mxu0
      %1147 = vmatprep.mubr.bf16.mxu0 0
      %1148 = vmatmul.mubr.bf16.gmra.mrb[0].mxu0 %v615
      %v1149 = vpop.f32.mrb[0].mxu0
      %v1150 = vadd.f32 %v428, %v1149
      %v1151 = vpop.f32.mrb[0].mxu0
      %v1152 = vpop.f32.mrb[0].mxu0
      %v1153 = vadd.f32 %v428, %v1152
      %v1154 = vpop.f32.mrb[0].mxu0
      %1155 = vmatprep.mubr.bf16.mxu0 0
      %1156 = vmatmul.mubr.bf16.gmra.mrb[0].mxu0 %v618
      %v1157 = vpop.f32.mrb[0].mxu0
      %v1158 = vadd.f32 %v428, %v1157
      %v1159 = vpop.f32.mrb[0].mxu0
      %v1160 = vpop.f32.mrb[0].mxu0
      %v1161 = vadd.f32 %v428, %v1160
      %v1162 = vpop.f32.mrb[0].mxu0
      %1163 = vmatprep.mubr.bf16.mxu0 0
      %1164 = vmatmul.mubr.bf16.gmra.mrb[0].mxu0 %v621
      %v1165 = vpop.f32.mrb[0].mxu0
      %v1166 = vadd.f32 %v428, %v1165
      %v1167 = vpop.f32.mrb[0].mxu0
      %v1168 = vpop.f32.mrb[0].mxu0
      %v1169 = vadd.f32 %v428, %v1168
      %v1170 = vpop.f32.mrb[0].mxu0
      %1171 = vdwg.mxu0
      %v1172 = vmax.f32 %v662, 0.0
      %v1173 = vmax.f32 %v665, 0.0
      %v1174 = vmax.f32 %v670, 0.0
      %v1175 = vmax.f32 %v673, 0.0
      %v1176 = vmax.f32 %v678, 0.0
      %v1177 = vmax.f32 %v681, 0.0
      %v1178 = vmax.f32 %v686, 0.0
      %v1179 = vmax.f32 %v689, 0.0
      %v1180 = vmax.f32 %v694, 0.0
      %v1181 = vmax.f32 %v697, 0.0
      %v1182 = vmax.f32 %v702, 0.0
      %v1183 = vmax.f32 %v705, 0.0
      %v1184 = vmax.f32 %v710, 0.0
      %v1185 = vmax.f32 %v713, 0.0
      %v1186 = vmax.f32 %v718, 0.0
      %v1187 = vmax.f32 %v721, 0.0
      %v1188 = vmax.f32 %v726, 0.0
      %v1189 = vmax.f32 %v729, 0.0
      %v1190 = vmax.f32 %v734, 0.0
      %v1191 = vmax.f32 %v737, 0.0
      %v1192 = vmax.f32 %v742, 0.0
      %v1193 = vmax.f32 %v745, 0.0
      %v1194 = vmax.f32 %v750, 0.0
      %v1195 = vmax.f32 %v753, 0.0
      %v1196 = vmax.f32 %v758, 0.0
      %v1197 = vmax.f32 %v761, 0.0
      %v1198 = vmax.f32 %v766, 0.0
      %v1199 = vmax.f32 %v769, 0.0
      %v1200 = vmax.f32 %v774, 0.0
      %v1201 = vmax.f32 %v777, 0.0
      %v1202 = vmax.f32 %v782, 0.0
      %v1203 = vmax.f32 %v785, 0.0
      %v1204 = vmax.f32 %v790, 0.0
      %v1205 = vmax.f32 %v793, 0.0
      %v1206 = vmax.f32 %v798, 0.0
      %v1207 = vmax.f32 %v801, 0.0
      %v1208 = vmax.f32 %v806, 0.0
      %v1209 = vmax.f32 %v809, 0.0
      %v1210 = vmax.f32 %v814, 0.0
      %v1211 = vmax.f32 %v817, 0.0
      %v1212 = vmax.f32 %v822, 0.0
      %v1213 = vmax.f32 %v825, 0.0
      %v1214 = vmax.f32 %v830, 0.0
      %v1215 = vmax.f32 %v833, 0.0
      %v1216 = vmax.f32 %v838, 0.0
      %v1217 = vmax.f32 %v841, 0.0
      %v1218 = vmax.f32 %v846, 0.0
      %v1219 = vmax.f32 %v849, 0.0
      %v1220 = vmax.f32 %v854, 0.0
      %v1221 = vmax.f32 %v857, 0.0
      %v1222 = vmax.f32 %v862, 0.0
      %v1223 = vmax.f32 %v865, 0.0
      %v1224 = vmax.f32 %v870, 0.0
      %v1225 = vmax.f32 %v873, 0.0
      %v1226 = vmax.f32 %v878, 0.0
      %v1227 = vmax.f32 %v881, 0.0
      %v1228 = vmax.f32 %v886, 0.0
      %v1229 = vmax.f32 %v889, 0.0
      %v1230 = vmax.f32 %v894, 0.0
      %v1231 = vmax.f32 %v897, 0.0
      %v1232 = vmax.f32 %v902, 0.0
      %v1233 = vmax.f32 %v905, 0.0
      %v1234 = vmax.f32 %v910, 0.0
      %v1235 = vmax.f32 %v913, 0.0
      %v1236 = vmax.f32 %v918, 0.0
      %v1237 = vmax.f32 %v921, 0.0
      %v1238 = vmax.f32 %v926, 0.0
      %v1239 = vmax.f32 %v929, 0.0
      %v1240 = vmax.f32 %v934, 0.0
      %v1241 = vmax.f32 %v937, 0.0
      %v1242 = vmax.f32 %v942, 0.0
      %v1243 = vmax.f32 %v945, 0.0
      %v1244 = vmax.f32 %v950, 0.0
      %v1245 = vmax.f32 %v953, 0.0
      %v1246 = vmax.f32 %v958, 0.0
      %v1247 = vmax.f32 %v961, 0.0
      %v1248 = vmax.f32 %v966, 0.0
      %v1249 = vmax.f32 %v969, 0.0
      %v1250 = vmax.f32 %v974, 0.0
      %v1251 = vmax.f32 %v977, 0.0
      %v1252 = vmax.f32 %v982, 0.0
      %v1253 = vmax.f32 %v985, 0.0
      %v1254 = vmax.f32 %v990, 0.0
      %v1255 = vmax.f32 %v993, 0.0
      %v1256 = vmax.f32 %v998, 0.0
      %v1257 = vmax.f32 %v1001, 0.0
      %v1258 = vmax.f32 %v1006, 0.0
      %v1259 = vmax.f32 %v1009, 0.0
      %v1260 = vmax.f32 %v1014, 0.0
      %v1261 = vmax.f32 %v1017, 0.0
      %v1262 = vmax.f32 %v1022, 0.0
      %v1263 = vmax.f32 %v1025, 0.0
      %v1264 = vmax.f32 %v1030, 0.0
      %v1265 = vmax.f32 %v1033, 0.0
      %v1266 = vmax.f32 %v1038, 0.0
      %v1267 = vmax.f32 %v1041, 0.0
      %v1268 = vmax.f32 %v1046, 0.0
      %v1269 = vmax.f32 %v1049, 0.0
      %v1270 = vmax.f32 %v1054, 0.0
      %v1271 = vmax.f32 %v1057, 0.0
      %v1272 = vmax.f32 %v1062, 0.0
      %v1273 = vmax.f32 %v1065, 0.0
      %v1274 = vmax.f32 %v1070, 0.0
      %v1275 = vmax.f32 %v1073, 0.0
      %v1276 = vmax.f32 %v1078, 0.0
      %v1277 = vmax.f32 %v1081, 0.0
      %v1278 = vmax.f32 %v1086, 0.0
      %v1279 = vmax.f32 %v1089, 0.0
      %v1280 = vmax.f32 %v1094, 0.0
      %v1281 = vmax.f32 %v1097, 0.0
      %v1282 = vmax.f32 %v1102, 0.0
      %v1283 = vmax.f32 %v1105, 0.0
      %v1284 = vmax.f32 %v1110, 0.0
      %v1285 = vmax.f32 %v1113, 0.0
      %v1286 = vmax.f32 %v1118, 0.0
      %v1287 = vmax.f32 %v1121, 0.0
      %v1288 = vmax.f32 %v1126, 0.0
      %v1289 = vmax.f32 %v1129, 0.0
      %v1290 = vmax.f32 %v1134, 0.0
      %v1291 = vmax.f32 %v1137, 0.0
      %v1292 = vmax.f32 %v1142, 0.0
      %v1293 = vmax.f32 %v1145, 0.0
      %v1294 = vmax.f32 %v1150, 0.0
      %v1295 = vmax.f32 %v1153, 0.0
      %v1296 = vmax.f32 %v1158, 0.0
      %v1297 = vmax.f32 %v1161, 0.0
      %v1298 = vmax.f32 %v1166, 0.0
      %v1299 = vmax.f32 %v1169, 0.0
      %v1300 = vpack.c.bf16 %v1173, %v1172
      %v1301 = vpack.c.bf16 %v1175, %v1174
      %v1302 = vpack.c.bf16 %v1177, %v1176
      %v1303 = vpack.c.bf16 %v1179, %v1178
      %v1304 = vpack.c.bf16 %v1181, %v1180
      %v1305 = vpack.c.bf16 %v1183, %v1182
      %v1306 = vpack.c.bf16 %v1185, %v1184
      %v1307 = vpack.c.bf16 %v1187, %v1186
      %v1308 = vpack.c.bf16 %v1189, %v1188
      %v1309 = vpack.c.bf16 %v1191, %v1190
      %v1310 = vpack.c.bf16 %v1193, %v1192
      %v1311 = vpack.c.bf16 %v1195, %v1194
      %v1312 = vpack.c.bf16 %v1197, %v1196
      %v1313 = vpack.c.bf16 %v1199, %v1198
      %v1314 = vpack.c.bf16 %v1201, %v1200
      %v1315 = vpack.c.bf16 %v1203, %v1202
      %v1316 = vpack.c.bf16 %v1205, %v1204
      %v1317 = vpack.c.bf16 %v1207, %v1206
      %v1318 = vpack.c.bf16 %v1209, %v1208
      %v1319 = vpack.c.bf16 %v1211, %v1210
      %v1320 = vpack.c.bf16 %v1213, %v1212
      %v1321 = vpack.c.bf16 %v1215, %v1214
      %v1322 = vpack.c.bf16 %v1217, %v1216
      %v1323 = vpack.c.bf16 %v1219, %v1218
      %v1324 = vpack.c.bf16 %v1221, %v1220
      %v1325 = vpack.c.bf16 %v1223, %v1222
      %v1326 = vpack.c.bf16 %v1225, %v1224
      %v1327 = vpack.c.bf16 %v1227, %v1226
      %v1328 = vpack.c.bf16 %v1229, %v1228
      %v1329 = vpack.c.bf16 %v1231, %v1230
      %v1330 = vpack.c.bf16 %v1233, %v1232
      %v1331 = vpack.c.bf16 %v1235, %v1234
      %v1332 = vpack.c.bf16 %v1237, %v1236
      %v1333 = vpack.c.bf16 %v1239, %v1238
      %v1334 = vpack.c.bf16 %v1241, %v1240
      %v1335 = vpack.c.bf16 %v1243, %v1242
      %v1336 = vpack.c.bf16 %v1245, %v1244
      %v1337 = vpack.c.bf16 %v1247, %v1246
      %v1338 = vpack.c.bf16 %v1249, %v1248
      %v1339 = vpack.c.bf16 %v1251, %v1250
      %v1340 = vpack.c.bf16 %v1253, %v1252
      %v1341 = vpack.c.bf16 %v1255, %v1254
      %v1342 = vpack.c.bf16 %v1257, %v1256
      %v1343 = vpack.c.bf16 %v1259, %v1258
      %v1344 = vpack.c.bf16 %v1261, %v1260
      %v1345 = vpack.c.bf16 %v1263, %v1262
      %v1346 = vpack.c.bf16 %v1265, %v1264
      %v1347 = vpack.c.bf16 %v1267, %v1266
      %v1348 = vpack.c.bf16 %v1269, %v1268
      %v1349 = vpack.c.bf16 %v1271, %v1270
      %v1350 = vpack.c.bf16 %v1273, %v1272
      %v1351 = vpack.c.bf16 %v1275, %v1274
      %v1352 = vpack.c.bf16 %v1277, %v1276
      %v1353 = vpack.c.bf16 %v1279, %v1278
      %v1354 = vpack.c.bf16 %v1281, %v1280
      %v1355 = vpack.c.bf16 %v1283, %v1282
      %v1356 = vpack.c.bf16 %v1285, %v1284
      %v1357 = vpack.c.bf16 %v1287, %v1286
      %v1358 = vpack.c.bf16 %v1289, %v1288
      %v1359 = vpack.c.bf16 %v1291, %v1290
      %v1360 = vpack.c.bf16 %v1293, %v1292
      %v1361 = vpack.c.bf16 %v1295, %v1294
      %v1362 = vpack.c.bf16 %v1297, %v1296
      %v1363 = vpack.c.bf16 %v1299, %v1298
      %v1364 = vld [vmem:[%s3] sm:$0xff]
      %v1365 = vld [vmem:[%s3 + $0x8] sm:$0xff]
      %v1366 = vld [vmem:[%s3 + $0x10] sm:$0xff]
      %v1367 = vld [vmem:[%s3 + $0x18] sm:$0xff]
      %v1368 = vld [vmem:[%s3 + $0x20] sm:$0xff]
      %v1369 = vld [vmem:[%s3 + $0x28] sm:$0xff]
      %v1370 = vld [vmem:[%s3 + $0x30] sm:$0xff]
      %v1371 = vld [vmem:[%s3 + $0x38] sm:$0xff]
      %v1372 = vld [vmem:[%s3 + $0x40] sm:$0xff]
      %v1373 = vld [vmem:[%s3 + $0x48] sm:$0xff]
      %v1374 = vld [vmem:[%s3 + $0x50] sm:$0xff]
      %v1375 = vld [vmem:[%s3 + $0x58] sm:$0xff]
      %v1376 = vld [vmem:[%s3 + $0x60] sm:$0xff]
      %v1377 = vld [vmem:[%s3 + $0x68] sm:$0xff]
      %v1378 = vld [vmem:[%s3 + $0x70] sm:$0xff]
      %v1379 = vld [vmem:[%s3 + $0x78] sm:$0xff]
      %v1380 = vpack.c.bf16 %v1365, %v1364
      %v1381 = vpack.c.bf16 %v1367, %v1366
      %v1382 = vpack.c.bf16 %v1369, %v1368
      %v1383 = vpack.c.bf16 %v1371, %v1370
      %v1384 = vpack.c.bf16 %v1373, %v1372
      %v1385 = vpack.c.bf16 %v1375, %v1374
      %v1386 = vpack.c.bf16 %v1377, %v1376
      %v1387 = vpack.c.bf16 %v1379, %v1378
      %v1388 = vld [vmem:[%s4] sm:$0x1]
      %v1390 = vlaneseq
      %v1391 = vshrl.u32 %v1390, 7
      %v1392 = vsub.s32 0, %v1391
      %v1393 = vrot.slane %v1388, %v1392
      %1395 = vmatprep.subr.bf16.mxu0 0
      %1396 = vmatpush1.bf16.msra.mxu0 %v1380
      %1397 = vmatprep.subr.bf16.mxu0 0
      %1398 = vmatpush1.bf16.msra.mxu0 %v1381
      %1399 = vmatprep.subr.bf16.mxu0 0
      %1400 = vmatpush1.bf16.msra.mxu0 %v1382
      %1401 = vmatprep.subr.bf16.mxu0 0
      %1402 = vmatpush1.bf16.msra.mxu0 %v1383
      %1403 = vmatprep.subr.bf16.mxu0 0
      %1404 = vmatpush1.bf16.msra.mxu0 %v1384
      %1405 = vmatprep.subr.bf16.mxu0 0
      %1406 = vmatpush1.bf16.msra.mxu0 %v1385
      %1407 = vmatprep.subr.bf16.mxu0 0
      %1408 = vmatpush1.bf16.msra.mxu0 %v1386
      %1409 = vmatprep.subr.bf16.mxu0 0
      %1410 = vmatpush1.bf16.msra.mxu0 %v1387
      %1411 = vmatprep.subr.bf16.mxu0 0
      %1412 = vmatpush1.bf16.msra.mxu0 0
      %1413 = vmatprep.subr.bf16.mxu0 0
      %1414 = vmatpush1.bf16.msra.mxu0 0
      %1415 = vmatprep.subr.bf16.mxu0 0
      %1416 = vmatpush1.bf16.msra.mxu0 0
      %1417 = vmatprep.subr.bf16.mxu0 0
      %1418 = vmatpush1.bf16.msra.mxu0 0
      %1419 = vmatprep.subr.bf16.mxu0 0
      %1420 = vmatpush1.bf16.msra.mxu0 0
      %1421 = vmatprep.subr.bf16.mxu0 0
      %1422 = vmatpush1.bf16.msra.mxu0 0
      %1423 = vmatprep.subr.bf16.mxu0 0
      %1424 = vmatpush1.bf16.msra.mxu0 0
      %1425 = vmatprep.subr.bf16.mxu0 0
      %1426 = vmatpush1.bf16.msra.mxu0 0
      %1427 = vmatprep.mubr.bf16.mxu0 0
      %1428 = vmatmul.mubr.bf16.gmra.mrb[0].mxu0 %v1300
      %v1429 = vpop.f32.mrb[0].mxu0
      %v1430 = vadd.f32 %v1393, %v1429
      %v1431 = vpop.f32.mrb[0].mxu0
      %v1432 = vpop.f32.mrb[0].mxu0
      %v1433 = vadd.f32 %v1393, %v1432
      %v1434 = vpop.f32.mrb[0].mxu0
      %1435 = vmatprep.mubr.bf16.mxu0 0
      %1436 = vmatmul.mubr.bf16.gmra.mrb[0].mxu0 %v1301
      %v1437 = vpop.f32.mrb[0].mxu0
      %v1438 = vadd.f32 %v1393, %v1437
      %v1439 = vpop.f32.mrb[0].mxu0
      %v1440 = vpop.f32.mrb[0].mxu0
      %v1441 = vadd.f32 %v1393, %v1440
      %v1442 = vpop.f32.mrb[0].mxu0
      %1443 = vmatprep.mubr.bf16.mxu0 0
      %1444 = vmatmul.mubr.bf16.gmra.mrb[0].mxu0 %v1302
      %v1445 = vpop.f32.mrb[0].mxu0
      %v1446 = vadd.f32 %v1393, %v1445
      %v1447 = vpop.f32.mrb[0].mxu0
      %v1448 = vpop.f32.mrb[0].mxu0
      %v1449 = vadd.f32 %v1393, %v1448
      %v1450 = vpop.f32.mrb[0].mxu0
      %1451 = vmatprep.mubr.bf16.mxu0 0
      %1452 = vmatmul.mubr.bf16.gmra.mrb[0].mxu0 %v1303
      %v1453 = vpop.f32.mrb[0].mxu0
      %v1454 = vadd.f32 %v1393, %v1453
      %v1455 = vpop.f32.mrb[0].mxu0
      %v1456 = vpop.f32.mrb[0].mxu0
      %v1457 = vadd.f32 %v1393, %v1456
      %v1458 = vpop.f32.mrb[0].mxu0
      %1459 = vmatprep.mubr.bf16.mxu0 0
      %1460 = vmatmul.mubr.bf16.gmra.mrb[0].mxu0 %v1304
      %v1461 = vpop.f32.mrb[0].mxu0
      %v1462 = vadd.f32 %v1393, %v1461
      %v1463 = vpop.f32.mrb[0].mxu0
      %v1464 = vpop.f32.mrb[0].mxu0
      %v1465 = vadd.f32 %v1393, %v1464
      %v1466 = vpop.f32.mrb[0].mxu0
      %1467 = vmatprep.mubr.bf16.mxu0 0
      %1468 = vmatmul.mubr.bf16.gmra.mrb[0].mxu0 %v1305
      %v1469 = vpop.f32.mrb[0].mxu0
      %v1470 = vadd.f32 %v1393, %v1469
      %v1471 = vpop.f32.mrb[0].mxu0
      %v1472 = vpop.f32.mrb[0].mxu0
      %v1473 = vadd.f32 %v1393, %v1472
      %v1474 = vpop.f32.mrb[0].mxu0
      %1475 = vmatprep.mubr.bf16.mxu0 0
      %1476 = vmatmul.mubr.bf16.gmra.mrb[0].mxu0 %v1306
      %v1477 = vpop.f32.mrb[0].mxu0
      %v1478 = vadd.f32 %v1393, %v1477
      %v1479 = vpop.f32.mrb[0].mxu0
      %v1480 = vpop.f32.mrb[0].mxu0
      %v1481 = vadd.f32 %v1393, %v1480
      %v1482 = vpop.f32.mrb[0].mxu0
      %1483 = vmatprep.mubr.bf16.mxu0 0
      %1484 = vmatmul.mubr.bf16.gmra.mrb[0].mxu0 %v1307
      %v1485 = vpop.f32.mrb[0].mxu0
      %v1486 = vadd.f32 %v1393, %v1485
      %v1487 = vpop.f32.mrb[0].mxu0
      %v1488 = vpop.f32.mrb[0].mxu0
      %v1489 = vadd.f32 %v1393, %v1488
      %v1490 = vpop.f32.mrb[0].mxu0
      %1491 = vmatprep.mubr.bf16.mxu0 0
      %1492 = vmatmul.mubr.bf16.gmra.mrb[0].mxu0 %v1308
      %v1493 = vpop.f32.mrb[0].mxu0
      %v1494 = vadd.f32 %v1393, %v1493
      %v1495 = vpop.f32.mrb[0].mxu0
      %v1496 = vpop.f32.mrb[0].mxu0
      %v1497 = vadd.f32 %v1393, %v1496
      %v1498 = vpop.f32.mrb[0].mxu0
      %1499 = vmatprep.mubr.bf16.mxu0 0
      %1500 = vmatmul.mubr.bf16.gmra.mrb[0].mxu0 %v1309
      %v1501 = vpop.f32.mrb[0].mxu0
      %v1502 = vadd.f32 %v1393, %v1501
      %v1503 = vpop.f32.mrb[0].mxu0
      %v1504 = vpop.f32.mrb[0].mxu0
      %v1505 = vadd.f32 %v1393, %v1504
      %v1506 = vpop.f32.mrb[0].mxu0
      %1507 = vmatprep.mubr.bf16.mxu0 0
      %1508 = vmatmul.mubr.bf16.gmra.mrb[0].mxu0 %v1310
      %v1509 = vpop.f32.mrb[0].mxu0
      %v1510 = vadd.f32 %v1393, %v1509
      %v1511 = vpop.f32.mrb[0].mxu0
      %v1512 = vpop.f32.mrb[0].mxu0
      %v1513 = vadd.f32 %v1393, %v1512
      %v1514 = vpop.f32.mrb[0].mxu0
      %1515 = vmatprep.mubr.bf16.mxu0 0
      %1516 = vmatmul.mubr.bf16.gmra.mrb[0].mxu0 %v1311
      %v1517 = vpop.f32.mrb[0].mxu0
      %v1518 = vadd.f32 %v1393, %v1517
      %v1519 = vpop.f32.mrb[0].mxu0
      %v1520 = vpop.f32.mrb[0].mxu0
      %v1521 = vadd.f32 %v1393, %v1520
      %v1522 = vpop.f32.mrb[0].mxu0
      %1523 = vmatprep.mubr.bf16.mxu0 0
      %1524 = vmatmul.mubr.bf16.gmra.mrb[0].mxu0 %v1312
      %v1525 = vpop.f32.mrb[0].mxu0
      %v1526 = vadd.f32 %v1393, %v1525
      %v1527 = vpop.f32.mrb[0].mxu0
      %v1528 = vpop.f32.mrb[0].mxu0
      %v1529 = vadd.f32 %v1393, %v1528
      %v1530 = vpop.f32.mrb[0].mxu0
      %1531 = vmatprep.mubr.bf16.mxu0 0
      %1532 = vmatmul.mubr.bf16.gmra.mrb[0].mxu0 %v1313
      %v1533 = vpop.f32.mrb[0].mxu0
      %v1534 = vadd.f32 %v1393, %v1533
      %v1535 = vpop.f32.mrb[0].mxu0
      %v1536 = vpop.f32.mrb[0].mxu0
      %v1537 = vadd.f32 %v1393, %v1536
      %v1538 = vpop.f32.mrb[0].mxu0
      %1539 = vmatprep.mubr.bf16.mxu0 0
      %1540 = vmatmul.mubr.bf16.gmra.mrb[0].mxu0 %v1314
      %v1541 = vpop.f32.mrb[0].mxu0
      %v1542 = vadd.f32 %v1393, %v1541
      %v1543 = vpop.f32.mrb[0].mxu0
      %v1544 = vpop.f32.mrb[0].mxu0
      %v1545 = vadd.f32 %v1393, %v1544
      %v1546 = vpop.f32.mrb[0].mxu0
      %1547 = vmatprep.mubr.bf16.mxu0 0
      %1548 = vmatmul.mubr.bf16.gmra.mrb[0].mxu0 %v1315
      %v1549 = vpop.f32.mrb[0].mxu0
      %v1550 = vadd.f32 %v1393, %v1549
      %v1551 = vpop.f32.mrb[0].mxu0
      %v1552 = vpop.f32.mrb[0].mxu0
      %v1553 = vadd.f32 %v1393, %v1552
      %v1554 = vpop.f32.mrb[0].mxu0
      %1555 = vmatprep.mubr.bf16.mxu0 0
      %1556 = vmatmul.mubr.bf16.gmra.mrb[0].mxu0 %v1316
      %v1557 = vpop.f32.mrb[0].mxu0
      %v1558 = vadd.f32 %v1393, %v1557
      %v1559 = vpop.f32.mrb[0].mxu0
      %v1560 = vpop.f32.mrb[0].mxu0
      %v1561 = vadd.f32 %v1393, %v1560
      %v1562 = vpop.f32.mrb[0].mxu0
      %1563 = vmatprep.mubr.bf16.mxu0 0
      %1564 = vmatmul.mubr.bf16.gmra.mrb[0].mxu0 %v1317
      %v1565 = vpop.f32.mrb[0].mxu0
      %v1566 = vadd.f32 %v1393, %v1565
      %v1567 = vpop.f32.mrb[0].mxu0
      %v1568 = vpop.f32.mrb[0].mxu0
      %v1569 = vadd.f32 %v1393, %v1568
      %v1570 = vpop.f32.mrb[0].mxu0
      %1571 = vmatprep.mubr.bf16.mxu0 0
      %1572 = vmatmul.mubr.bf16.gmra.mrb[0].mxu0 %v1318
      %v1573 = vpop.f32.mrb[0].mxu0
      %v1574 = vadd.f32 %v1393, %v1573
      %v1575 = vpop.f32.mrb[0].mxu0
      %v1576 = vpop.f32.mrb[0].mxu0
      %v1577 = vadd.f32 %v1393, %v1576
      %v1578 = vpop.f32.mrb[0].mxu0
      %1579 = vmatprep.mubr.bf16.mxu0 0
      %1580 = vmatmul.mubr.bf16.gmra.mrb[0].mxu0 %v1319
      %v1581 = vpop.f32.mrb[0].mxu0
      %v1582 = vadd.f32 %v1393, %v1581
      %v1583 = vpop.f32.mrb[0].mxu0
      %v1584 = vpop.f32.mrb[0].mxu0
      %v1585 = vadd.f32 %v1393, %v1584
      %v1586 = vpop.f32.mrb[0].mxu0
      %1587 = vmatprep.mubr.bf16.mxu0 0
      %1588 = vmatmul.mubr.bf16.gmra.mrb[0].mxu0 %v1320
      %v1589 = vpop.f32.mrb[0].mxu0
      %v1590 = vadd.f32 %v1393, %v1589
      %v1591 = vpop.f32.mrb[0].mxu0
      %v1592 = vpop.f32.mrb[0].mxu0
      %v1593 = vadd.f32 %v1393, %v1592
      %v1594 = vpop.f32.mrb[0].mxu0
      %1595 = vmatprep.mubr.bf16.mxu0 0
      %1596 = vmatmul.mubr.bf16.gmra.mrb[0].mxu0 %v1321
      %v1597 = vpop.f32.mrb[0].mxu0
      %v1598 = vadd.f32 %v1393, %v1597
      %v1599 = vpop.f32.mrb[0].mxu0
      %v1600 = vpop.f32.mrb[0].mxu0
      %v1601 = vadd.f32 %v1393, %v1600
      %v1602 = vpop.f32.mrb[0].mxu0
      %1603 = vmatprep.mubr.bf16.mxu0 0
      %1604 = vmatmul.mubr.bf16.gmra.mrb[0].mxu0 %v1322
      %v1605 = vpop.f32.mrb[0].mxu0
      %v1606 = vadd.f32 %v1393, %v1605
      %v1607 = vpop.f32.mrb[0].mxu0
      %v1608 = vpop.f32.mrb[0].mxu0
      %v1609 = vadd.f32 %v1393, %v1608
      %v1610 = vpop.f32.mrb[0].mxu0
      %1611 = vmatprep.mubr.bf16.mxu0 0
      %1612 = vmatmul.mubr.bf16.gmra.mrb[0].mxu0 %v1323
      %v1613 = vpop.f32.mrb[0].mxu0
      %v1614 = vadd.f32 %v1393, %v1613
      %v1615 = vpop.f32.mrb[0].mxu0
      %v1616 = vpop.f32.mrb[0].mxu0
      %v1617 = vadd.f32 %v1393, %v1616
      %v1618 = vpop.f32.mrb[0].mxu0
      %1619 = vmatprep.mubr.bf16.mxu0 0
      %1620 = vmatmul.mubr.bf16.gmra.mrb[0].mxu0 %v1324
      %v1621 = vpop.f32.mrb[0].mxu0
      %v1622 = vadd.f32 %v1393, %v1621
      %v1623 = vpop.f32.mrb[0].mxu0
      %v1624 = vpop.f32.mrb[0].mxu0
      %v1625 = vadd.f32 %v1393, %v1624
      %v1626 = vpop.f32.mrb[0].mxu0
      %1627 = vmatprep.mubr.bf16.mxu0 0
      %1628 = vmatmul.mubr.bf16.gmra.mrb[0].mxu0 %v1325
      %v1629 = vpop.f32.mrb[0].mxu0
      %v1630 = vadd.f32 %v1393, %v1629
      %v1631 = vpop.f32.mrb[0].mxu0
      %v1632 = vpop.f32.mrb[0].mxu0
      %v1633 = vadd.f32 %v1393, %v1632
      %v1634 = vpop.f32.mrb[0].mxu0
      %1635 = vmatprep.mubr.bf16.mxu0 0
      %1636 = vmatmul.mubr.bf16.gmra.mrb[0].mxu0 %v1326
      %v1637 = vpop.f32.mrb[0].mxu0
      %v1638 = vadd.f32 %v1393, %v1637
      %v1639 = vpop.f32.mrb[0].mxu0
      %v1640 = vpop.f32.mrb[0].mxu0
      %v1641 = vadd.f32 %v1393, %v1640
      %v1642 = vpop.f32.mrb[0].mxu0
      %1643 = vmatprep.mubr.bf16.mxu0 0
      %1644 = vmatmul.mubr.bf16.gmra.mrb[0].mxu0 %v1327
      %v1645 = vpop.f32.mrb[0].mxu0
      %v1646 = vadd.f32 %v1393, %v1645
      %v1647 = vpop.f32.mrb[0].mxu0
      %v1648 = vpop.f32.mrb[0].mxu0
      %v1649 = vadd.f32 %v1393, %v1648
      %v1650 = vpop.f32.mrb[0].mxu0
      %1651 = vmatprep.mubr.bf16.mxu0 0
      %1652 = vmatmul.mubr.bf16.gmra.mrb[0].mxu0 %v1328
      %v1653 = vpop.f32.mrb[0].mxu0
      %v1654 = vadd.f32 %v1393, %v1653
      %v1655 = vpop.f32.mrb[0].mxu0
      %v1656 = vpop.f32.mrb[0].mxu0
      %v1657 = vadd.f32 %v1393, %v1656
      %v1658 = vpop.f32.mrb[0].mxu0
      %1659 = vmatprep.mubr.bf16.mxu0 0
      %1660 = vmatmul.mubr.bf16.gmra.mrb[0].mxu0 %v1329
      %v1661 = vpop.f32.mrb[0].mxu0
      %v1662 = vadd.f32 %v1393, %v1661
      %v1663 = vpop.f32.mrb[0].mxu0
      %v1664 = vpop.f32.mrb[0].mxu0
      %v1665 = vadd.f32 %v1393, %v1664
      %v1666 = vpop.f32.mrb[0].mxu0
      %1667 = vmatprep.mubr.bf16.mxu0 0
      %1668 = vmatmul.mubr.bf16.gmra.mrb[0].mxu0 %v1330
      %v1669 = vpop.f32.mrb[0].mxu0
      %v1670 = vadd.f32 %v1393, %v1669
      %v1671 = vpop.f32.mrb[0].mxu0
      %v1672 = vpop.f32.mrb[0].mxu0
      %v1673 = vadd.f32 %v1393, %v1672
      %v1674 = vpop.f32.mrb[0].mxu0
      %1675 = vmatprep.mubr.bf16.mxu0 0
      %1676 = vmatmul.mubr.bf16.gmra.mrb[0].mxu0 %v1331
      %v1677 = vpop.f32.mrb[0].mxu0
      %v1678 = vadd.f32 %v1393, %v1677
      %v1679 = vpop.f32.mrb[0].mxu0
      %v1680 = vpop.f32.mrb[0].mxu0
      %v1681 = vadd.f32 %v1393, %v1680
      %v1682 = vpop.f32.mrb[0].mxu0
      %1683 = vmatprep.mubr.bf16.mxu0 0
      %1684 = vmatmul.mubr.bf16.gmra.mrb[0].mxu0 %v1332
      %v1685 = vpop.f32.mrb[0].mxu0
      %v1686 = vadd.f32 %v1393, %v1685
      %v1687 = vpop.f32.mrb[0].mxu0
      %v1688 = vpop.f32.mrb[0].mxu0
      %v1689 = vadd.f32 %v1393, %v1688
      %v1690 = vpop.f32.mrb[0].mxu0
      %1691 = vmatprep.mubr.bf16.mxu0 0
      %1692 = vmatmul.mubr.bf16.gmra.mrb[0].mxu0 %v1333
      %v1693 = vpop.f32.mrb[0].mxu0
      %v1694 = vadd.f32 %v1393, %v1693
      %v1695 = vpop.f32.mrb[0].mxu0
      %v1696 = vpop.f32.mrb[0].mxu0
      %v1697 = vadd.f32 %v1393, %v1696
      %v1698 = vpop.f32.mrb[0].mxu0
      %1699 = vmatprep.mubr.bf16.mxu0 0
      %1700 = vmatmul.mubr.bf16.gmra.mrb[0].mxu0 %v1334
      %v1701 = vpop.f32.mrb[0].mxu0
      %v1702 = vadd.f32 %v1393, %v1701
      %v1703 = vpop.f32.mrb[0].mxu0
      %v1704 = vpop.f32.mrb[0].mxu0
      %v1705 = vadd.f32 %v1393, %v1704
      %v1706 = vpop.f32.mrb[0].mxu0
      %1707 = vmatprep.mubr.bf16.mxu0 0
      %1708 = vmatmul.mubr.bf16.gmra.mrb[0].mxu0 %v1335
      %v1709 = vpop.f32.mrb[0].mxu0
      %v1710 = vadd.f32 %v1393, %v1709
      %v1711 = vpop.f32.mrb[0].mxu0
      %v1712 = vpop.f32.mrb[0].mxu0
      %v1713 = vadd.f32 %v1393, %v1712
      %v1714 = vpop.f32.mrb[0].mxu0
      %1715 = vmatprep.mubr.bf16.mxu0 0
      %1716 = vmatmul.mubr.bf16.gmra.mrb[0].mxu0 %v1336
      %v1717 = vpop.f32.mrb[0].mxu0
      %v1718 = vadd.f32 %v1393, %v1717
      %v1719 = vpop.f32.mrb[0].mxu0
      %v1720 = vpop.f32.mrb[0].mxu0
      %v1721 = vadd.f32 %v1393, %v1720
      %v1722 = vpop.f32.mrb[0].mxu0
      %1723 = vmatprep.mubr.bf16.mxu0 0
      %1724 = vmatmul.mubr.bf16.gmra.mrb[0].mxu0 %v1337
      %v1725 = vpop.f32.mrb[0].mxu0
      %v1726 = vadd.f32 %v1393, %v1725
      %v1727 = vpop.f32.mrb[0].mxu0
      %v1728 = vpop.f32.mrb[0].mxu0
      %v1729 = vadd.f32 %v1393, %v1728
      %v1730 = vpop.f32.mrb[0].mxu0
      %1731 = vmatprep.mubr.bf16.mxu0 0
      %1732 = vmatmul.mubr.bf16.gmra.mrb[0].mxu0 %v1338
      %v1733 = vpop.f32.mrb[0].mxu0
      %v1734 = vadd.f32 %v1393, %v1733
      %v1735 = vpop.f32.mrb[0].mxu0
      %v1736 = vpop.f32.mrb[0].mxu0
      %v1737 = vadd.f32 %v1393, %v1736
      %v1738 = vpop.f32.mrb[0].mxu0
      %1739 = vmatprep.mubr.bf16.mxu0 0
      %1740 = vmatmul.mubr.bf16.gmra.mrb[0].mxu0 %v1339
      %v1741 = vpop.f32.mrb[0].mxu0
      %v1742 = vadd.f32 %v1393, %v1741
      %v1743 = vpop.f32.mrb[0].mxu0
      %v1744 = vpop.f32.mrb[0].mxu0
      %v1745 = vadd.f32 %v1393, %v1744
      %v1746 = vpop.f32.mrb[0].mxu0
      %1747 = vmatprep.mubr.bf16.mxu0 0
      %1748 = vmatmul.mubr.bf16.gmra.mrb[0].mxu0 %v1340
      %v1749 = vpop.f32.mrb[0].mxu0
      %v1750 = vadd.f32 %v1393, %v1749
      %v1751 = vpop.f32.mrb[0].mxu0
      %v1752 = vpop.f32.mrb[0].mxu0
      %v1753 = vadd.f32 %v1393, %v1752
      %v1754 = vpop.f32.mrb[0].mxu0
      %1755 = vmatprep.mubr.bf16.mxu0 0
      %1756 = vmatmul.mubr.bf16.gmra.mrb[0].mxu0 %v1341
      %v1757 = vpop.f32.mrb[0].mxu0
      %v1758 = vadd.f32 %v1393, %v1757
      %v1759 = vpop.f32.mrb[0].mxu0
      %v1760 = vpop.f32.mrb[0].mxu0
      %v1761 = vadd.f32 %v1393, %v1760
      %v1762 = vpop.f32.mrb[0].mxu0
      %1763 = vmatprep.mubr.bf16.mxu0 0
      %1764 = vmatmul.mubr.bf16.gmra.mrb[0].mxu0 %v1342
      %v1765 = vpop.f32.mrb[0].mxu0
      %v1766 = vadd.f32 %v1393, %v1765
      %v1767 = vpop.f32.mrb[0].mxu0
      %v1768 = vpop.f32.mrb[0].mxu0
      %v1769 = vadd.f32 %v1393, %v1768
      %v1770 = vpop.f32.mrb[0].mxu0
      %1771 = vmatprep.mubr.bf16.mxu0 0
      %1772 = vmatmul.mubr.bf16.gmra.mrb[0].mxu0 %v1343
      %v1773 = vpop.f32.mrb[0].mxu0
      %v1774 = vadd.f32 %v1393, %v1773
      %v1775 = vpop.f32.mrb[0].mxu0
      %v1776 = vpop.f32.mrb[0].mxu0
      %v1777 = vadd.f32 %v1393, %v1776
      %v1778 = vpop.f32.mrb[0].mxu0
      %1779 = vmatprep.mubr.bf16.mxu0 0
      %1780 = vmatmul.mubr.bf16.gmra.mrb[0].mxu0 %v1344
      %v1781 = vpop.f32.mrb[0].mxu0
      %v1782 = vadd.f32 %v1393, %v1781
      %v1783 = vpop.f32.mrb[0].mxu0
      %v1784 = vpop.f32.mrb[0].mxu0
      %v1785 = vadd.f32 %v1393, %v1784
      %v1786 = vpop.f32.mrb[0].mxu0
      %1787 = vmatprep.mubr.bf16.mxu0 0
      %1788 = vmatmul.mubr.bf16.gmra.mrb[0].mxu0 %v1345
      %v1789 = vpop.f32.mrb[0].mxu0
      %v1790 = vadd.f32 %v1393, %v1789
      %v1791 = vpop.f32.mrb[0].mxu0
      %v1792 = vpop.f32.mrb[0].mxu0
      %v1793 = vadd.f32 %v1393, %v1792
      %v1794 = vpop.f32.mrb[0].mxu0
      %1795 = vmatprep.mubr.bf16.mxu0 0
      %1796 = vmatmul.mubr.bf16.gmra.mrb[0].mxu0 %v1346
      %v1797 = vpop.f32.mrb[0].mxu0
      %v1798 = vadd.f32 %v1393, %v1797
      %v1799 = vpop.f32.mrb[0].mxu0
      %v1800 = vpop.f32.mrb[0].mxu0
      %v1801 = vadd.f32 %v1393, %v1800
      %v1802 = vpop.f32.mrb[0].mxu0
      %1803 = vmatprep.mubr.bf16.mxu0 0
      %1804 = vmatmul.mubr.bf16.gmra.mrb[0].mxu0 %v1347
      %v1805 = vpop.f32.mrb[0].mxu0
      %v1806 = vadd.f32 %v1393, %v1805
      %v1807 = vpop.f32.mrb[0].mxu0
      %v1808 = vpop.f32.mrb[0].mxu0
      %v1809 = vadd.f32 %v1393, %v1808
      %v1810 = vpop.f32.mrb[0].mxu0
      %1811 = vmatprep.mubr.bf16.mxu0 0
      %1812 = vmatmul.mubr.bf16.gmra.mrb[0].mxu0 %v1348
      %v1813 = vpop.f32.mrb[0].mxu0
      %v1814 = vadd.f32 %v1393, %v1813
      %v1815 = vpop.f32.mrb[0].mxu0
      %v1816 = vpop.f32.mrb[0].mxu0
      %v1817 = vadd.f32 %v1393, %v1816
      %v1818 = vpop.f32.mrb[0].mxu0
      %1819 = vmatprep.mubr.bf16.mxu0 0
      %1820 = vmatmul.mubr.bf16.gmra.mrb[0].mxu0 %v1349
      %v1821 = vpop.f32.mrb[0].mxu0
      %v1822 = vadd.f32 %v1393, %v1821
      %v1823 = vpop.f32.mrb[0].mxu0
      %v1824 = vpop.f32.mrb[0].mxu0
      %v1825 = vadd.f32 %v1393, %v1824
      %v1826 = vpop.f32.mrb[0].mxu0
      %1827 = vmatprep.mubr.bf16.mxu0 0
      %1828 = vmatmul.mubr.bf16.gmra.mrb[0].mxu0 %v1350
      %v1829 = vpop.f32.mrb[0].mxu0
      %v1830 = vadd.f32 %v1393, %v1829
      %v1831 = vpop.f32.mrb[0].mxu0
      %v1832 = vpop.f32.mrb[0].mxu0
      %v1833 = vadd.f32 %v1393, %v1832
      %v1834 = vpop.f32.mrb[0].mxu0
      %1835 = vmatprep.mubr.bf16.mxu0 0
      %1836 = vmatmul.mubr.bf16.gmra.mrb[0].mxu0 %v1351
      %v1837 = vpop.f32.mrb[0].mxu0
      %v1838 = vadd.f32 %v1393, %v1837
      %v1839 = vpop.f32.mrb[0].mxu0
      %v1840 = vpop.f32.mrb[0].mxu0
      %v1841 = vadd.f32 %v1393, %v1840
      %v1842 = vpop.f32.mrb[0].mxu0
      %1843 = vmatprep.mubr.bf16.mxu0 0
      %1844 = vmatmul.mubr.bf16.gmra.mrb[0].mxu0 %v1352
      %v1845 = vpop.f32.mrb[0].mxu0
      %v1846 = vadd.f32 %v1393, %v1845
      %v1847 = vpop.f32.mrb[0].mxu0
      %v1848 = vpop.f32.mrb[0].mxu0
      %v1849 = vadd.f32 %v1393, %v1848
      %v1850 = vpop.f32.mrb[0].mxu0
      %1851 = vmatprep.mubr.bf16.mxu0 0
      %1852 = vmatmul.mubr.bf16.gmra.mrb[0].mxu0 %v1353
      %v1853 = vpop.f32.mrb[0].mxu0
      %v1854 = vadd.f32 %v1393, %v1853
      %v1855 = vpop.f32.mrb[0].mxu0
      %v1856 = vpop.f32.mrb[0].mxu0
      %v1857 = vadd.f32 %v1393, %v1856
      %v1858 = vpop.f32.mrb[0].mxu0
      %1859 = vmatprep.mubr.bf16.mxu0 0
      %1860 = vmatmul.mubr.bf16.gmra.mrb[0].mxu0 %v1354
      %v1861 = vpop.f32.mrb[0].mxu0
      %v1862 = vadd.f32 %v1393, %v1861
      %v1863 = vpop.f32.mrb[0].mxu0
      %v1864 = vpop.f32.mrb[0].mxu0
      %v1865 = vadd.f32 %v1393, %v1864
      %v1866 = vpop.f32.mrb[0].mxu0
      %1867 = vmatprep.mubr.bf16.mxu0 0
      %1868 = vmatmul.mubr.bf16.gmra.mrb[0].mxu0 %v1355
      %v1869 = vpop.f32.mrb[0].mxu0
      %v1870 = vadd.f32 %v1393, %v1869
      %v1871 = vpop.f32.mrb[0].mxu0
      %v1872 = vpop.f32.mrb[0].mxu0
      %v1873 = vadd.f32 %v1393, %v1872
      %v1874 = vpop.f32.mrb[0].mxu0
      %1875 = vmatprep.mubr.bf16.mxu0 0
      %1876 = vmatmul.mubr.bf16.gmra.mrb[0].mxu0 %v1356
      %v1877 = vpop.f32.mrb[0].mxu0
      %v1878 = vadd.f32 %v1393, %v1877
      %v1879 = vpop.f32.mrb[0].mxu0
      %v1880 = vpop.f32.mrb[0].mxu0
      %v1881 = vadd.f32 %v1393, %v1880
      %v1882 = vpop.f32.mrb[0].mxu0
      %1883 = vmatprep.mubr.bf16.mxu0 0
      %1884 = vmatmul.mubr.bf16.gmra.mrb[0].mxu0 %v1357
      %v1885 = vpop.f32.mrb[0].mxu0
      %v1886 = vadd.f32 %v1393, %v1885
      %v1887 = vpop.f32.mrb[0].mxu0
      %v1888 = vpop.f32.mrb[0].mxu0
      %v1889 = vadd.f32 %v1393, %v1888
      %v1890 = vpop.f32.mrb[0].mxu0
      %1891 = vmatprep.mubr.bf16.mxu0 0
      %1892 = vmatmul.mubr.bf16.gmra.mrb[0].mxu0 %v1358
      %v1893 = vpop.f32.mrb[0].mxu0
      %v1894 = vadd.f32 %v1393, %v1893
      %v1895 = vpop.f32.mrb[0].mxu0
      %v1896 = vpop.f32.mrb[0].mxu0
      %v1897 = vadd.f32 %v1393, %v1896
      %v1898 = vpop.f32.mrb[0].mxu0
      %1899 = vmatprep.mubr.bf16.mxu0 0
      %1900 = vmatmul.mubr.bf16.gmra.mrb[0].mxu0 %v1359
      %v1901 = vpop.f32.mrb[0].mxu0
      %v1902 = vadd.f32 %v1393, %v1901
      %v1903 = vpop.f32.mrb[0].mxu0
      %v1904 = vpop.f32.mrb[0].mxu0
      %v1905 = vadd.f32 %v1393, %v1904
      %v1906 = vpop.f32.mrb[0].mxu0
      %1907 = vmatprep.mubr.bf16.mxu0 0
      %1908 = vmatmul.mubr.bf16.gmra.mrb[0].mxu0 %v1360
      %v1909 = vpop.f32.mrb[0].mxu0
      %v1910 = vadd.f32 %v1393, %v1909
      %v1911 = vpop.f32.mrb[0].mxu0
      %v1912 = vpop.f32.mrb[0].mxu0
      %v1913 = vadd.f32 %v1393, %v1912
      %v1914 = vpop.f32.mrb[0].mxu0
      %1915 = vmatprep.mubr.bf16.mxu0 0
      %1916 = vmatmul.mubr.bf16.gmra.mrb[0].mxu0 %v1361
      %v1917 = vpop.f32.mrb[0].mxu0
      %v1918 = vadd.f32 %v1393, %v1917
      %v1919 = vpop.f32.mrb[0].mxu0
      %v1920 = vpop.f32.mrb[0].mxu0
      %v1921 = vadd.f32 %v1393, %v1920
      %v1922 = vpop.f32.mrb[0].mxu0
      %1923 = vmatprep.mubr.bf16.mxu0 0
      %1924 = vmatmul.mubr.bf16.gmra.mrb[0].mxu0 %v1362
      %v1925 = vpop.f32.mrb[0].mxu0
      %v1926 = vadd.f32 %v1393, %v1925
      %v1927 = vpop.f32.mrb[0].mxu0
      %v1928 = vpop.f32.mrb[0].mxu0
      %v1929 = vadd.f32 %v1393, %v1928
      %v1930 = vpop.f32.mrb[0].mxu0
      %1931 = vmatprep.mubr.bf16.mxu0 0
      %1932 = vmatmul.mubr.bf16.gmra.mrb[0].mxu0 %v1363
      %v1933 = vpop.f32.mrb[0].mxu0
      %v1934 = vadd.f32 %v1393, %v1933
      %v1935 = vpop.f32.mrb[0].mxu0
      %v1936 = vpop.f32.mrb[0].mxu0
      %v1937 = vadd.f32 %v1393, %v1936
      %v1938 = vpop.f32.mrb[0].mxu0
      %1939 = vdwg.mxu0
      %v1940 = vmax.f32 %v1430, 0.0
      %v1941 = vmax.f32 %v1433, 0.0
      %v1942 = vmax.f32 %v1438, 0.0
      %v1943 = vmax.f32 %v1441, 0.0
      %v1944 = vmax.f32 %v1446, 0.0
      %v1945 = vmax.f32 %v1449, 0.0
      %v1946 = vmax.f32 %v1454, 0.0
      %v1947 = vmax.f32 %v1457, 0.0
      %v1948 = vmax.f32 %v1462, 0.0
      %v1949 = vmax.f32 %v1465, 0.0
      %v1950 = vmax.f32 %v1470, 0.0
      %v1951 = vmax.f32 %v1473, 0.0
      %v1952 = vmax.f32 %v1478, 0.0
      %v1953 = vmax.f32 %v1481, 0.0
      %v1954 = vmax.f32 %v1486, 0.0
      %v1955 = vmax.f32 %v1489, 0.0
      %v1956 = vmax.f32 %v1494, 0.0
      %v1957 = vmax.f32 %v1497, 0.0
      %v1958 = vmax.f32 %v1502, 0.0
      %v1959 = vmax.f32 %v1505, 0.0
      %v1960 = vmax.f32 %v1510, 0.0
      %v1961 = vmax.f32 %v1513, 0.0
      %v1962 = vmax.f32 %v1518, 0.0
      %v1963 = vmax.f32 %v1521, 0.0
      %v1964 = vmax.f32 %v1526, 0.0
      %v1965 = vmax.f32 %v1529, 0.0
      %v1966 = vmax.f32 %v1534, 0.0
      %v1967 = vmax.f32 %v1537, 0.0
      %v1968 = vmax.f32 %v1542, 0.0
      %v1969 = vmax.f32 %v1545, 0.0
      %v1970 = vmax.f32 %v1550, 0.0
      %v1971 = vmax.f32 %v1553, 0.0
      %v1972 = vmax.f32 %v1558, 0.0
      %v1973 = vmax.f32 %v1561, 0.0
      %v1974 = vmax.f32 %v1566, 0.0
      %v1975 = vmax.f32 %v1569, 0.0
      %v1976 = vmax.f32 %v1574, 0.0
      %v1977 = vmax.f32 %v1577, 0.0
      %v1978 = vmax.f32 %v1582, 0.0
      %v1979 = vmax.f32 %v1585, 0.0
      %v1980 = vmax.f32 %v1590, 0.0
      %v1981 = vmax.f32 %v1593, 0.0
      %v1982 = vmax.f32 %v1598, 0.0
      %v1983 = vmax.f32 %v1601, 0.0
      %v1984 = vmax.f32 %v1606, 0.0
      %v1985 = vmax.f32 %v1609, 0.0
      %v1986 = vmax.f32 %v1614, 0.0
      %v1987 = vmax.f32 %v1617, 0.0
      %v1988 = vmax.f32 %v1622, 0.0
      %v1989 = vmax.f32 %v1625, 0.0
      %v1990 = vmax.f32 %v1630, 0.0
      %v1991 = vmax.f32 %v1633, 0.0
      %v1992 = vmax.f32 %v1638, 0.0
      %v1993 = vmax.f32 %v1641, 0.0
      %v1994 = vmax.f32 %v1646, 0.0
      %v1995 = vmax.f32 %v1649, 0.0
      %v1996 = vmax.f32 %v1654, 0.0
      %v1997 = vmax.f32 %v1657, 0.0
      %v1998 = vmax.f32 %v1662, 0.0
      %v1999 = vmax.f32 %v1665, 0.0
      %v2000 = vmax.f32 %v1670, 0.0
      %v2001 = vmax.f32 %v1673, 0.0
      %v2002 = vmax.f32 %v1678, 0.0
      %v2003 = vmax.f32 %v1681, 0.0
      %v2004 = vmax.f32 %v1686, 0.0
      %v2005 = vmax.f32 %v1689, 0.0
      %v2006 = vmax.f32 %v1694, 0.0
      %v2007 = vmax.f32 %v1697, 0.0
      %v2008 = vmax.f32 %v1702, 0.0
      %v2009 = vmax.f32 %v1705, 0.0
      %v2010 = vmax.f32 %v1710, 0.0
      %v2011 = vmax.f32 %v1713, 0.0
      %v2012 = vmax.f32 %v1718, 0.0
      %v2013 = vmax.f32 %v1721, 0.0
      %v2014 = vmax.f32 %v1726, 0.0
      %v2015 = vmax.f32 %v1729, 0.0
      %v2016 = vmax.f32 %v1734, 0.0
      %v2017 = vmax.f32 %v1737, 0.0
      %v2018 = vmax.f32 %v1742, 0.0
      %v2019 = vmax.f32 %v1745, 0.0
      %v2020 = vmax.f32 %v1750, 0.0
      %v2021 = vmax.f32 %v1753, 0.0
      %v2022 = vmax.f32 %v1758, 0.0
      %v2023 = vmax.f32 %v1761, 0.0
      %v2024 = vmax.f32 %v1766, 0.0
      %v2025 = vmax.f32 %v1769, 0.0
      %v2026 = vmax.f32 %v1774, 0.0
      %v2027 = vmax.f32 %v1777, 0.0
      %v2028 = vmax.f32 %v1782, 0.0
      %v2029 = vmax.f32 %v1785, 0.0
      %v2030 = vmax.f32 %v1790, 0.0
      %v2031 = vmax.f32 %v1793, 0.0
      %v2032 = vmax.f32 %v1798, 0.0
      %v2033 = vmax.f32 %v1801, 0.0
      %v2034 = vmax.f32 %v1806, 0.0
      %v2035 = vmax.f32 %v1809, 0.0
      %v2036 = vmax.f32 %v1814, 0.0
      %v2037 = vmax.f32 %v1817, 0.0
      %v2038 = vmax.f32 %v1822, 0.0
      %v2039 = vmax.f32 %v1825, 0.0
      %v2040 = vmax.f32 %v1830, 0.0
      %v2041 = vmax.f32 %v1833, 0.0
      %v2042 = vmax.f32 %v1838, 0.0
      %v2043 = vmax.f32 %v1841, 0.0
      %v2044 = vmax.f32 %v1846, 0.0
      %v2045 = vmax.f32 %v1849, 0.0
      %v2046 = vmax.f32 %v1854, 0.0
      %v2047 = vmax.f32 %v1857, 0.0
      %v2048 = vmax.f32 %v1862, 0.0
      %v2049 = vmax.f32 %v1865, 0.0
      %v2050 = vmax.f32 %v1870, 0.0
      %v2051 = vmax.f32 %v1873, 0.0
      %v2052 = vmax.f32 %v1878, 0.0
      %v2053 = vmax.f32 %v1881, 0.0
      %v2054 = vmax.f32 %v1886, 0.0
      %v2055 = vmax.f32 %v1889, 0.0
      %v2056 = vmax.f32 %v1894, 0.0
      %v2057 = vmax.f32 %v1897, 0.0
      %v2058 = vmax.f32 %v1902, 0.0
      %v2059 = vmax.f32 %v1905, 0.0
      %v2060 = vmax.f32 %v1910, 0.0
      %v2061 = vmax.f32 %v1913, 0.0
      %v2062 = vmax.f32 %v1918, 0.0
      %v2063 = vmax.f32 %v1921, 0.0
      %v2064 = vmax.f32 %v1926, 0.0
      %v2065 = vmax.f32 %v1929, 0.0
      %v2066 = vmax.f32 %v1934, 0.0
      %v2067 = vmax.f32 %v1937, 0.0
      %v2068 = vmax.f32 %v1940, %v1941
      %v2069 = vmax.f32 %v2068, %v1942
      %v2070 = vmax.f32 %v2069, %v1943
      %v2071 = vmax.f32 %v2070, %v1944
      %v2072 = vmax.f32 %v2071, %v1945
      %v2073 = vmax.f32 %v2072, %v1946
      %v2074 = vmax.f32 %v2073, %v1947
      %v2075 = vmax.f32 %v2074, %v1948
      %v2076 = vmax.f32 %v2075, %v1949
      %v2077 = vmax.f32 %v2076, %v1950
      %v2078 = vmax.f32 %v2077, %v1951
      %v2079 = vmax.f32 %v2078, %v1952
      %v2080 = vmax.f32 %v2079, %v1953
      %v2081 = vmax.f32 %v2080, %v1954
      %v2082 = vmax.f32 %v2081, %v1955
      %v2083 = vrot.slane %v2082, 4
      %v2084 = vmax.f32 %v2082, %v2083
      %v2085 = vrot.slane %v2084, 2
      %v2086 = vmax.f32 %v2084, %v2085
      %v2087 = vrot.slane %v2086, 1
      %v2088 = vmax.f32 %v2086, %v2087
      %v2089 = vmax.f32 %v1956, %v1957
      %v2090 = vmax.f32 %v2089, %v1958
      %v2091 = vmax.f32 %v2090, %v1959
      %v2092 = vmax.f32 %v2091, %v1960
      %v2093 = vmax.f32 %v2092, %v1961
      %v2094 = vmax.f32 %v2093, %v1962
      %v2095 = vmax.f32 %v2094, %v1963
      %v2096 = vmax.f32 %v2095, %v1964
      %v2097 = vmax.f32 %v2096, %v1965
      %v2098 = vmax.f32 %v2097, %v1966
      %v2099 = vmax.f32 %v2098, %v1967
      %v2100 = vmax.f32 %v2099, %v1968
      %v2101 = vmax.f32 %v2100, %v1969
      %v2102 = vmax.f32 %v2101, %v1970
      %v2103 = vmax.f32 %v2102, %v1971
      %v2104 = vrot.slane %v2103, 4
      %v2105 = vmax.f32 %v2103, %v2104
      %v2106 = vrot.slane %v2105, 2
      %v2107 = vmax.f32 %v2105, %v2106
      %v2108 = vrot.slane %v2107, 1
      %v2109 = vmax.f32 %v2107, %v2108
      %v2110 = vmax.f32 %v1972, %v1973
      %v2111 = vmax.f32 %v2110, %v1974
      %v2112 = vmax.f32 %v2111, %v1975
      %v2113 = vmax.f32 %v2112, %v1976
      %v2114 = vmax.f32 %v2113, %v1977
      %v2115 = vmax.f32 %v2114, %v1978
      %v2116 = vmax.f32 %v2115, %v1979
      %v2117 = vmax.f32 %v2116, %v1980
      %v2118 = vmax.f32 %v2117, %v1981
      %v2119 = vmax.f32 %v2118, %v1982
      %v2120 = vmax.f32 %v2119, %v1983
      %v2121 = vmax.f32 %v2120, %v1984
      %v2122 = vmax.f32 %v2121, %v1985
      %v2123 = vmax.f32 %v2122, %v1986
      %v2124 = vmax.f32 %v2123, %v1987
      %v2125 = vrot.slane %v2124, 4
      %v2126 = vmax.f32 %v2124, %v2125
      %v2127 = vrot.slane %v2126, 2
      %v2128 = vmax.f32 %v2126, %v2127
      %v2129 = vrot.slane %v2128, 1
      %v2130 = vmax.f32 %v2128, %v2129
      %v2131 = vmax.f32 %v1988, %v1989
      %v2132 = vmax.f32 %v2131, %v1990
      %v2133 = vmax.f32 %v2132, %v1991
      %v2134 = vmax.f32 %v2133, %v1992
      %v2135 = vmax.f32 %v2134, %v1993
      %v2136 = vmax.f32 %v2135, %v1994
      %v2137 = vmax.f32 %v2136, %v1995
      %v2138 = vmax.f32 %v2137, %v1996
      %v2139 = vmax.f32 %v2138, %v1997
      %v2140 = vmax.f32 %v2139, %v1998
      %v2141 = vmax.f32 %v2140, %v1999
      %v2142 = vmax.f32 %v2141, %v2000
      %v2143 = vmax.f32 %v2142, %v2001
      %v2144 = vmax.f32 %v2143, %v2002
      %v2145 = vmax.f32 %v2144, %v2003
      %v2146 = vrot.slane %v2145, 4
      %v2147 = vmax.f32 %v2145, %v2146
      %v2148 = vrot.slane %v2147, 2
      %v2149 = vmax.f32 %v2147, %v2148
      %v2150 = vrot.slane %v2149, 1
      %v2151 = vmax.f32 %v2149, %v2150
      %v2152 = vmax.f32 %v2004, %v2005
      %v2153 = vmax.f32 %v2152, %v2006
      %v2154 = vmax.f32 %v2153, %v2007
      %v2155 = vmax.f32 %v2154, %v2008
      %v2156 = vmax.f32 %v2155, %v2009
      %v2157 = vmax.f32 %v2156, %v2010
      %v2158 = vmax.f32 %v2157, %v2011
      %v2159 = vmax.f32 %v2158, %v2012
      %v2160 = vmax.f32 %v2159, %v2013
      %v2161 = vmax.f32 %v2160, %v2014
      %v2162 = vmax.f32 %v2161, %v2015
      %v2163 = vmax.f32 %v2162, %v2016
      %v2164 = vmax.f32 %v2163, %v2017
      %v2165 = vmax.f32 %v2164, %v2018
      %v2166 = vmax.f32 %v2165, %v2019
      %v2167 = vrot.slane %v2166, 4
      %v2168 = vmax.f32 %v2166, %v2167
      %v2169 = vrot.slane %v2168, 2
      %v2170 = vmax.f32 %v2168, %v2169
      %v2171 = vrot.slane %v2170, 1
      %v2172 = vmax.f32 %v2170, %v2171
      %v2173 = vmax.f32 %v2020, %v2021
      %v2174 = vmax.f32 %v2173, %v2022
      %v2175 = vmax.f32 %v2174, %v2023
      %v2176 = vmax.f32 %v2175, %v2024
      %v2177 = vmax.f32 %v2176, %v2025
      %v2178 = vmax.f32 %v2177, %v2026
      %v2179 = vmax.f32 %v2178, %v2027
      %v2180 = vmax.f32 %v2179, %v2028
      %v2181 = vmax.f32 %v2180, %v2029
      %v2182 = vmax.f32 %v2181, %v2030
      %v2183 = vmax.f32 %v2182, %v2031
      %v2184 = vmax.f32 %v2183, %v2032
      %v2185 = vmax.f32 %v2184, %v2033
      %v2186 = vmax.f32 %v2185, %v2034
      %v2187 = vmax.f32 %v2186, %v2035
      %v2188 = vrot.slane %v2187, 4
      %v2189 = vmax.f32 %v2187, %v2188
      %v2190 = vrot.slane %v2189, 2
      %v2191 = vmax.f32 %v2189, %v2190
      %v2192 = vrot.slane %v2191, 1
      %v2193 = vmax.f32 %v2191, %v2192
      %v2194 = vmax.f32 %v2036, %v2037
      %v2195 = vmax.f32 %v2194, %v2038
      %v2196 = vmax.f32 %v2195, %v2039
      %v2197 = vmax.f32 %v2196, %v2040
      %v2198 = vmax.f32 %v2197, %v2041
      %v2199 = vmax.f32 %v2198, %v2042
      %v2200 = vmax.f32 %v2199, %v2043
      %v2201 = vmax.f32 %v2200, %v2044
      %v2202 = vmax.f32 %v2201, %v2045
      %v2203 = vmax.f32 %v2202, %v2046
      %v2204 = vmax.f32 %v2203, %v2047
      %v2205 = vmax.f32 %v2204, %v2048
      %v2206 = vmax.f32 %v2205, %v2049
      %v2207 = vmax.f32 %v2206, %v2050
      %v2208 = vmax.f32 %v2207, %v2051
      %v2209 = vrot.slane %v2208, 4
      %v2210 = vmax.f32 %v2208, %v2209
      %v2211 = vrot.slane %v2210, 2
      %v2212 = vmax.f32 %v2210, %v2211
      %v2213 = vrot.slane %v2212, 1
      %v2214 = vmax.f32 %v2212, %v2213
      %v2215 = vmax.f32 %v2052, %v2053
      %v2216 = vmax.f32 %v2215, %v2054
      %v2217 = vmax.f32 %v2216, %v2055
      %v2218 = vmax.f32 %v2217, %v2056
      %v2219 = vmax.f32 %v2218, %v2057
      %v2220 = vmax.f32 %v2219, %v2058
      %v2221 = vmax.f32 %v2220, %v2059
      %v2222 = vmax.f32 %v2221, %v2060
      %v2223 = vmax.f32 %v2222, %v2061
      %v2224 = vmax.f32 %v2223, %v2062
      %v2225 = vmax.f32 %v2224, %v2063
      %v2226 = vmax.f32 %v2225, %v2064
      %v2227 = vmax.f32 %v2226, %v2065
      %v2228 = vmax.f32 %v2227, %v2066
      %v2229 = vmax.f32 %v2228, %v2067
      %v2230 = vrot.slane %v2229, 4
      %v2231 = vmax.f32 %v2229, %v2230
      %v2232 = vrot.slane %v2231, 2
      %v2233 = vmax.f32 %v2231, %v2232
      %v2234 = vrot.slane %v2233, 1
      %v2235 = vmax.f32 %v2233, %v2234
      %vm2244 = vcmask 1041409
      %v2245 = vsel %vm2244, %v2109, %v2088
      %vm2246 = vcmask 1042434
      %v2247 = vsel %vm2246, %v2130, %v2245
      %vm2248 = vcmask 1043459
      %v2249 = vsel %vm2248, %v2151, %v2247
      %vm2250 = vcmask 1044484
      %v2251 = vsel %vm2250, %v2172, %v2249
      %vm2252 = vcmask 1045509
      %v2253 = vsel %vm2252, %v2193, %v2251
      %vm2254 = vcmask 1046534
      %v2255 = vsel %vm2254, %v2214, %v2253
      %vm2256 = vcmask 1047559
      %v2257 = vsel %vm2256, %v2235, %v2255
      %2259 = vst [vmem:[%s227] sm:$0xff] %v2257
      %p2260 = scmp.lt.s32.totalorder %s16, 4
      %s2261 = scalar_select %p2260, %s16, 4
      %s2262 = smul.addr %s2261, 8
      %s2263 = scalar_lea.vmem %s5, %s2262
      // Predicated region
      $region41: #{sim_attention_knn_forward.2} parent=39 // pred_check
        %p2264 = pneg %p144
      $region42: #{sim_attention_knn_forward.2} parent=39 // pred_check_branch
        %2266 = sbr.rel (%p2264) target = $region44
      $region43: #{sim_attention_knn_forward.2} parent=39 // pred_region
        _
      $region44: #{sim_attention_knn_forward.2} parent=39 // pred_fallthru
        _
    $region40: #{sim_attention_knn_forward.2} parent=5 // pred_fallthru
      _
    %p2267 = scmp.le.s32.totalorder 2, %s11
    // Predicated region
    $region45: #{sim_attention_knn_forward.2} parent=5 // pred_check
      %p2268 = pneg %p2267
    $region46: #{sim_attention_knn_forward.2} parent=5 // pred_check_branch
      %2270 = sbr.rel (%p2268) target = $region48
    $region47: #{sim_attention_knn_forward.2} parent=5 // pred_region
      %s2271 = ssub.s32 %s11, 2
      // Predicated region
      $region49: #{sim_attention_knn_forward.2} parent=47 // pred_check
        %p2272 = pneg %p150
      $region50: #{sim_attention_knn_forward.2} parent=47 // pred_check_branch
        %2274 = sbr.rel (%p2272) target = $region52
      $region51: #{sim_attention_knn_forward.2} parent=47 // pred_region
        %p2275 = scmp.lt.s32.totalorder %s17, 4
        %s2276 = scalar_select %p2275, %s17, 4
        %s2277 = smul.addr %s2276, 8
        %s2278 = scalar_lea.vmem %s5, %s2277
      $region52: #{sim_attention_knn_forward.2} parent=47 // pred_fallthru
        _
    $region48: #{sim_attention_knn_forward.2} parent=5 // pred_fallthru
      _
  $region6: #{sim_attention_knn_forward.2} parent=0 // loop_footer
    %s15 = sadd.s32 1, %s11
  $region7: #{sim_attention_knn_forward.2} parent=0 // loop_footer_branch
    %10 = sbr.rel target = $region3
  $region8: #{sim_attention_knn_forward.2} parent=0 // loop_exit
    _

</llo_original>
